<compile_context>
chip_gen: v5e
topology: v5e:2x2
jax: 0.10.0
libtpu: 0.0.40
codegen_flags: <defaults>
</compile_context>

<pallas_src>
import functools

import jax
import jax.numpy as jnp
from jax.experimental import pallas as pl
from jax.experimental.pallas import tpu as pltpu

_LOG2_E = 1.4426950408889634


def _pick_tile(n, target, align):
    """Largest divisor of n that is <= target and a multiple of `align`
    (falls back to the full dim n, which is always a legal block size)."""
    if n <= target:
        return n
    t = (target // align) * align
    while t >= align:
        if n % t == 0:
            return t
        t -= align
    return n


# ----------------------------------------------------------------------------
# Tiled matmul kernels: out = x @ W (+ bias), bf16 operands, f32 accumulation.
# ----------------------------------------------------------------------------
def _matmul_kernel(x_ref, w_ref, o_ref, acc_ref):
    @pl.when(pl.program_id(2) == 0)
    def _():
        acc_ref[...] = jnp.zeros(acc_ref.shape, acc_ref.dtype)

    acc_ref[...] += jnp.dot(
        x_ref[...], w_ref[...], preferred_element_type=jnp.float32
    )

    @pl.when(pl.program_id(2) == pl.num_programs(2) - 1)
    def _():
        o_ref[...] = acc_ref[...].astype(o_ref.dtype)


def _matmul_bias_kernel(x_ref, w_ref, b_ref, o_ref, acc_ref):
    @pl.when(pl.program_id(2) == 0)
    def _():
        acc_ref[...] = jnp.zeros(acc_ref.shape, acc_ref.dtype)

    acc_ref[...] += jnp.dot(
        x_ref[...], w_ref[...], preferred_element_type=jnp.float32
    )

    @pl.when(pl.program_id(2) == pl.num_programs(2) - 1)
    def _():
        o_ref[...] = (acc_ref[...] + b_ref[...]).astype(o_ref.dtype)


def linear(x2d, w, b=None, *, out_dtype=jnp.bfloat16, tm=512, tn=512, tk=1024):
    """Tiled, pipelined x2d @ w (+ b).  No padding: tiles are exact divisors
    or the full dimension.  Default tile budget is a few MiB, well under the
    32 MiB default scoped VMEM (and v7x's 64 MiB physical)."""
    M, K = x2d.shape
    K2, N = w.shape
    assert K == K2

    x2d = x2d.astype(jnp.bfloat16)
    w = w.astype(jnp.bfloat16)

    tm = _pick_tile(M, tm, 8)
    tn = _pick_tile(N, tn, 128)
    tk = _pick_tile(K, tk, 128)
    grid = (M // tm, N // tn, K // tk)

    in_specs = [
        pl.BlockSpec((tm, tk), lambda i, j, k: (i, k)),
        pl.BlockSpec((tk, tn), lambda i, j, k: (k, j)),
    ]
    if b is None:
        kernel = _matmul_kernel
        args = (x2d, w)
    else:
        kernel = _matmul_bias_kernel
        in_specs.append(pl.BlockSpec((1, tn), lambda i, j, k: (0, j)))
        args = (x2d, w, b.reshape(1, N).astype(jnp.float32))

    return pl.pallas_call(
        kernel,
        out_shape=jax.ShapeDtypeStruct((M, N), out_dtype),
        grid=grid,
        in_specs=in_specs,
        out_specs=pl.BlockSpec((tm, tn), lambda i, j, k: (i, j)),
        scratch_shapes=[pltpu.VMEM((tm, tn), jnp.float32)],
        compiler_params=pltpu.CompilerParams(
            dimension_semantics=("parallel", "parallel", "arbitrary")
        ),
    )(*args)


# ----------------------------------------------------------------------------
# Flash attention core.  Blocks stay in 'b n (h d)' layout (lane-dense H*d
# stores); heads are split inside VMEM.  Softmax runs in the exp2 domain
# (scale * log2(e) already folded into w_q), normalization happens after the
# PV matmul.
# ----------------------------------------------------------------------------
def _make_flash_kernel(heads, dim_head):
    def kernel(q_ref, k_ref, v_ref, o_ref, m_sc, l_sc, acc_sc):
        ki = pl.program_id(2)

        @pl.when(ki == 0)
        def _():
            m_sc[...] = jnp.full(m_sc.shape, -jnp.inf, m_sc.dtype)
            l_sc[...] = jnp.zeros(l_sc.shape, l_sc.dtype)
            acc_sc[...] = jnp.zeros(acc_sc.shape, acc_sc.dtype)

        tq = q_ref.shape[1]
        tkv = k_ref.shape[1]

        # (tq, H*d) -> (H, tq, d); head split stays on-chip.
        q = jnp.swapaxes(q_ref[0].reshape(tq, heads, dim_head), 0, 1)
        k = jnp.swapaxes(k_ref[0].reshape(tkv, heads, dim_head), 0, 1)
        v = jnp.swapaxes(v_ref[0].reshape(tkv, heads, dim_head), 0, 1)
        q = q.astype(jnp.bfloat16)
        k = k.astype(jnp.bfloat16)
        v = v.astype(jnp.bfloat16)

        # s is already in the exp2 domain (scale*log2e folded into w_q).
        s = jnp.einsum("hqd,hkd->hqk", q, k, preferred_element_type=jnp.float32)

        m_prev = m_sc[...]                                    # (H, tq, 1)
        m_new = jnp.maximum(m_prev, jnp.max(s, axis=-1, keepdims=True))
        alpha = jnp.exp2(m_prev - m_new)
        p = jnp.exp2(s - m_new)                               # (H, tq, tkv)
        l_sc[...] = alpha * l_sc[...] + jnp.sum(p, axis=-1, keepdims=True)
        acc_sc[...] = alpha * acc_sc[...] + jnp.einsum(
            "hqk,hkd->hqd", p.astype(jnp.bfloat16), v,
            preferred_element_type=jnp.float32)
        m_sc[...] = m_new

        @pl.when(ki == pl.num_programs(2) - 1)
        def _():
            # Post-PV normalization; reciprocal lands on the EUP slot.
            out = acc_sc[...] * pl.reciprocal(l_sc[...], approx=True)
            out = jnp.swapaxes(out, 0, 1).reshape(tq, heads * dim_head)
            o_ref[0] = out.astype(o_ref.dtype)

    return kernel


def flash_attention(q_src, q_blk, k_src, k_blk, v_src, v_blk, *, heads, dim_head,
                    q_tile=256, kv_tile=256, out_dtype=jnp.bfloat16):
    """q/k/v are windows of (possibly shared) HBM arrays whose last dim is a
    multiple of inner_dim; `*_blk` is the block index of each window along the
    last dim (in units of inner_dim)."""
    inner = heads * dim_head
    B, N, _ = q_src.shape
    _, M, _ = k_src.shape

    def prep(src, blk):
        if src.shape[-1] == inner:
            return src, 0
        if inner % 128 == 0 and src.shape[-1] % inner == 0:
            return src, blk          # zero-copy: BlockSpec slices the last dim
        # TODO(synk): fallback materializes the slice (one extra HBM copy).
        return src[..., blk * inner:(blk + 1) * inner], 0

    q_src, q_blk = prep(q_src, q_blk)
    k_src, k_blk = prep(k_src, k_blk)
    v_src, v_blk = prep(v_src, v_blk)

    tq = _pick_tile(N, q_tile, 8)
    tkv = _pick_tile(M, kv_tile, 8)
    grid = (B, N // tq, M // tkv)

    return pl.pallas_call(
        _make_flash_kernel(heads, dim_head),
        out_shape=jax.ShapeDtypeStruct((B, N, inner), out_dtype),
        grid=grid,
        in_specs=[
            pl.BlockSpec((1, tq, inner), lambda b, qi, ki, _q=q_blk: (b, qi, _q)),
            pl.BlockSpec((1, tkv, inner), lambda b, qi, ki, _k=k_blk: (b, ki, _k)),
            pl.BlockSpec((1, tkv, inner), lambda b, qi, ki, _v=v_blk: (b, ki, _v)),
        ],
        out_specs=pl.BlockSpec((1, tq, inner), lambda b, qi, ki: (b, qi, 0)),
        scratch_shapes=[
            pltpu.VMEM((heads, tq, 1), jnp.float32),          # running max
            pltpu.VMEM((heads, tq, 1), jnp.float32),          # running denom
            pltpu.VMEM((heads, tq, dim_head), jnp.float32),   # running PV acc
        ],
        compiler_params=pltpu.CompilerParams(
            dimension_semantics=("parallel", "parallel", "arbitrary")
        ),
    )(q_src, k_src, v_src)


# ----------------------------------------------------------------------------
# Module forward + parameter prep.
# ----------------------------------------------------------------------------
def attention_forward(x, params, context=None, *, heads, dim_head,
                      q_tile=256, kv_tile=256):
    B, N, query_dim = x.shape
    inner = heads * dim_head

    if context is None and "w_qkv" in params:
        # Fused QKV projection (pre-concatenated weight), then feed the single
        # qkv array three times to the attention kernel (BlockSpec last-dim
        # offsets 0/1/2 -> no q/k/v slicing copies in HBM).
        qkv = linear(x.reshape(B * N, query_dim), params["w_qkv"])
        qkv = qkv.reshape(B, N, 3 * inner)
        out = flash_attention(qkv, 0, qkv, 1, qkv, 2, heads=heads,
                              dim_head=dim_head, q_tile=q_tile, kv_tile=kv_tile)
    else:
        ctx = x if context is None else context
        Bc, M, ctx_dim = ctx.shape
        q = linear(x.reshape(B * N, query_dim), params["w_q"]).reshape(B, N, inner)
        kv = linear(ctx.reshape(Bc * M, ctx_dim), params["w_kv"]).reshape(B, M, 2 * inner)
        out = flash_attention(q, 0, kv, 0, kv, 1, heads=heads, dim_head=dim_head,
                              q_tile=q_tile, kv_tile=kv_tile)

    # Output projection with bias fused into the tiled matmul kernel.
    y = linear(out.reshape(B * N, inner), params["w_out"], b=params["b_out"],
               out_dtype=x.dtype)
    return y.reshape(B, N, query_dim)


def init_params(key, query_dim, context_dim, heads, dim_head, dtype=jnp.float32):
    """'Torch-equivalent' raw parameters; weights stored as (in, out)."""
    inner = heads * dim_head
    k1, k2, k3, k4 = jax.random.split(key, 4)
    return {
        "w_q": jax.random.normal(k1, (query_dim, inner), dtype) * 0.05,
        "w_kv": jax.random.normal(k2, (context_dim, 2 * inner), dtype) * 0.05,
        "w_out": jax.random.normal(k3, (inner, query_dim), dtype) * 0.05,
        "b_out": jax.random.normal(k4, (query_dim,), dtype) * 0.05,
    }


def prepare_params(raw, heads, dim_head, compute_dtype=jnp.bfloat16):
    """One-time prep: fold softmax scale*log2(e) into w_q (exp2 softmax in the
    kernel), pre-concatenate the fused QKV weight, cast weights to bf16."""
    scale = dim_head ** (-0.5)
    w_q = (raw["w_q"].astype(jnp.float32) * (scale * _LOG2_E)).astype(compute_dtype)
    w_kv = raw["w_kv"].astype(compute_dtype)
    prep = {
        "w_q": w_q,
        "w_kv": w_kv,
        "w_out": raw["w_out"].astype(compute_dtype),
        "b_out": raw["b_out"].astype(jnp.float32),
    }
    if raw["w_q"].shape[0] == raw["w_kv"].shape[0]:
        prep["w_qkv"] = jnp.concatenate([w_q, w_kv], axis=1)
    return prep


def reference_forward(x, raw, heads, dim_head, context=None):
    """Pure-JAX f32 reference mirroring the PyTorch module."""
    B, N, _ = x.shape
    ctx = x if context is None else context
    inner = heads * dim_head
    scale = dim_head ** (-0.5)
    q = x @ raw["w_q"]
    kv = ctx @ raw["w_kv"]
    k, v = kv[..., :inner], kv[..., inner:]

    def sh(t):
        b, n, _ = t.shape
        return t.reshape(b, n, heads, dim_head).transpose(0, 2, 1, 3)

    q, k, v = sh(q), sh(k), sh(v)
    sim = jnp.einsum("bhid,bhjd->bhij", q, k) * scale
    attn = jax.nn.softmax(sim, axis=-1)
    out = jnp.einsum("bhij,bhjd->bhid", attn, v)
    out = out.transpose(0, 2, 1, 3).reshape(B, N, inner)
    return out @ raw["w_out"] + raw["b_out"]


if __name__ == "__main__":
    # Small shapes consistent with the module; inner_dim = 128 keeps the
    # attention output lane-dense and enables zero-copy qkv slicing.
    B, N, M = 2, 128, 192
    query_dim = 32
    heads, dim_head = 2, 64

    key = jax.random.PRNGKey(0)
    kx, kc, kp = jax.random.split(key, 3)
    x = jax.random.normal(kx, (B, N, query_dim), jnp.float32)
    ctx = jax.random.normal(kc, (B, M, query_dim), jnp.float32)

    raw = init_params(kp, query_dim, query_dim, heads, dim_head)
    params = prepare_params(raw, heads, dim_head)

    fwd = jax.jit(functools.partial(attention_forward, heads=heads,
                                    dim_head=dim_head, q_tile=64, kv_tile=64))

    # Self-attention path (fused QKV, multiple q/kv grid steps).
    y = jax.block_until_ready(fwd(x, params))
    y_ref = reference_forward(x, raw, heads, dim_head)
    assert y.shape == (B, N, query_dim)
    # Tolerance covers bf16 matmul operands + approx reciprocal (documented).
    assert jnp.allclose(y, y_ref, atol=1e-2, rtol=1e-2), float(
        jnp.max(jnp.abs(y - y_ref)))

    # Cross-attention path (separate q / kv projections, longer kv sequence).
    y2 = jax.block_until_ready(fwd(x, params, ctx))
    y2_ref = reference_forward(x, raw, heads, dim_head, context=ctx)
    assert jnp.allclose(y2, y2_ref, atol=1e-2, rtol=1e-2), float(
        jnp.max(jnp.abs(y2 - y2_ref)))

    print("KERNEL_OK")
</pallas_src>

<mosaic_0001>
module attributes {stable_mosaic.version = 11 : i64} {
  func.func @kernel(%arg0: i32, %arg1: i32, %arg2: i32, %arg3: memref<1x64x128xbf16, #tpu.memory_space<vmem>>, %arg4: memref<1x64x128xbf16, #tpu.memory_space<vmem>>, %arg5: memref<1x64x128xbf16, #tpu.memory_space<vmem>>, %arg6: memref<1x64x128xbf16, #tpu.memory_space<vmem>>, %arg7: memref<2x64x1xf32, #tpu.memory_space<vmem>>, %arg8: memref<2x64x1xf32, #tpu.memory_space<vmem>>, %arg9: memref<2x64x64xf32, #tpu.memory_space<vmem>>) attributes {dimension_semantics = [#tpu.dimension_semantics<parallel>, #tpu.dimension_semantics<parallel>, #tpu.dimension_semantics<arbitrary>], iteration_bounds = array<i64: 2, 2, 2>, scalar_prefetch = 0 : i64, scratch_operands = 3 : i64, tpu.core_type = #tpu.core_type<tc>, window_params = [{transform_indices = @transform_0, window_bounds = array<i64: 1, 64, 128>}, {transform_indices = @transform_1, window_bounds = array<i64: 1, 64, 128>}, {transform_indices = @transform_2, window_bounds = array<i64: 1, 64, 128>}, {transform_indices = @transform_3, window_bounds = array<i64: 1, 64, 128>}]} {
    %c0_i32 = arith.constant 0 : i32
    %0 = arith.cmpi eq, %arg2, %c0_i32 : i32
    %1 = arith.extui %0 : i1 to i32
    %c0_i32_0 = arith.constant 0 : i32
    %2 = arith.cmpi ne, %1, %c0_i32_0 : i32
    scf.if %2 {
      %cst_31 = arith.constant 0xFF800000 : f32
      %42 = vector.broadcast %cst_31 : f32 to vector<2x64x1xf32>
      %c0_32 = arith.constant 0 : index
      %c0_33 = arith.constant 0 : index
      %c0_34 = arith.constant 0 : index
      %43 = vector.load %arg7[%c0_32, %c0_33, %c0_34] : memref<2x64x1xf32, #tpu.memory_space<vmem>>, vector<2x64x1xf32>
      tpu.vector_store %arg7[%c0_32, %c0_33, %c0_34], %42 {strides = array<i32>} : memref<2x64x1xf32, #tpu.memory_space<vmem>>, vector<2x64x1xf32>,
      %cst_35 = arith.constant 0.000000e+00 : f32
      %44 = vector.broadcast %cst_35 : f32 to vector<2x64x1xf32>
      %c0_36 = arith.constant 0 : index
      %c0_37 = arith.constant 0 : index
      %c0_38 = arith.constant 0 : index
      %45 = vector.load %arg8[%c0_36, %c0_37, %c0_38] : memref<2x64x1xf32, #tpu.memory_space<vmem>>, vector<2x64x1xf32>
      tpu.vector_store %arg8[%c0_36, %c0_37, %c0_38], %44 {strides = array<i32>} : memref<2x64x1xf32, #tpu.memory_space<vmem>>, vector<2x64x1xf32>,
      %cst_39 = arith.constant 0.000000e+00 : f32
      %46 = vector.broadcast %cst_39 : f32 to vector<2x64x64xf32>
      %c0_40 = arith.constant 0 : index
      %c0_41 = arith.constant 0 : index
      %c0_42 = arith.constant 0 : index
      %47 = vector.load %arg9[%c0_40, %c0_41, %c0_42] : memref<2x64x64xf32, #tpu.memory_space<vmem>>, vector<2x64x64xf32>
      tpu.vector_store %arg9[%c0_40, %c0_41, %c0_42], %46 {strides = array<i32>} : memref<2x64x64xf32, #tpu.memory_space<vmem>>, vector<2x64x64xf32>,
    } else {
    }
    %c0 = arith.constant 0 : index
    %c0_1 = arith.constant 0 : index
    %c0_2 = arith.constant 0 : index
    %3 = vector.load %arg3[%c0, %c0_1, %c0_2] : memref<1x64x128xbf16, #tpu.memory_space<vmem>>, vector<1x64x128xbf16>
    %4 = vector.shape_cast %3 : vector<1x64x128xbf16> to vector<64x128xbf16>
    %5 = vector.shape_cast %4 : vector<64x128xbf16> to vector<64x2x64xbf16>
    %6 = tpu.transpose %5, [1, 0, 2] : vector<64x2x64xbf16> -> vector<2x64x64xbf16>
    %c0_3 = arith.constant 0 : index
    %c0_4 = arith.constant 0 : index
    %c0_5 = arith.constant 0 : index
    %7 = vector.load %arg4[%c0_3, %c0_4, %c0_5] : memref<1x64x128xbf16, #tpu.memory_space<vmem>>, vector<1x64x128xbf16>
    %8 = vector.shape_cast %7 : vector<1x64x128xbf16> to vector<64x128xbf16>
    %9 = vector.shape_cast %8 : vector<64x128xbf16> to vector<64x2x64xbf16>
    %10 = tpu.transpose %9, [1, 0, 2] : vector<64x2x64xbf16> -> vector<2x64x64xbf16>
    %c0_6 = arith.constant 0 : index
    %c0_7 = arith.constant 0 : index
    %c0_8 = arith.constant 0 : index
    %11 = vector.load %arg5[%c0_6, %c0_7, %c0_8] : memref<1x64x128xbf16, #tpu.memory_space<vmem>>, vector<1x64x128xbf16>
    %12 = vector.shape_cast %11 : vector<1x64x128xbf16> to vector<64x128xbf16>
    %13 = vector.shape_cast %12 : vector<64x128xbf16> to vector<64x2x64xbf16>
    %14 = tpu.transpose %13, [1, 0, 2] : vector<64x2x64xbf16> -> vector<2x64x64xbf16>
    "tpu.trace_start"() <{level = 10 : i32, message = "hqd,hkd->hqk"}> : () -> ()
    %cst = arith.constant dense<0.000000e+00> : vector<2x64x64xf32>
    %15 = tpu.matmul %6, %10, %cst {dimension_numbers = #tpu.dot_dimension_numbers<[2], [2], [1], [1], [0, 0, 0, 1, 1, 1], [0], [0]>} : vector<2x64x64xbf16>, vector<2x64x64xbf16>, vector<2x64x64xf32> -> vector<2x64x64xf32>
    "tpu.trace_stop"() : () -> ()
    %c0_9 = arith.constant 0 : index
    %c0_10 = arith.constant 0 : index
    %c0_11 = arith.constant 0 : index
    %16 = vector.load %arg7[%c0_9, %c0_10, %c0_11] : memref<2x64x1xf32, #tpu.memory_space<vmem>>, vector<2x64x1xf32>
    %cst_12 = arith.constant dense<0xFF800000> : vector<2x64xf32>
    %17 = vector.multi_reduction <maximumf>, %15, %cst_12 [2] : vector<2x64x64xf32> to vector<2x64xf32>
    %18 = vector.shape_cast %17 : vector<2x64xf32> to vector<2x64x1xf32>
    %19 = arith.maximumf %16, %18 : vector<2x64x1xf32>
    %20 = arith.subf %16, %19 : vector<2x64x1xf32>
    %21 = math.exp2 %20 : vector<2x64x1xf32>
    %22 = vector.broadcast %19 : vector<2x64x1xf32> to vector<2x64x64xf32>
    %23 = arith.subf %15, %22 : vector<2x64x64xf32>
    %24 = math.exp2 %23 : vector<2x64x64xf32>
    %c0_13 = arith.constant 0 : index
    %c0_14 = arith.constant 0 : index
    %c0_15 = arith.constant 0 : index
    %25 = vector.load %arg8[%c0_13, %c0_14, %c0_15] : memref<2x64x1xf32, #tpu.memory_space<vmem>>, vector<2x64x1xf32>
    %26 = arith.mulf %21, %25 : vector<2x64x1xf32>
    %cst_16 = arith.constant dense<0.000000e+00> : vector<2x64xf32>
    %27 = vector.multi_reduction <add>, %24, %cst_16 [2] : vector<2x64x64xf32> to vector<2x64xf32>
    %28 = vector.shape_cast %27 : vector<2x64xf32> to vector<2x64x1xf32>
    %29 = arith.addf %26, %28 : vector<2x64x1xf32>
    %c0_17 = arith.constant 0 : index
    %c0_18 = arith.constant 0 : index
    %c0_19 = arith.constant 0 : index
    %30 = vector.load %arg8[%c0_17, %c0_18, %c0_19] : memref<2x64x1xf32, #tpu.memory_space<vmem>>, vector<2x64x1xf32>
    tpu.vector_store %arg8[%c0_17, %c0_18, %c0_19], %29 {strides = array<i32>} : memref<2x64x1xf32, #tpu.memory_space<vmem>>, vector<2x64x1xf32>,
    %c0_20 = arith.constant 0 : index
    %c0_21 = arith.constant 0 : index
    %c0_22 = arith.constant 0 : index
    %31 = vector.load %arg9[%c0_20, %c0_21, %c0_22] : memref<2x64x64xf32, #tpu.memory_space<vmem>>, vector<2x64x64xf32>
    %32 = vector.broadcast %21 : vector<2x64x1xf32> to vector<2x64x64xf32>
    %33 = arith.mulf %32, %31 : vector<2x64x64xf32>
    %34 = arith.truncf %24 : vector<2x64x64xf32> to vector<2x64x64xbf16>
    "tpu.trace_start"() <{level = 10 : i32, message = "hqk,hkd->hqd"}> : () -> ()
    %cst_23 = arith.constant dense<0.000000e+00> : vector<2x64x64xf32>
    %35 = tpu.matmul %34, %14, %cst_23 {dimension_numbers = #tpu.dot_dimension_numbers<[2], [1], [1], [2], [0, 0, 0, 1, 1, 2], [0], [0]>} : vector<2x64x64xbf16>, vector<2x64x64xbf16>, vector<2x64x64xf32> -> vector<2x64x64xf32>
    "tpu.trace_stop"() : () -> ()
    %36 = arith.addf %33, %35 : vector<2x64x64xf32>
    %c0_24 = arith.constant 0 : index
    %c0_25 = arith.constant 0 : index
    %c0_26 = arith.constant 0 : index
    %37 = vector.load %arg9[%c0_24, %c0_25, %c0_26] : memref<2x64x64xf32, #tpu.memory_space<vmem>>, vector<2x64x64xf32>
    tpu.vector_store %arg9[%c0_24, %c0_25, %c0_26], %36 {strides = array<i32>} : memref<2x64x64xf32, #tpu.memory_space<vmem>>, vector<2x64x64xf32>,
    %c0_27 = arith.constant 0 : index
    %c0_28 = arith.constant 0 : index
    %c0_29 = arith.constant 0 : index
    %38 = vector.load %arg7[%c0_27, %c0_28, %c0_29] : memref<2x64x1xf32, #tpu.memory_space<vmem>>, vector<2x64x1xf32>
    tpu.vector_store %arg7[%c0_27, %c0_28, %c0_29], %19 {strides = array<i32>} : memref<2x64x1xf32, #tpu.memory_space<vmem>>, vector<2x64x1xf32>,
    %c1_i32 = arith.constant 1 : i32
    %39 = arith.cmpi eq, %arg2, %c1_i32 : i32
    %40 = arith.extui %39 : i1 to i32
    %c0_i32_30 = arith.constant 0 : i32
    %41 = arith.cmpi ne, %40, %c0_i32_30 : i32
    scf.if %41 {
      %c0_31 = arith.constant 0 : index
      %c0_32 = arith.constant 0 : index
      %c0_33 = arith.constant 0 : index
      %42 = vector.load %arg9[%c0_31, %c0_32, %c0_33] : memref<2x64x64xf32, #tpu.memory_space<vmem>>, vector<2x64x64xf32>
      %c0_34 = arith.constant 0 : index
      %c0_35 = arith.constant 0 : index
      %c0_36 = arith.constant 0 : index
      %43 = vector.load %arg8[%c0_34, %c0_35, %c0_36] : memref<2x64x1xf32, #tpu.memory_space<vmem>>, vector<2x64x1xf32>
      %44 = tpu.reciprocal %43 {approx = true} : vector<2x64x1xf32> -> vector<2x64x1xf32>
      %45 = vector.broadcast %44 : vector<2x64x1xf32> to vector<2x64x64xf32>
      %46 = arith.mulf %42, %45 : vector<2x64x64xf32>
      %47 = tpu.transpose %46, [1, 0, 2] : vector<2x64x64xf32> -> vector<64x2x64xf32>
      %48 = vector.shape_cast %47 : vector<64x2x64xf32> to vector<64x128xf32>
      %49 = arith.truncf %48 : vector<64x128xf32> to vector<64x128xbf16>
      %c0_37 = arith.constant 0 : index
      %c0_38 = arith.constant 0 : index
      %c0_39 = arith.constant 0 : index
      %50 = vector.load %arg6[%c0_37, %c0_38, %c0_39] : memref<1x64x128xbf16, #tpu.memory_space<vmem>>, vector<1x64x128xbf16>
      %51 = vector.shape_cast %50 : vector<1x64x128xbf16> to vector<64x128xbf16>
      %52 = vector.shape_cast %49 : vector<64x128xbf16> to vector<1x64x128xbf16>
      tpu.vector_store %arg6[%c0_37, %c0_38, %c0_39], %52 {strides = array<i32>} : memref<1x64x128xbf16, #tpu.memory_space<vmem>>, vector<1x64x128xbf16>,
    } else {
    }
    return
  }
  func.func @transform_0(%arg0: i32, %arg1: i32, %arg2: i32) -> (i32, i32, i32) {
    %c0_i32 = arith.constant 0 : i32
    %c0_i32_0 = arith.constant 0 : i32
    return %arg0, %arg1, %c0_i32 : i32, i32, i32
  }
  func.func @transform_1(%arg0: i32, %arg1: i32, %arg2: i32) -> (i32, i32, i32) {
    %c1_i32 = arith.constant 1 : i32
    %c0_i32 = arith.constant 0 : i32
    return %arg0, %arg2, %c1_i32 : i32, i32, i32
  }
  func.func @transform_2(%arg0: i32, %arg1: i32, %arg2: i32) -> (i32, i32, i32) {
    %c2_i32 = arith.constant 2 : i32
    %c0_i32 = arith.constant 0 : i32
    return %arg0, %arg2, %c2_i32 : i32, i32, i32
  }
  func.func @transform_3(%arg0: i32, %arg1: i32, %arg2: i32) -> (i32, i32, i32) {
    %c0_i32 = arith.constant 0 : i32
    %c0_i32_0 = arith.constant 0 : i32
    return %arg0, %arg1, %c0_i32 : i32, i32, i32
  }
}

module attributes {stable_mosaic.version = 11 : i64} {
  func.func @_matmul_kernel(%arg0: i32, %arg1: i32, %arg2: i32, %arg3: memref<256x32xbf16, #tpu.memory_space<vmem>>, %arg4: memref<32x384xbf16, #tpu.memory_space<vmem>>, %arg5: memref<256x384xbf16, #tpu.memory_space<vmem>>, %arg6: memref<256x384xf32, #tpu.memory_space<vmem>>) attributes {dimension_semantics = [#tpu.dimension_semantics<parallel>, #tpu.dimension_semantics<parallel>, #tpu.dimension_semantics<arbitrary>], iteration_bounds = array<i64: 1, 1, 1>, scalar_prefetch = 0 : i64, scratch_operands = 1 : i64, tpu.core_type = #tpu.core_type<tc>, window_params = [{transform_indices = @transform_0, window_bounds = array<i64: 256, 32>}, {transform_indices = @transform_1, window_bounds = array<i64: 32, 384>}, {transform_indices = @transform_2, window_bounds = array<i64: 256, 384>}]} {
    %c0_i32 = arith.constant 0 : i32
    %0 = arith.cmpi eq, %arg2, %c0_i32 : i32
    %1 = arith.extui %0 : i1 to i32
    %c0_i32_0 = arith.constant 0 : i32
    %2 = arith.cmpi ne, %1, %c0_i32_0 : i32
    scf.if %2 {
      %cst_10 = arith.constant 0.000000e+00 : f32
      %12 = vector.broadcast %cst_10 : f32 to vector<256x384xf32>
      %c0_11 = arith.constant 0 : index
      %c0_12 = arith.constant 0 : index
      %13 = vector.load %arg6[%c0_11, %c0_12] : memref<256x384xf32, #tpu.memory_space<vmem>>, vector<256x384xf32>
      tpu.vector_store %arg6[%c0_11, %c0_12], %12 {strides = array<i32>} : memref<256x384xf32, #tpu.memory_space<vmem>>, vector<256x384xf32>,
    } else {
    }
    %c0 = arith.constant 0 : index
    %c0_1 = arith.constant 0 : index
    %3 = vector.load %arg6[%c0, %c0_1] : memref<256x384xf32, #tpu.memory_space<vmem>>, vector<256x384xf32>
    %c0_2 = arith.constant 0 : index
    %c0_3 = arith.constant 0 : index
    %4 = vector.load %arg3[%c0_2, %c0_3] : memref<256x32xbf16, #tpu.memory_space<vmem>>, vector<256x32xbf16>
    %c0_4 = arith.constant 0 : index
    %c0_5 = arith.constant 0 : index
    %5 = vector.load %arg4[%c0_4, %c0_5] : memref<32x384xbf16, #tpu.memory_space<vmem>>, vector<32x384xbf16>
    %cst = arith.constant dense<0.000000e+00> : vector<256x384xf32>
    %6 = tpu.matmul %4, %5, %cst {dimension_numbers = #tpu.dot_dimension_numbers<[1], [0], [0], [1], [0, 0, 1, 1], [], []>} : vector<256x32xbf16>, vector<32x384xbf16>, vector<256x384xf32> -> vector<256x384xf32>
    %7 = arith.addf %3, %6 : vector<256x384xf32>
    %c0_6 = arith.constant 0 : index
    %c0_7 = arith.constant 0 : index
    %8 = vector.load %arg6[%c0_6, %c0_7] : memref<256x384xf32, #tpu.memory_space<vmem>>, vector<256x384xf32>
    tpu.vector_store %arg6[%c0_6, %c0_7], %7 {strides = array<i32>} : memref<256x384xf32, #tpu.memory_space<vmem>>, vector<256x384xf32>,
    %c0_i32_8 = arith.constant 0 : i32
    %9 = arith.cmpi eq, %arg2, %c0_i32_8 : i32
    %10 = arith.extui %9 : i1 to i32
    %c0_i32_9 = arith.constant 0 : i32
    %11 = arith.cmpi ne, %10, %c0_i32_9 : i32
    scf.if %11 {
      %c0_10 = arith.constant 0 : index
      %c0_11 = arith.constant 0 : index
      %12 = vector.load %arg6[%c0_10, %c0_11] : memref<256x384xf32, #tpu.memory_space<vmem>>, vector<256x384xf32>
      %13 = arith.truncf %12 : vector<256x384xf32> to vector<256x384xbf16>
      %c0_12 = arith.constant 0 : index
      %c0_13 = arith.constant 0 : index
      %14 = vector.load %arg5[%c0_12, %c0_13] : memref<256x384xbf16, #tpu.memory_space<vmem>>, vector<256x384xbf16>
      tpu.vector_store %arg5[%c0_12, %c0_13], %13 {strides = array<i32>} : memref<256x384xbf16, #tpu.memory_space<vmem>>, vector<256x384xbf16>,
    } else {
    }
    return
  }
  func.func @transform_0(%arg0: i32, %arg1: i32, %arg2: i32) -> (i32, i32) {
    %c0_i32 = arith.constant 0 : i32
    return %arg0, %arg2 : i32, i32
  }
  func.func @transform_1(%arg0: i32, %arg1: i32, %arg2: i32) -> (i32, i32) {
    %c0_i32 = arith.constant 0 : i32
    return %arg2, %arg1 : i32, i32
  }
  func.func @transform_2(%arg0: i32, %arg1: i32, %arg2: i32) -> (i32, i32) {
    %c0_i32 = arith.constant 0 : i32
    return %arg0, %arg1 : i32, i32
  }
}

module attributes {stable_mosaic.version = 11 : i64} {
  func.func @_matmul_bias_kernel(%arg0: i32, %arg1: i32, %arg2: i32, %arg3: memref<256x128xbf16, #tpu.memory_space<vmem>>, %arg4: memref<128x32xbf16, #tpu.memory_space<vmem>>, %arg5: memref<1x32xf32, #tpu.memory_space<vmem>>, %arg6: memref<256x32xf32, #tpu.memory_space<vmem>>, %arg7: memref<256x32xf32, #tpu.memory_space<vmem>>) attributes {dimension_semantics = [#tpu.dimension_semantics<parallel>, #tpu.dimension_semantics<parallel>, #tpu.dimension_semantics<arbitrary>], iteration_bounds = array<i64: 1, 1, 1>, scalar_prefetch = 0 : i64, scratch_operands = 1 : i64, tpu.core_type = #tpu.core_type<tc>, window_params = [{transform_indices = @transform_0, window_bounds = array<i64: 256, 128>}, {transform_indices = @transform_1, window_bounds = array<i64: 128, 32>}, {transform_indices = @transform_2, window_bounds = array<i64: 1, 32>}, {transform_indices = @transform_3, window_bounds = array<i64: 256, 32>}]} {
    %c0_i32 = arith.constant 0 : i32
    %0 = arith.cmpi eq, %arg2, %c0_i32 : i32
    %1 = arith.extui %0 : i1 to i32
    %c0_i32_0 = arith.constant 0 : i32
    %2 = arith.cmpi ne, %1, %c0_i32_0 : i32
    scf.if %2 {
      %cst_10 = arith.constant 0.000000e+00 : f32
      %12 = vector.broadcast %cst_10 : f32 to vector<256x32xf32>
      %c0_11 = arith.constant 0 : index
      %c0_12 = arith.constant 0 : index
      %13 = vector.load %arg7[%c0_11, %c0_12] : memref<256x32xf32, #tpu.memory_space<vmem>>, vector<256x32xf32>
      tpu.vector_store %arg7[%c0_11, %c0_12], %12 {strides = array<i32>} : memref<256x32xf32, #tpu.memory_space<vmem>>, vector<256x32xf32>,
    } else {
    }
    %c0 = arith.constant 0 : index
    %c0_1 = arith.constant 0 : index
    %3 = vector.load %arg7[%c0, %c0_1] : memref<256x32xf32, #tpu.memory_space<vmem>>, vector<256x32xf32>
    %c0_2 = arith.constant 0 : index
    %c0_3 = arith.constant 0 : index
    %4 = vector.load %arg3[%c0_2, %c0_3] : memref<256x128xbf16, #tpu.memory_space<vmem>>, vector<256x128xbf16>
    %c0_4 = arith.constant 0 : index
    %c0_5 = arith.constant 0 : index
    %5 = vector.load %arg4[%c0_4, %c0_5] : memref<128x32xbf16, #tpu.memory_space<vmem>>, vector<128x32xbf16>
    %cst = arith.constant dense<0.000000e+00> : vector<256x32xf32>
    %6 = tpu.matmul %4, %5, %cst {dimension_numbers = #tpu.dot_dimension_numbers<[1], [0], [0], [1], [0, 0, 1, 1], [], []>} : vector<256x128xbf16>, vector<128x32xbf16>, vector<256x32xf32> -> vector<256x32xf32>
    %7 = arith.addf %3, %6 : vector<256x32xf32>
    %c0_6 = arith.constant 0 : index
    %c0_7 = arith.constant 0 : index
    %8 = vector.load %arg7[%c0_6, %c0_7] : memref<256x32xf32, #tpu.memory_space<vmem>>, vector<256x32xf32>
    tpu.vector_store %arg7[%c0_6, %c0_7], %7 {strides = array<i32>} : memref<256x32xf32, #tpu.memory_space<vmem>>, vector<256x32xf32>,
    %c0_i32_8 = arith.constant 0 : i32
    %9 = arith.cmpi eq, %arg2, %c0_i32_8 : i32
    %10 = arith.extui %9 : i1 to i32
    %c0_i32_9 = arith.constant 0 : i32
    %11 = arith.cmpi ne, %10, %c0_i32_9 : i32
    scf.if %11 {
      %c0_10 = arith.constant 0 : index
      %c0_11 = arith.constant 0 : index
      %12 = vector.load %arg7[%c0_10, %c0_11] : memref<256x32xf32, #tpu.memory_space<vmem>>, vector<256x32xf32>
      %c0_12 = arith.constant 0 : index
      %c0_13 = arith.constant 0 : index
      %13 = vector.load %arg5[%c0_12, %c0_13] : memref<1x32xf32, #tpu.memory_space<vmem>>, vector<1x32xf32>
      %14 = vector.broadcast %13 : vector<1x32xf32> to vector<256x32xf32>
      %15 = arith.addf %12, %14 : vector<256x32xf32>
      %c0_14 = arith.constant 0 : index
      %c0_15 = arith.constant 0 : index
      %16 = vector.load %arg6[%c0_14, %c0_15] : memref<256x32xf32, #tpu.memory_space<vmem>>, vector<256x32xf32>
      tpu.vector_store %arg6[%c0_14, %c0_15], %15 {strides = array<i32>} : memref<256x32xf32, #tpu.memory_space<vmem>>, vector<256x32xf32>,
    } else {
    }
    return
  }
  func.func @transform_0(%arg0: i32, %arg1: i32, %arg2: i32) -> (i32, i32) {
    %c0_i32 = arith.constant 0 : i32
    return %arg0, %arg2 : i32, i32
  }
  func.func @transform_1(%arg0: i32, %arg1: i32, %arg2: i32) -> (i32, i32) {
    %c0_i32 = arith.constant 0 : i32
    return %arg2, %arg1 : i32, i32
  }
  func.func @transform_2(%arg0: i32, %arg1: i32, %arg2: i32) -> (i32, i32) {
    %c0_i32 = arith.constant 0 : i32
    %c0_i32_0 = arith.constant 0 : i32
    return %c0_i32, %arg1 : i32, i32
  }
  func.func @transform_3(%arg0: i32, %arg1: i32, %arg2: i32) -> (i32, i32) {
    %c0_i32 = arith.constant 0 : i32
    return %arg0, %arg1 : i32, i32
  }
}

</mosaic_0001>

<llo_original>
// kernel: attention_forward.5
$region0: #{attention_forward.5}
  #allocation0 [shape = 'u32[]', space=smem, size = 0x4, offset = 0x4, fixed_abs, tag = 'smem constant byte address 0x4 - core index']
  #allocation1 [shape = 'u32[72,128]{1,0:T(1,128)}', space=vmem, size = 0x9000, scoped, tag = 'internal scratch']
  #allocation2 [shape = 'f32[256,32]{1,0:T(8,128)}', space=vmem, size = 0x20000, scoped, tag = 'scratch operand']
  %s0 = inlined_call_operand.vmem [shape: bf16[256,128], index: 0, kind: input, shape index: {}]
  %s1 = inlined_call_operand.vmem [shape: bf16[128,32], index: 1, kind: input, shape index: {}]
  %s2 = inlined_call_operand.vmem [shape: f32[1,32], index: 2, kind: input, shape index: {}]
  %s3 = inlined_call_operand.vmem [shape: f32[256,32], index: 3, kind: output, shape index: {}]
  %s4 = sld [smem:[#allocation0]]
  $region30: #{attention_forward.5} parent=0
    _
  %s6 = ssub.s32 1, %s4
  %s7 = scalar_select 0, %s6, %s4
  // Predicated region
  $region2: #{attention_forward.5} parent=0 // pred_check
    _
  $region3: #{attention_forward.5} parent=0 // pred_check_branch
    %9 = sbr.rel (0) target = $region5
  $region4: #{attention_forward.5} parent=0 // pred_region
    _
  $region5: #{attention_forward.5} parent=0 // pred_fallthru
    _
  // Predicated region
  $region6: #{attention_forward.5} parent=0 // pred_check
    _
  $region7: #{attention_forward.5} parent=0 // pred_check_branch
    %11 = sbr.rel (0) target = $region9
  $region8: #{attention_forward.5} parent=0 // pred_region
    _
  $region9: #{attention_forward.5} parent=0 // pred_fallthru
    _
  // Predicated region
  $region10: #{attention_forward.5} parent=0 // pred_check
    _
  $region11: #{attention_forward.5} parent=0 // pred_check_branch
    %13 = sbr.rel (0) target = $region13
  $region12: #{attention_forward.5} parent=0 // pred_region
    _
  $region13: #{attention_forward.5} parent=0 // pred_fallthru
    _
  %p14 = scmp.eq.s32.totalorder 0, 0
  // Predicated region
  $region14: #{attention_forward.5} parent=0 // pred_check
    %p15 = pneg %p14
  $region15: #{attention_forward.5} parent=0 // pred_check_branch
    %17 = sbr.rel (%p15) target = $region17
  $region16: #{attention_forward.5} parent=0 // pred_region
    %vm18 = vcmask 261120
    %19 = vst.msk [vmem:[#allocation2] sm:$0xff] %vm18, 0.0
    %20 = vst.msk [vmem:[#allocation2 + $0x8] sm:$0xff] %vm18, 0.0
    %21 = vst.msk [vmem:[#allocation2 + $0x10] sm:$0xff] %vm18, 0.0
    %22 = vst.msk [vmem:[#allocation2 + $0x18] sm:$0xff] %vm18, 0.0
    %23 = vst.msk [vmem:[#allocation2 + $0x20] sm:$0xff] %vm18, 0.0
    %24 = vst.msk [vmem:[#allocation2 + $0x28] sm:$0xff] %vm18, 0.0
    %25 = vst.msk [vmem:[#allocation2 + $0x30] sm:$0xff] %vm18, 0.0
    %26 = vst.msk [vmem:[#allocation2 + $0x38] sm:$0xff] %vm18, 0.0
    %27 = vst.msk [vmem:[#allocation2 + $0x40] sm:$0xff] %vm18, 0.0
    %28 = vst.msk [vmem:[#allocation2 + $0x48] sm:$0xff] %vm18, 0.0
    %29 = vst.msk [vmem:[#allocation2 + $0x50] sm:$0xff] %vm18, 0.0
    %30 = vst.msk [vmem:[#allocation2 + $0x58] sm:$0xff] %vm18, 0.0
    %31 = vst.msk [vmem:[#allocation2 + $0x60] sm:$0xff] %vm18, 0.0
    %32 = vst.msk [vmem:[#allocation2 + $0x68] sm:$0xff] %vm18, 0.0
    %33 = vst.msk [vmem:[#allocation2 + $0x70] sm:$0xff] %vm18, 0.0
    %34 = vst.msk [vmem:[#allocation2 + $0x78] sm:$0xff] %vm18, 0.0
    %35 = vst.msk [vmem:[#allocation2 + $0x80] sm:$0xff] %vm18, 0.0
    %36 = vst.msk [vmem:[#allocation2 + $0x88] sm:$0xff] %vm18, 0.0
    %37 = vst.msk [vmem:[#allocation2 + $0x90] sm:$0xff] %vm18, 0.0
    %38 = vst.msk [vmem:[#allocation2 + $0x98] sm:$0xff] %vm18, 0.0
    %39 = vst.msk [vmem:[#allocation2 + $0xa0] sm:$0xff] %vm18, 0.0
    %40 = vst.msk [vmem:[#allocation2 + $0xa8] sm:$0xff] %vm18, 0.0
    %41 = vst.msk [vmem:[#allocation2 + $0xb0] sm:$0xff] %vm18, 0.0
    %42 = vst.msk [vmem:[#allocation2 + $0xb8] sm:$0xff] %vm18, 0.0
    %43 = vst.msk [vmem:[#allocation2 + $0xc0] sm:$0xff] %vm18, 0.0
    %44 = vst.msk [vmem:[#allocation2 + $0xc8] sm:$0xff] %vm18, 0.0
    %45 = vst.msk [vmem:[#allocation2 + $0xd0] sm:$0xff] %vm18, 0.0
    %46 = vst.msk [vmem:[#allocation2 + $0xd8] sm:$0xff] %vm18, 0.0
    %47 = vst.msk [vmem:[#allocation2 + $0xe0] sm:$0xff] %vm18, 0.0
    %48 = vst.msk [vmem:[#allocation2 + $0xe8] sm:$0xff] %vm18, 0.0
    %49 = vst.msk [vmem:[#allocation2 + $0xf0] sm:$0xff] %vm18, 0.0
    %50 = vst.msk [vmem:[#allocation2 + $0xf8] sm:$0xff] %vm18, 0.0
  $region17: #{attention_forward.5} parent=0 // pred_fallthru
    _
  %v51 = vld [vmem:[#allocation2] sm:$0xff]
  %v52 = vld [vmem:[#allocation2 + $0x8] sm:$0xff]
  %v53 = vld [vmem:[#allocation2 + $0x10] sm:$0xff]
  %v54 = vld [vmem:[#allocation2 + $0x18] sm:$0xff]
  %v55 = vld [vmem:[#allocation2 + $0x20] sm:$0xff]
  %v56 = vld [vmem:[#allocation2 + $0x28] sm:$0xff]
  %v57 = vld [vmem:[#allocation2 + $0x30] sm:$0xff]
  %v58 = vld [vmem:[#allocation2 + $0x38] sm:$0xff]
  %v59 = vld [vmem:[#allocation2 + $0x40] sm:$0xff]
  %v60 = vld [vmem:[#allocation2 + $0x48] sm:$0xff]
  %v61 = vld [vmem:[#allocation2 + $0x50] sm:$0xff]
  %v62 = vld [vmem:[#allocation2 + $0x58] sm:$0xff]
  %v63 = vld [vmem:[#allocation2 + $0x60] sm:$0xff]
  %v64 = vld [vmem:[#allocation2 + $0x68] sm:$0xff]
  %v65 = vld [vmem:[#allocation2 + $0x70] sm:$0xff]
  %v66 = vld [vmem:[#allocation2 + $0x78] sm:$0xff]
  %v67 = vld [vmem:[#allocation2 + $0x80] sm:$0xff]
  %v68 = vld [vmem:[#allocation2 + $0x88] sm:$0xff]
  %v69 = vld [vmem:[#allocation2 + $0x90] sm:$0xff]
  %v70 = vld [vmem:[#allocation2 + $0x98] sm:$0xff]
  %v71 = vld [vmem:[#allocation2 + $0xa0] sm:$0xff]
  %v72 = vld [vmem:[#allocation2 + $0xa8] sm:$0xff]
  %v73 = vld [vmem:[#allocation2 + $0xb0] sm:$0xff]
  %v74 = vld [vmem:[#allocation2 + $0xb8] sm:$0xff]
  %v75 = vld [vmem:[#allocation2 + $0xc0] sm:$0xff]
  %v76 = vld [vmem:[#allocation2 + $0xc8] sm:$0xff]
  %v77 = vld [vmem:[#allocation2 + $0xd0] sm:$0xff]
  %v78 = vld [vmem:[#allocation2 + $0xd8] sm:$0xff]
  %v79 = vld [vmem:[#allocation2 + $0xe0] sm:$0xff]
  %v80 = vld [vmem:[#allocation2 + $0xe8] sm:$0xff]
  %v81 = vld [vmem:[#allocation2 + $0xf0] sm:$0xff]
  %v82 = vld [vmem:[#allocation2 + $0xf8] sm:$0xff]
  %v83 = vld [vmem:[%s0] sm:$0xf]
  %v84 = vld [vmem:[%s0 + $0x4] sm:$0xf]
  %v85 = vld [vmem:[%s0 + $0x8] sm:$0xf]
  %v86 = vld [vmem:[%s0 + $0xc] sm:$0xf]
  %v87 = vld [vmem:[%s0 + $0x10] sm:$0xf]
  %v88 = vld [vmem:[%s0 + $0x14] sm:$0xf]
  %v89 = vld [vmem:[%s0 + $0x18] sm:$0xf]
  %v90 = vld [vmem:[%s0 + $0x1c] sm:$0xf]
  %v91 = vld [vmem:[%s0 + $0x20] sm:$0xf]
  %v92 = vld [vmem:[%s0 + $0x24] sm:$0xf]
  %v93 = vld [vmem:[%s0 + $0x28] sm:$0xf]
  %v94 = vld [vmem:[%s0 + $0x2c] sm:$0xf]
  %v95 = vld [vmem:[%s0 + $0x30] sm:$0xf]
  %v96 = vld [vmem:[%s0 + $0x34] sm:$0xf]
  %v97 = vld [vmem:[%s0 + $0x38] sm:$0xf]
  %v98 = vld [vmem:[%s0 + $0x3c] sm:$0xf]
  %v99 = vld [vmem:[%s0 + $0x40] sm:$0xf]
  %v100 = vld [vmem:[%s0 + $0x44] sm:$0xf]
  %v101 = vld [vmem:[%s0 + $0x48] sm:$0xf]
  %v102 = vld [vmem:[%s0 + $0x4c] sm:$0xf]
  %v103 = vld [vmem:[%s0 + $0x50] sm:$0xf]
  %v104 = vld [vmem:[%s0 + $0x54] sm:$0xf]
  %v105 = vld [vmem:[%s0 + $0x58] sm:$0xf]
  %v106 = vld [vmem:[%s0 + $0x5c] sm:$0xf]
  %v107 = vld [vmem:[%s0 + $0x60] sm:$0xf]
  %v108 = vld [vmem:[%s0 + $0x64] sm:$0xf]
  %v109 = vld [vmem:[%s0 + $0x68] sm:$0xf]
  %v110 = vld [vmem:[%s0 + $0x6c] sm:$0xf]
  %v111 = vld [vmem:[%s0 + $0x70] sm:$0xf]
  %v112 = vld [vmem:[%s0 + $0x74] sm:$0xf]
  %v113 = vld [vmem:[%s0 + $0x78] sm:$0xf]
  %v114 = vld [vmem:[%s0 + $0x7c] sm:$0xf]
  %v115 = vld [vmem:[%s1] sm:$0xf]
  %v116 = vld [vmem:[%s1 + $0x4] sm:$0xf]
  %v117 = vld [vmem:[%s1 + $0x8] sm:$0xf]
  %v118 = vld [vmem:[%s1 + $0xc] sm:$0xf]
  %v119 = vld [vmem:[%s1 + $0x10] sm:$0xf]
  %v120 = vld [vmem:[%s1 + $0x14] sm:$0xf]
  %v121 = vld [vmem:[%s1 + $0x18] sm:$0xf]
  %v122 = vld [vmem:[%s1 + $0x1c] sm:$0xf]
  %v123 = vld [vmem:[%s1 + $0x20] sm:$0xf]
  %v124 = vld [vmem:[%s1 + $0x24] sm:$0xf]
  %v125 = vld [vmem:[%s1 + $0x28] sm:$0xf]
  %v126 = vld [vmem:[%s1 + $0x2c] sm:$0xf]
  %v127 = vld [vmem:[%s1 + $0x30] sm:$0xf]
  %v128 = vld [vmem:[%s1 + $0x34] sm:$0xf]
  %v129 = vld [vmem:[%s1 + $0x38] sm:$0xf]
  %v130 = vld [vmem:[%s1 + $0x3c] sm:$0xf]
  %v163 = vunpack.c.l.b16 %v83
  %v164 = vunpack.c.l.b16 %v84
  %v165 = vunpack.c.l.b16 %v85
  %v166 = vunpack.c.l.b16 %v86
  %v167 = vunpack.c.l.b16 %v87
  %v168 = vunpack.c.l.b16 %v88
  %v169 = vunpack.c.l.b16 %v89
  %v170 = vunpack.c.l.b16 %v90
  %v171 = vunpack.c.l.b16 %v91
  %v172 = vunpack.c.l.b16 %v92
  %v173 = vunpack.c.l.b16 %v93
  %v174 = vunpack.c.l.b16 %v94
  %v175 = vunpack.c.l.b16 %v95
  %v176 = vunpack.c.l.b16 %v96
  %v177 = vunpack.c.l.b16 %v97
  %v178 = vunpack.c.l.b16 %v98
  %v179 = vunpack.c.l.b16 %v99
  %v180 = vunpack.c.l.b16 %v100
  %v181 = vunpack.c.l.b16 %v101
  %v182 = vunpack.c.l.b16 %v102
  %v183 = vunpack.c.l.b16 %v103
  %v184 = vunpack.c.l.b16 %v104
  %v185 = vunpack.c.l.b16 %v105
  %v186 = vunpack.c.l.b16 %v106
  %v187 = vunpack.c.l.b16 %v107
  %v188 = vunpack.c.l.b16 %v108
  %v189 = vunpack.c.l.b16 %v109
  %v190 = vunpack.c.l.b16 %v110
  %v191 = vunpack.c.l.b16 %v111
  %v192 = vunpack.c.l.b16 %v112
  %v193 = vunpack.c.l.b16 %v113
  %v194 = vunpack.c.l.b16 %v114
  %v195 = vpack.c.b16 %v164, %v163
  %v196 = vpack.c.b16 %v166, %v165
  %v197 = vpack.c.b16 %v168, %v167
  %v198 = vpack.c.b16 %v170, %v169
  %v199 = vpack.c.b16 %v172, %v171
  %v200 = vpack.c.b16 %v174, %v173
  %v201 = vpack.c.b16 %v176, %v175
  %v202 = vpack.c.b16 %v178, %v177
  %v203 = vpack.c.b16 %v180, %v179
  %v204 = vpack.c.b16 %v182, %v181
  %v205 = vpack.c.b16 %v184, %v183
  %v206 = vpack.c.b16 %v186, %v185
  %v207 = vpack.c.b16 %v188, %v187
  %v208 = vpack.c.b16 %v190, %v189
  %v209 = vpack.c.b16 %v192, %v191
  %v210 = vpack.c.b16 %v194, %v193
  %v243 = vunpack.c.l.b16 %v115
  %v244 = vunpack.c.l.b16 %v116
  %v245 = vunpack.c.l.b16 %v117
  %v246 = vunpack.c.l.b16 %v118
  %v247 = vunpack.c.l.b16 %v119
  %v248 = vunpack.c.l.b16 %v120
  %v249 = vunpack.c.l.b16 %v121
  %v250 = vunpack.c.l.b16 %v122
  %v251 = vunpack.c.l.b16 %v123
  %v252 = vunpack.c.l.b16 %v124
  %v253 = vunpack.c.l.b16 %v125
  %v254 = vunpack.c.l.b16 %v126
  %v255 = vunpack.c.l.b16 %v127
  %v256 = vunpack.c.l.b16 %v128
  %v257 = vunpack.c.l.b16 %v129
  %v258 = vunpack.c.l.b16 %v130
  %v259 = vpack.c.b16 %v244, %v243
  %v260 = vpack.c.b16 %v246, %v245
  %v261 = vpack.c.b16 %v248, %v247
  %v262 = vpack.c.b16 %v250, %v249
  %v263 = vpack.c.b16 %v252, %v251
  %v264 = vpack.c.b16 %v254, %v253
  %v265 = vpack.c.b16 %v256, %v255
  %v266 = vpack.c.b16 %v258, %v257
  %275 = vmatpush.bf16.msra.mxu0 %v266
  %276 = vmatpush.bf16.msra.mxu0 %v265
  %277 = vmatpush.bf16.msra.mxu0 %v264
  %278 = vmatpush.bf16.msra.mxu0 %v263
  %279 = vmatpush.bf16.msra.mxu0 %v262
  %280 = vmatpush.bf16.msra.mxu0 %v261
  %281 = vmatpush.bf16.msra.mxu0 %v260
  %282 = vmatpush.bf16.msra.mxu0 %v259
  %283 = vmatmul.bf16.gmra.mxu0 %v195
  %v284 = vpop.f32.mrf.mxu0
  %v285 = vadd.f32 0.0, %v284
  %v286 = vpop.f32.mrf.mxu0
  %v287 = vadd.f32 0.0, %v286
  %288 = vmatmul.bf16.gmra.mxu0 %v196
  %v289 = vpop.f32.mrf.mxu0
  %v290 = vadd.f32 0.0, %v289
  %v291 = vpop.f32.mrf.mxu0
  %v292 = vadd.f32 0.0, %v291
  %293 = vmatmul.bf16.gmra.mxu0 %v197
  %v294 = vpop.f32.mrf.mxu0
  %v295 = vadd.f32 0.0, %v294
  %v296 = vpop.f32.mrf.mxu0
  %v297 = vadd.f32 0.0, %v296
  %298 = vmatmul.bf16.gmra.mxu0 %v198
  %v299 = vpop.f32.mrf.mxu0
  %v300 = vadd.f32 0.0, %v299
  %v301 = vpop.f32.mrf.mxu0
  %v302 = vadd.f32 0.0, %v301
  %303 = vmatmul.bf16.gmra.mxu0 %v199
  %v304 = vpop.f32.mrf.mxu0
  %v305 = vadd.f32 0.0, %v304
  %v306 = vpop.f32.mrf.mxu0
  %v307 = vadd.f32 0.0, %v306
  %308 = vmatmul.bf16.gmra.mxu0 %v200
  %v309 = vpop.f32.mrf.mxu0
  %v310 = vadd.f32 0.0, %v309
  %v311 = vpop.f32.mrf.mxu0
  %v312 = vadd.f32 0.0, %v311
  %313 = vmatmul.bf16.gmra.mxu0 %v201
  %v314 = vpop.f32.mrf.mxu0
  %v315 = vadd.f32 0.0, %v314
  %v316 = vpop.f32.mrf.mxu0
  %v317 = vadd.f32 0.0, %v316
  %318 = vmatmul.bf16.gmra.mxu0 %v202
  %v319 = vpop.f32.mrf.mxu0
  %v320 = vadd.f32 0.0, %v319
  %v321 = vpop.f32.mrf.mxu0
  %v322 = vadd.f32 0.0, %v321
  %323 = vmatmul.bf16.gmra.mxu0 %v203
  %v324 = vpop.f32.mrf.mxu0
  %v325 = vadd.f32 0.0, %v324
  %v326 = vpop.f32.mrf.mxu0
  %v327 = vadd.f32 0.0, %v326
  %328 = vmatmul.bf16.gmra.mxu0 %v204
  %v329 = vpop.f32.mrf.mxu0
  %v330 = vadd.f32 0.0, %v329
  %v331 = vpop.f32.mrf.mxu0
  %v332 = vadd.f32 0.0, %v331
  %333 = vmatmul.bf16.gmra.mxu0 %v205
  %v334 = vpop.f32.mrf.mxu0
  %v335 = vadd.f32 0.0, %v334
  %v336 = vpop.f32.mrf.mxu0
  %v337 = vadd.f32 0.0, %v336
  %338 = vmatmul.bf16.gmra.mxu0 %v206
  %v339 = vpop.f32.mrf.mxu0
  %v340 = vadd.f32 0.0, %v339
  %v341 = vpop.f32.mrf.mxu0
  %v342 = vadd.f32 0.0, %v341
  %343 = vmatmul.bf16.gmra.mxu0 %v207
  %v344 = vpop.f32.mrf.mxu0
  %v345 = vadd.f32 0.0, %v344
  %v346 = vpop.f32.mrf.mxu0
  %v347 = vadd.f32 0.0, %v346
  %348 = vmatmul.bf16.gmra.mxu0 %v208
  %v349 = vpop.f32.mrf.mxu0
  %v350 = vadd.f32 0.0, %v349
  %v351 = vpop.f32.mrf.mxu0
  %v352 = vadd.f32 0.0, %v351
  %353 = vmatmul.bf16.gmra.mxu0 %v209
  %v354 = vpop.f32.mrf.mxu0
  %v355 = vadd.f32 0.0, %v354
  %v356 = vpop.f32.mrf.mxu0
  %v357 = vadd.f32 0.0, %v356
  %358 = vmatmul.bf16.gmra.mxu0 %v210
  %v359 = vpop.f32.mrf.mxu0
  %v360 = vadd.f32 0.0, %v359
  %v361 = vpop.f32.mrf.mxu0
  %v362 = vadd.f32 0.0, %v361
  %363 = vdwg.mxu0
  %v364 = vadd.f32 %v51, %v285
  %v365 = vadd.f32 %v52, %v287
  %v366 = vadd.f32 %v53, %v290
  %v367 = vadd.f32 %v54, %v292
  %v368 = vadd.f32 %v55, %v295
  %v369 = vadd.f32 %v56, %v297
  %v370 = vadd.f32 %v57, %v300
  %v371 = vadd.f32 %v58, %v302
  %v372 = vadd.f32 %v59, %v305
  %v373 = vadd.f32 %v60, %v307
  %v374 = vadd.f32 %v61, %v310
  %v375 = vadd.f32 %v62, %v312
  %v376 = vadd.f32 %v63, %v315
  %v377 = vadd.f32 %v64, %v317
  %v378 = vadd.f32 %v65, %v320
  %v379 = vadd.f32 %v66, %v322
  %v380 = vadd.f32 %v67, %v325
  %v381 = vadd.f32 %v68, %v327
  %v382 = vadd.f32 %v69, %v330
  %v383 = vadd.f32 %v70, %v332
  %v384 = vadd.f32 %v71, %v335
  %v385 = vadd.f32 %v72, %v337
  %v386 = vadd.f32 %v73, %v340
  %v387 = vadd.f32 %v74, %v342
  %v388 = vadd.f32 %v75, %v345
  %v389 = vadd.f32 %v76, %v347
  %v390 = vadd.f32 %v77, %v350
  %v391 = vadd.f32 %v78, %v352
  %v392 = vadd.f32 %v79, %v355
  %v393 = vadd.f32 %v80, %v357
  %v394 = vadd.f32 %v81, %v360
  %v395 = vadd.f32 %v82, %v362
  %vm396 = vcmask 261120
  %397 = vst.msk [vmem:[#allocation2] sm:$0xff] %vm396, %v364
  %398 = vst.msk [vmem:[#allocation2 + $0x8] sm:$0xff] %vm396, %v365
  %399 = vst.msk [vmem:[#allocation2 + $0x10] sm:$0xff] %vm396, %v366
  %400 = vst.msk [vmem:[#allocation2 + $0x18] sm:$0xff] %vm396, %v367
  %401 = vst.msk [vmem:[#allocation2 + $0x20] sm:$0xff] %vm396, %v368
  %402 = vst.msk [vmem:[#allocation2 + $0x28] sm:$0xff] %vm396, %v369
  %403 = vst.msk [vmem:[#allocation2 + $0x30] sm:$0xff] %vm396, %v370
  %404 = vst.msk [vmem:[#allocation2 + $0x38] sm:$0xff] %vm396, %v371
  %405 = vst.msk [vmem:[#allocation2 + $0x40] sm:$0xff] %vm396, %v372
  %406 = vst.msk [vmem:[#allocation2 + $0x48] sm:$0xff] %vm396, %v373
  %407 = vst.msk [vmem:[#allocation2 + $0x50] sm:$0xff] %vm396, %v374
  %408 = vst.msk [vmem:[#allocation2 + $0x58] sm:$0xff] %vm396, %v375
  %409 = vst.msk [vmem:[#allocation2 + $0x60] sm:$0xff] %vm396, %v376
  %410 = vst.msk [vmem:[#allocation2 + $0x68] sm:$0xff] %vm396, %v377
  %411 = vst.msk [vmem:[#allocation2 + $0x70] sm:$0xff] %vm396, %v378
  %412 = vst.msk [vmem:[#allocation2 + $0x78] sm:$0xff] %vm396, %v379
  %413 = vst.msk [vmem:[#allocation2 + $0x80] sm:$0xff] %vm396, %v380
  %414 = vst.msk [vmem:[#allocation2 + $0x88] sm:$0xff] %vm396, %v381
  %415 = vst.msk [vmem:[#allocation2 + $0x90] sm:$0xff] %vm396, %v382
  %416 = vst.msk [vmem:[#allocation2 + $0x98] sm:$0xff] %vm396, %v383
  %417 = vst.msk [vmem:[#allocation2 + $0xa0] sm:$0xff] %vm396, %v384
  %418 = vst.msk [vmem:[#allocation2 + $0xa8] sm:$0xff] %vm396, %v385
  %419 = vst.msk [vmem:[#allocation2 + $0xb0] sm:$0xff] %vm396, %v386
  %420 = vst.msk [vmem:[#allocation2 + $0xb8] sm:$0xff] %vm396, %v387
  %421 = vst.msk [vmem:[#allocation2 + $0xc0] sm:$0xff] %vm396, %v388
  %422 = vst.msk [vmem:[#allocation2 + $0xc8] sm:$0xff] %vm396, %v389
  %423 = vst.msk [vmem:[#allocation2 + $0xd0] sm:$0xff] %vm396, %v390
  %424 = vst.msk [vmem:[#allocation2 + $0xd8] sm:$0xff] %vm396, %v391
  %425 = vst.msk [vmem:[#allocation2 + $0xe0] sm:$0xff] %vm396, %v392
  %426 = vst.msk [vmem:[#allocation2 + $0xe8] sm:$0xff] %vm396, %v393
  %427 = vst.msk [vmem:[#allocation2 + $0xf0] sm:$0xff] %vm396, %v394
  %428 = vst.msk [vmem:[#allocation2 + $0xf8] sm:$0xff] %vm396, %v395
  // Predicated region
  $region18: #{attention_forward.5} parent=0 // pred_check
    %p429 = pneg %p14
  $region19: #{attention_forward.5} parent=0 // pred_check_branch
    %431 = sbr.rel (%p429) target = $region21
  $region20: #{attention_forward.5} parent=0 // pred_region
    %v432 = vld [vmem:[#allocation2] sm:$0xff]
    %v433 = vld [vmem:[#allocation2 + $0x8] sm:$0xff]
    %v434 = vld [vmem:[#allocation2 + $0x10] sm:$0xff]
    %v435 = vld [vmem:[#allocation2 + $0x18] sm:$0xff]
    %v436 = vld [vmem:[#allocation2 + $0x20] sm:$0xff]
    %v437 = vld [vmem:[#allocation2 + $0x28] sm:$0xff]
    %v438 = vld [vmem:[#allocation2 + $0x30] sm:$0xff]
    %v439 = vld [vmem:[#allocation2 + $0x38] sm:$0xff]
    %v440 = vld [vmem:[#allocation2 + $0x40] sm:$0xff]
    %v441 = vld [vmem:[#allocation2 + $0x48] sm:$0xff]
    %v442 = vld [vmem:[#allocation2 + $0x50] sm:$0xff]
    %v443 = vld [vmem:[#allocation2 + $0x58] sm:$0xff]
    %v444 = vld [vmem:[#allocation2 + $0x60] sm:$0xff]
    %v445 = vld [vmem:[#allocation2 + $0x68] sm:$0xff]
    %v446 = vld [vmem:[#allocation2 + $0x70] sm:$0xff]
    %v447 = vld [vmem:[#allocation2 + $0x78] sm:$0xff]
    %v448 = vld [vmem:[#allocation2 + $0x80] sm:$0xff]
    %v449 = vld [vmem:[#allocation2 + $0x88] sm:$0xff]
    %v450 = vld [vmem:[#allocation2 + $0x90] sm:$0xff]
    %v451 = vld [vmem:[#allocation2 + $0x98] sm:$0xff]
    %v452 = vld [vmem:[#allocation2 + $0xa0] sm:$0xff]
    %v453 = vld [vmem:[#allocation2 + $0xa8] sm:$0xff]
    %v454 = vld [vmem:[#allocation2 + $0xb0] sm:$0xff]
    %v455 = vld [vmem:[#allocation2 + $0xb8] sm:$0xff]
    %v456 = vld [vmem:[#allocation2 + $0xc0] sm:$0xff]
    %v457 = vld [vmem:[#allocation2 + $0xc8] sm:$0xff]
    %v458 = vld [vmem:[#allocation2 + $0xd0] sm:$0xff]
    %v459 = vld [vmem:[#allocation2 + $0xd8] sm:$0xff]
    %v460 = vld [vmem:[#allocation2 + $0xe0] sm:$0xff]
    %v461 = vld [vmem:[#allocation2 + $0xe8] sm:$0xff]
    %v462 = vld [vmem:[#allocation2 + $0xf0] sm:$0xff]
    %v463 = vld [vmem:[#allocation2 + $0xf8] sm:$0xff]
    %v464 = vld [vmem:[%s2] sm:$0x1]
    %v466 = vperm.slane %v464, 0
    %v468 = vadd.f32 %v432, %v466
    %v469 = vadd.f32 %v433, %v466
    %v470 = vadd.f32 %v434, %v466
    %v471 = vadd.f32 %v435, %v466
    %v472 = vadd.f32 %v436, %v466
    %v473 = vadd.f32 %v437, %v466
    %v474 = vadd.f32 %v438, %v466
    %v475 = vadd.f32 %v439, %v466
    %v476 = vadd.f32 %v440, %v466
    %v477 = vadd.f32 %v441, %v466
    %v478 = vadd.f32 %v442, %v466
    %v479 = vadd.f32 %v443, %v466
    %v480 = vadd.f32 %v444, %v466
    %v481 = vadd.f32 %v445, %v466
    %v482 = vadd.f32 %v446, %v466
    %v483 = vadd.f32 %v447, %v466
    %v484 = vadd.f32 %v448, %v466
    %v485 = vadd.f32 %v449, %v466
    %v486 = vadd.f32 %v450, %v466
    %v487 = vadd.f32 %v451, %v466
    %v488 = vadd.f32 %v452, %v466
    %v489 = vadd.f32 %v453, %v466
    %v490 = vadd.f32 %v454, %v466
    %v491 = vadd.f32 %v455, %v466
    %v492 = vadd.f32 %v456, %v466
    %v493 = vadd.f32 %v457, %v466
    %v494 = vadd.f32 %v458, %v466
    %v495 = vadd.f32 %v459, %v466
    %v496 = vadd.f32 %v460, %v466
    %v497 = vadd.f32 %v461, %v466
    %v498 = vadd.f32 %v462, %v466
    %v499 = vadd.f32 %v463, %v466
    %500 = vst.msk [vmem:[%s3] sm:$0xff] %vm396, %v468
    %501 = vst.msk [vmem:[%s3 + $0x8] sm:$0xff] %vm396, %v469
    %502 = vst.msk [vmem:[%s3 + $0x10] sm:$0xff] %vm396, %v470
    %503 = vst.msk [vmem:[%s3 + $0x18] sm:$0xff] %vm396, %v471
    %504 = vst.msk [vmem:[%s3 + $0x20] sm:$0xff] %vm396, %v472
    %505 = vst.msk [vmem:[%s3 + $0x28] sm:$0xff] %vm396, %v473
    %506 = vst.msk [vmem:[%s3 + $0x30] sm:$0xff] %vm396, %v474
    %507 = vst.msk [vmem:[%s3 + $0x38] sm:$0xff] %vm396, %v475
    %508 = vst.msk [vmem:[%s3 + $0x40] sm:$0xff] %vm396, %v476
    %509 = vst.msk [vmem:[%s3 + $0x48] sm:$0xff] %vm396, %v477
    %510 = vst.msk [vmem:[%s3 + $0x50] sm:$0xff] %vm396, %v478
    %511 = vst.msk [vmem:[%s3 + $0x58] sm:$0xff] %vm396, %v479
    %512 = vst.msk [vmem:[%s3 + $0x60] sm:$0xff] %vm396, %v480
    %513 = vst.msk [vmem:[%s3 + $0x68] sm:$0xff] %vm396, %v481
    %514 = vst.msk [vmem:[%s3 + $0x70] sm:$0xff] %vm396, %v482
    %515 = vst.msk [vmem:[%s3 + $0x78] sm:$0xff] %vm396, %v483
    %516 = vst.msk [vmem:[%s3 + $0x80] sm:$0xff] %vm396, %v484
    %517 = vst.msk [vmem:[%s3 + $0x88] sm:$0xff] %vm396, %v485
    %518 = vst.msk [vmem:[%s3 + $0x90] sm:$0xff] %vm396, %v486
    %519 = vst.msk [vmem:[%s3 + $0x98] sm:$0xff] %vm396, %v487
    %520 = vst.msk [vmem:[%s3 + $0xa0] sm:$0xff] %vm396, %v488
    %521 = vst.msk [vmem:[%s3 + $0xa8] sm:$0xff] %vm396, %v489
    %522 = vst.msk [vmem:[%s3 + $0xb0] sm:$0xff] %vm396, %v490
    %523 = vst.msk [vmem:[%s3 + $0xb8] sm:$0xff] %vm396, %v491
    %524 = vst.msk [vmem:[%s3 + $0xc0] sm:$0xff] %vm396, %v492
    %525 = vst.msk [vmem:[%s3 + $0xc8] sm:$0xff] %vm396, %v493
    %526 = vst.msk [vmem:[%s3 + $0xd0] sm:$0xff] %vm396, %v494
    %527 = vst.msk [vmem:[%s3 + $0xd8] sm:$0xff] %vm396, %v495
    %528 = vst.msk [vmem:[%s3 + $0xe0] sm:$0xff] %vm396, %v496
    %529 = vst.msk [vmem:[%s3 + $0xe8] sm:$0xff] %vm396, %v497
    %530 = vst.msk [vmem:[%s3 + $0xf0] sm:$0xff] %vm396, %v498
    %531 = vst.msk [vmem:[%s3 + $0xf8] sm:$0xff] %vm396, %v499
  $region21: #{attention_forward.5} parent=0 // pred_fallthru
    _
  // Predicated region
  $region22: #{attention_forward.5} parent=0 // pred_check
    _
  $region23: #{attention_forward.5} parent=0 // pred_check_branch
    %533 = sbr.rel (0) target = $region25
  $region24: #{attention_forward.5} parent=0 // pred_region
    _
  $region25: #{attention_forward.5} parent=0 // pred_fallthru
    _
  // Predicated region
  $region26: #{attention_forward.5} parent=0 // pred_check
    _
  $region27: #{attention_forward.5} parent=0 // pred_check_branch
    %535 = sbr.rel (0) target = $region29
  $region28: #{attention_forward.5} parent=0 // pred_region
    _
  $region29: #{attention_forward.5} parent=0 // pred_fallthru
    _

// kernel: attention_forward.3
$region0: #{attention_forward.3}
  #allocation0 [shape = 'u32[]', space=smem, size = 0x4, offset = 0x4, fixed_abs, tag = 'smem constant byte address 0x4 - core index']
  #allocation1 [shape = 'u32[72,128]{1,0:T(1,128)}', space=vmem, size = 0x9000, scoped, tag = 'internal scratch']
  #allocation2 [shape = 'f32[256,384]{1,0:T(8,128)}', space=vmem, size = 0x60000, scoped, tag = 'scratch operand']
  %s0 = inlined_call_operand.vmem [shape: bf16[256,32], index: 0, kind: input, shape index: {}]
  %s1 = inlined_call_operand.vmem [shape: bf16[32,384], index: 1, kind: input, shape index: {}]
  %s2 = inlined_call_operand.vmem [shape: bf16[256,384], index: 2, kind: output, shape index: {}]
  %s3 = sld [smem:[#allocation0]]
  $region26: #{attention_forward.3} parent=0
    _
  %s5 = ssub.s32 1, %s3
  %s6 = scalar_select 0, %s5, %s3
  // Predicated region
  $region2: #{attention_forward.3} parent=0 // pred_check
    _
  $region3: #{attention_forward.3} parent=0 // pred_check_branch
    %8 = sbr.rel (0) target = $region5
  $region4: #{attention_forward.3} parent=0 // pred_region
    _
  $region5: #{attention_forward.3} parent=0 // pred_fallthru
    _
  // Predicated region
  $region6: #{attention_forward.3} parent=0 // pred_check
    _
  $region7: #{attention_forward.3} parent=0 // pred_check_branch
    %10 = sbr.rel (0) target = $region9
  $region8: #{attention_forward.3} parent=0 // pred_region
    _
  $region9: #{attention_forward.3} parent=0 // pred_fallthru
    _
  %p12 = scmp.eq.s32.totalorder 0, 0
  // Predicated region
  $region10: #{attention_forward.3} parent=0 // pred_check
    %p13 = pneg %p12
  $region11: #{attention_forward.3} parent=0 // pred_check_branch
    %15 = sbr.rel (%p13) target = $region13
  $region12: #{attention_forward.3} parent=0 // pred_region
    %16 = vst [vmem:[#allocation2] sm:$0xff] 0.0
    %17 = vst [vmem:[#allocation2 + $0x8] sm:$0xff] 0.0
    %18 = vst [vmem:[#allocation2 + $0x10] sm:$0xff] 0.0
    %19 = vst [vmem:[#allocation2 + $0x18] sm:$0xff] 0.0
    %20 = vst [vmem:[#allocation2 + $0x20] sm:$0xff] 0.0
    %21 = vst [vmem:[#allocation2 + $0x28] sm:$0xff] 0.0
    %22 = vst [vmem:[#allocation2 + $0x30] sm:$0xff] 0.0
    %23 = vst [vmem:[#allocation2 + $0x38] sm:$0xff] 0.0
    %24 = vst [vmem:[#allocation2 + $0x40] sm:$0xff] 0.0
    %25 = vst [vmem:[#allocation2 + $0x48] sm:$0xff] 0.0
    %26 = vst [vmem:[#allocation2 + $0x50] sm:$0xff] 0.0
    %27 = vst [vmem:[#allocation2 + $0x58] sm:$0xff] 0.0
    %28 = vst [vmem:[#allocation2 + $0x60] sm:$0xff] 0.0
    %29 = vst [vmem:[#allocation2 + $0x68] sm:$0xff] 0.0
    %30 = vst [vmem:[#allocation2 + $0x70] sm:$0xff] 0.0
    %31 = vst [vmem:[#allocation2 + $0x78] sm:$0xff] 0.0
    %32 = vst [vmem:[#allocation2 + $0x80] sm:$0xff] 0.0
    %33 = vst [vmem:[#allocation2 + $0x88] sm:$0xff] 0.0
    %34 = vst [vmem:[#allocation2 + $0x90] sm:$0xff] 0.0
    %35 = vst [vmem:[#allocation2 + $0x98] sm:$0xff] 0.0
    %36 = vst [vmem:[#allocation2 + $0xa0] sm:$0xff] 0.0
    %37 = vst [vmem:[#allocation2 + $0xa8] sm:$0xff] 0.0
    %38 = vst [vmem:[#allocation2 + $0xb0] sm:$0xff] 0.0
    %39 = vst [vmem:[#allocation2 + $0xb8] sm:$0xff] 0.0
    %40 = vst [vmem:[#allocation2 + $0xc0] sm:$0xff] 0.0
    %41 = vst [vmem:[#allocation2 + $0xc8] sm:$0xff] 0.0
    %42 = vst [vmem:[#allocation2 + $0xd0] sm:$0xff] 0.0
    %43 = vst [vmem:[#allocation2 + $0xd8] sm:$0xff] 0.0
    %44 = vst [vmem:[#allocation2 + $0xe0] sm:$0xff] 0.0
    %45 = vst [vmem:[#allocation2 + $0xe8] sm:$0xff] 0.0
    %46 = vst [vmem:[#allocation2 + $0xf0] sm:$0xff] 0.0
    %47 = vst [vmem:[#allocation2 + $0xf8] sm:$0xff] 0.0
    %48 = vst [vmem:[#allocation2 + $0x100] sm:$0xff] 0.0
    %49 = vst [vmem:[#allocation2 + $0x108] sm:$0xff] 0.0
    %50 = vst [vmem:[#allocation2 + $0x110] sm:$0xff] 0.0
    %51 = vst [vmem:[#allocation2 + $0x118] sm:$0xff] 0.0
    %52 = vst [vmem:[#allocation2 + $0x120] sm:$0xff] 0.0
    %53 = vst [vmem:[#allocation2 + $0x128] sm:$0xff] 0.0
    %54 = vst [vmem:[#allocation2 + $0x130] sm:$0xff] 0.0
    %55 = vst [vmem:[#allocation2 + $0x138] sm:$0xff] 0.0
    %56 = vst [vmem:[#allocation2 + $0x140] sm:$0xff] 0.0
    %57 = vst [vmem:[#allocation2 + $0x148] sm:$0xff] 0.0
    %58 = vst [vmem:[#allocation2 + $0x150] sm:$0xff] 0.0
    %59 = vst [vmem:[#allocation2 + $0x158] sm:$0xff] 0.0
    %60 = vst [vmem:[#allocation2 + $0x160] sm:$0xff] 0.0
    %61 = vst [vmem:[#allocation2 + $0x168] sm:$0xff] 0.0
    %62 = vst [vmem:[#allocation2 + $0x170] sm:$0xff] 0.0
    %63 = vst [vmem:[#allocation2 + $0x178] sm:$0xff] 0.0
    %64 = vst [vmem:[#allocation2 + $0x180] sm:$0xff] 0.0
    %65 = vst [vmem:[#allocation2 + $0x188] sm:$0xff] 0.0
    %66 = vst [vmem:[#allocation2 + $0x190] sm:$0xff] 0.0
    %67 = vst [vmem:[#allocation2 + $0x198] sm:$0xff] 0.0
    %68 = vst [vmem:[#allocation2 + $0x1a0] sm:$0xff] 0.0
    %69 = vst [vmem:[#allocation2 + $0x1a8] sm:$0xff] 0.0
    %70 = vst [vmem:[#allocation2 + $0x1b0] sm:$0xff] 0.0
    %71 = vst [vmem:[#allocation2 + $0x1b8] sm:$0xff] 0.0
    %72 = vst [vmem:[#allocation2 + $0x1c0] sm:$0xff] 0.0
    %73 = vst [vmem:[#allocation2 + $0x1c8] sm:$0xff] 0.0
    %74 = vst [vmem:[#allocation2 + $0x1d0] sm:$0xff] 0.0
    %75 = vst [vmem:[#allocation2 + $0x1d8] sm:$0xff] 0.0
    %76 = vst [vmem:[#allocation2 + $0x1e0] sm:$0xff] 0.0
    %77 = vst [vmem:[#allocation2 + $0x1e8] sm:$0xff] 0.0
    %78 = vst [vmem:[#allocation2 + $0x1f0] sm:$0xff] 0.0
    %79 = vst [vmem:[#allocation2 + $0x1f8] sm:$0xff] 0.0
    %80 = vst [vmem:[#allocation2 + $0x200] sm:$0xff] 0.0
    %81 = vst [vmem:[#allocation2 + $0x208] sm:$0xff] 0.0
    %82 = vst [vmem:[#allocation2 + $0x210] sm:$0xff] 0.0
    %83 = vst [vmem:[#allocation2 + $0x218] sm:$0xff] 0.0
    %84 = vst [vmem:[#allocation2 + $0x220] sm:$0xff] 0.0
    %85 = vst [vmem:[#allocation2 + $0x228] sm:$0xff] 0.0
    %86 = vst [vmem:[#allocation2 + $0x230] sm:$0xff] 0.0
    %87 = vst [vmem:[#allocation2 + $0x238] sm:$0xff] 0.0
    %88 = vst [vmem:[#allocation2 + $0x240] sm:$0xff] 0.0
    %89 = vst [vmem:[#allocation2 + $0x248] sm:$0xff] 0.0
    %90 = vst [vmem:[#allocation2 + $0x250] sm:$0xff] 0.0
    %91 = vst [vmem:[#allocation2 + $0x258] sm:$0xff] 0.0
    %92 = vst [vmem:[#allocation2 + $0x260] sm:$0xff] 0.0
    %93 = vst [vmem:[#allocation2 + $0x268] sm:$0xff] 0.0
    %94 = vst [vmem:[#allocation2 + $0x270] sm:$0xff] 0.0
    %95 = vst [vmem:[#allocation2 + $0x278] sm:$0xff] 0.0
    %96 = vst [vmem:[#allocation2 + $0x280] sm:$0xff] 0.0
    %97 = vst [vmem:[#allocation2 + $0x288] sm:$0xff] 0.0
    %98 = vst [vmem:[#allocation2 + $0x290] sm:$0xff] 0.0
    %99 = vst [vmem:[#allocation2 + $0x298] sm:$0xff] 0.0
    %100 = vst [vmem:[#allocation2 + $0x2a0] sm:$0xff] 0.0
    %101 = vst [vmem:[#allocation2 + $0x2a8] sm:$0xff] 0.0
    %102 = vst [vmem:[#allocation2 + $0x2b0] sm:$0xff] 0.0
    %103 = vst [vmem:[#allocation2 + $0x2b8] sm:$0xff] 0.0
    %104 = vst [vmem:[#allocation2 + $0x2c0] sm:$0xff] 0.0
    %105 = vst [vmem:[#allocation2 + $0x2c8] sm:$0xff] 0.0
    %106 = vst [vmem:[#allocation2 + $0x2d0] sm:$0xff] 0.0
    %107 = vst [vmem:[#allocation2 + $0x2d8] sm:$0xff] 0.0
    %108 = vst [vmem:[#allocation2 + $0x2e0] sm:$0xff] 0.0
    %109 = vst [vmem:[#allocation2 + $0x2e8] sm:$0xff] 0.0
    %110 = vst [vmem:[#allocation2 + $0x2f0] sm:$0xff] 0.0
    %111 = vst [vmem:[#allocation2 + $0x2f8] sm:$0xff] 0.0
  $region13: #{attention_forward.3} parent=0 // pred_fallthru
    _
  %v112 = vld [vmem:[#allocation2] sm:$0xff]
  %v113 = vld [vmem:[#allocation2 + $0x8] sm:$0xff]
  %v114 = vld [vmem:[#allocation2 + $0x10] sm:$0xff]
  %v115 = vld [vmem:[#allocation2 + $0x18] sm:$0xff]
  %v116 = vld [vmem:[#allocation2 + $0x20] sm:$0xff]
  %v117 = vld [vmem:[#allocation2 + $0x28] sm:$0xff]
  %v118 = vld [vmem:[#allocation2 + $0x30] sm:$0xff]
  %v119 = vld [vmem:[#allocation2 + $0x38] sm:$0xff]
  %v120 = vld [vmem:[#allocation2 + $0x40] sm:$0xff]
  %v121 = vld [vmem:[#allocation2 + $0x48] sm:$0xff]
  %v122 = vld [vmem:[#allocation2 + $0x50] sm:$0xff]
  %v123 = vld [vmem:[#allocation2 + $0x58] sm:$0xff]
  %v124 = vld [vmem:[#allocation2 + $0x60] sm:$0xff]
  %v125 = vld [vmem:[#allocation2 + $0x68] sm:$0xff]
  %v126 = vld [vmem:[#allocation2 + $0x70] sm:$0xff]
  %v127 = vld [vmem:[#allocation2 + $0x78] sm:$0xff]
  %v128 = vld [vmem:[#allocation2 + $0x80] sm:$0xff]
  %v129 = vld [vmem:[#allocation2 + $0x88] sm:$0xff]
  %v130 = vld [vmem:[#allocation2 + $0x90] sm:$0xff]
  %v131 = vld [vmem:[#allocation2 + $0x98] sm:$0xff]
  %v132 = vld [vmem:[#allocation2 + $0xa0] sm:$0xff]
  %v133 = vld [vmem:[#allocation2 + $0xa8] sm:$0xff]
  %v134 = vld [vmem:[#allocation2 + $0xb0] sm:$0xff]
  %v135 = vld [vmem:[#allocation2 + $0xb8] sm:$0xff]
  %v136 = vld [vmem:[#allocation2 + $0xc0] sm:$0xff]
  %v137 = vld [vmem:[#allocation2 + $0xc8] sm:$0xff]
  %v138 = vld [vmem:[#allocation2 + $0xd0] sm:$0xff]
  %v139 = vld [vmem:[#allocation2 + $0xd8] sm:$0xff]
  %v140 = vld [vmem:[#allocation2 + $0xe0] sm:$0xff]
  %v141 = vld [vmem:[#allocation2 + $0xe8] sm:$0xff]
  %v142 = vld [vmem:[#allocation2 + $0xf0] sm:$0xff]
  %v143 = vld [vmem:[#allocation2 + $0xf8] sm:$0xff]
  %v144 = vld [vmem:[#allocation2 + $0x100] sm:$0xff]
  %v145 = vld [vmem:[#allocation2 + $0x108] sm:$0xff]
  %v146 = vld [vmem:[#allocation2 + $0x110] sm:$0xff]
  %v147 = vld [vmem:[#allocation2 + $0x118] sm:$0xff]
  %v148 = vld [vmem:[#allocation2 + $0x120] sm:$0xff]
  %v149 = vld [vmem:[#allocation2 + $0x128] sm:$0xff]
  %v150 = vld [vmem:[#allocation2 + $0x130] sm:$0xff]
  %v151 = vld [vmem:[#allocation2 + $0x138] sm:$0xff]
  %v152 = vld [vmem:[#allocation2 + $0x140] sm:$0xff]
  %v153 = vld [vmem:[#allocation2 + $0x148] sm:$0xff]
  %v154 = vld [vmem:[#allocation2 + $0x150] sm:$0xff]
  %v155 = vld [vmem:[#allocation2 + $0x158] sm:$0xff]
  %v156 = vld [vmem:[#allocation2 + $0x160] sm:$0xff]
  %v157 = vld [vmem:[#allocation2 + $0x168] sm:$0xff]
  %v158 = vld [vmem:[#allocation2 + $0x170] sm:$0xff]
  %v159 = vld [vmem:[#allocation2 + $0x178] sm:$0xff]
  %v160 = vld [vmem:[#allocation2 + $0x180] sm:$0xff]
  %v161 = vld [vmem:[#allocation2 + $0x188] sm:$0xff]
  %v162 = vld [vmem:[#allocation2 + $0x190] sm:$0xff]
  %v163 = vld [vmem:[#allocation2 + $0x198] sm:$0xff]
  %v164 = vld [vmem:[#allocation2 + $0x1a0] sm:$0xff]
  %v165 = vld [vmem:[#allocation2 + $0x1a8] sm:$0xff]
  %v166 = vld [vmem:[#allocation2 + $0x1b0] sm:$0xff]
  %v167 = vld [vmem:[#allocation2 + $0x1b8] sm:$0xff]
  %v168 = vld [vmem:[#allocation2 + $0x1c0] sm:$0xff]
  %v169 = vld [vmem:[#allocation2 + $0x1c8] sm:$0xff]
  %v170 = vld [vmem:[#allocation2 + $0x1d0] sm:$0xff]
  %v171 = vld [vmem:[#allocation2 + $0x1d8] sm:$0xff]
  %v172 = vld [vmem:[#allocation2 + $0x1e0] sm:$0xff]
  %v173 = vld [vmem:[#allocation2 + $0x1e8] sm:$0xff]
  %v174 = vld [vmem:[#allocation2 + $0x1f0] sm:$0xff]
  %v175 = vld [vmem:[#allocation2 + $0x1f8] sm:$0xff]
  %v176 = vld [vmem:[#allocation2 + $0x200] sm:$0xff]
  %v177 = vld [vmem:[#allocation2 + $0x208] sm:$0xff]
  %v178 = vld [vmem:[#allocation2 + $0x210] sm:$0xff]
  %v179 = vld [vmem:[#allocation2 + $0x218] sm:$0xff]
  %v180 = vld [vmem:[#allocation2 + $0x220] sm:$0xff]
  %v181 = vld [vmem:[#allocation2 + $0x228] sm:$0xff]
  %v182 = vld [vmem:[#allocation2 + $0x230] sm:$0xff]
  %v183 = vld [vmem:[#allocation2 + $0x238] sm:$0xff]
  %v184 = vld [vmem:[#allocation2 + $0x240] sm:$0xff]
  %v185 = vld [vmem:[#allocation2 + $0x248] sm:$0xff]
  %v186 = vld [vmem:[#allocation2 + $0x250] sm:$0xff]
  %v187 = vld [vmem:[#allocation2 + $0x258] sm:$0xff]
  %v188 = vld [vmem:[#allocation2 + $0x260] sm:$0xff]
  %v189 = vld [vmem:[#allocation2 + $0x268] sm:$0xff]
  %v190 = vld [vmem:[#allocation2 + $0x270] sm:$0xff]
  %v191 = vld [vmem:[#allocation2 + $0x278] sm:$0xff]
  %v192 = vld [vmem:[#allocation2 + $0x280] sm:$0xff]
  %v193 = vld [vmem:[#allocation2 + $0x288] sm:$0xff]
  %v194 = vld [vmem:[#allocation2 + $0x290] sm:$0xff]
  %v195 = vld [vmem:[#allocation2 + $0x298] sm:$0xff]
  %v196 = vld [vmem:[#allocation2 + $0x2a0] sm:$0xff]
  %v197 = vld [vmem:[#allocation2 + $0x2a8] sm:$0xff]
  %v198 = vld [vmem:[#allocation2 + $0x2b0] sm:$0xff]
  %v199 = vld [vmem:[#allocation2 + $0x2b8] sm:$0xff]
  %v200 = vld [vmem:[#allocation2 + $0x2c0] sm:$0xff]
  %v201 = vld [vmem:[#allocation2 + $0x2c8] sm:$0xff]
  %v202 = vld [vmem:[#allocation2 + $0x2d0] sm:$0xff]
  %v203 = vld [vmem:[#allocation2 + $0x2d8] sm:$0xff]
  %v204 = vld [vmem:[#allocation2 + $0x2e0] sm:$0xff]
  %v205 = vld [vmem:[#allocation2 + $0x2e8] sm:$0xff]
  %v206 = vld [vmem:[#allocation2 + $0x2f0] sm:$0xff]
  %v207 = vld [vmem:[#allocation2 + $0x2f8] sm:$0xff]
  %v208 = vld [vmem:[%s0] sm:$0xf]
  %v209 = vld [vmem:[%s0 + $0x4] sm:$0xf]
  %v210 = vld [vmem:[%s0 + $0x8] sm:$0xf]
  %v211 = vld [vmem:[%s0 + $0xc] sm:$0xf]
  %v212 = vld [vmem:[%s0 + $0x10] sm:$0xf]
  %v213 = vld [vmem:[%s0 + $0x14] sm:$0xf]
  %v214 = vld [vmem:[%s0 + $0x18] sm:$0xf]
  %v215 = vld [vmem:[%s0 + $0x1c] sm:$0xf]
  %v216 = vld [vmem:[%s0 + $0x20] sm:$0xf]
  %v217 = vld [vmem:[%s0 + $0x24] sm:$0xf]
  %v218 = vld [vmem:[%s0 + $0x28] sm:$0xf]
  %v219 = vld [vmem:[%s0 + $0x2c] sm:$0xf]
  %v220 = vld [vmem:[%s0 + $0x30] sm:$0xf]
  %v221 = vld [vmem:[%s0 + $0x34] sm:$0xf]
  %v222 = vld [vmem:[%s0 + $0x38] sm:$0xf]
  %v223 = vld [vmem:[%s0 + $0x3c] sm:$0xf]
  %v224 = vld [vmem:[%s0 + $0x40] sm:$0xf]
  %v225 = vld [vmem:[%s0 + $0x44] sm:$0xf]
  %v226 = vld [vmem:[%s0 + $0x48] sm:$0xf]
  %v227 = vld [vmem:[%s0 + $0x4c] sm:$0xf]
  %v228 = vld [vmem:[%s0 + $0x50] sm:$0xf]
  %v229 = vld [vmem:[%s0 + $0x54] sm:$0xf]
  %v230 = vld [vmem:[%s0 + $0x58] sm:$0xf]
  %v231 = vld [vmem:[%s0 + $0x5c] sm:$0xf]
  %v232 = vld [vmem:[%s0 + $0x60] sm:$0xf]
  %v233 = vld [vmem:[%s0 + $0x64] sm:$0xf]
  %v234 = vld [vmem:[%s0 + $0x68] sm:$0xf]
  %v235 = vld [vmem:[%s0 + $0x6c] sm:$0xf]
  %v236 = vld [vmem:[%s0 + $0x70] sm:$0xf]
  %v237 = vld [vmem:[%s0 + $0x74] sm:$0xf]
  %v238 = vld [vmem:[%s0 + $0x78] sm:$0xf]
  %v239 = vld [vmem:[%s0 + $0x7c] sm:$0xf]
  %v240 = vld [vmem:[%s1] sm:$0xff]
  %v241 = vld [vmem:[%s1 + $0x8] sm:$0xf]
  %v242 = vld [vmem:[%s1 + $0xc] sm:$0xff]
  %v243 = vld [vmem:[%s1 + $0x14] sm:$0xf]
  %v244 = vld [vmem:[%s1 + $0x18] sm:$0xff]
  %v245 = vld [vmem:[%s1 + $0x20] sm:$0xf]
  %v246 = vld [vmem:[%s1 + $0x24] sm:$0xff]
  %v247 = vld [vmem:[%s1 + $0x2c] sm:$0xf]
  %v280 = vunpack.c.l.b16 %v208
  %v281 = vunpack.c.l.b16 %v209
  %v282 = vunpack.c.l.b16 %v210
  %v283 = vunpack.c.l.b16 %v211
  %v284 = vunpack.c.l.b16 %v212
  %v285 = vunpack.c.l.b16 %v213
  %v286 = vunpack.c.l.b16 %v214
  %v287 = vunpack.c.l.b16 %v215
  %v288 = vunpack.c.l.b16 %v216
  %v289 = vunpack.c.l.b16 %v217
  %v290 = vunpack.c.l.b16 %v218
  %v291 = vunpack.c.l.b16 %v219
  %v292 = vunpack.c.l.b16 %v220
  %v293 = vunpack.c.l.b16 %v221
  %v294 = vunpack.c.l.b16 %v222
  %v295 = vunpack.c.l.b16 %v223
  %v296 = vunpack.c.l.b16 %v224
  %v297 = vunpack.c.l.b16 %v225
  %v298 = vunpack.c.l.b16 %v226
  %v299 = vunpack.c.l.b16 %v227
  %v300 = vunpack.c.l.b16 %v228
  %v301 = vunpack.c.l.b16 %v229
  %v302 = vunpack.c.l.b16 %v230
  %v303 = vunpack.c.l.b16 %v231
  %v304 = vunpack.c.l.b16 %v232
  %v305 = vunpack.c.l.b16 %v233
  %v306 = vunpack.c.l.b16 %v234
  %v307 = vunpack.c.l.b16 %v235
  %v308 = vunpack.c.l.b16 %v236
  %v309 = vunpack.c.l.b16 %v237
  %v310 = vunpack.c.l.b16 %v238
  %v311 = vunpack.c.l.b16 %v239
  %v312 = vpack.c.b16 %v281, %v280
  %v313 = vpack.c.b16 %v283, %v282
  %v314 = vpack.c.b16 %v285, %v284
  %v315 = vpack.c.b16 %v287, %v286
  %v316 = vpack.c.b16 %v289, %v288
  %v317 = vpack.c.b16 %v291, %v290
  %v318 = vpack.c.b16 %v293, %v292
  %v319 = vpack.c.b16 %v295, %v294
  %v320 = vpack.c.b16 %v297, %v296
  %v321 = vpack.c.b16 %v299, %v298
  %v322 = vpack.c.b16 %v301, %v300
  %v323 = vpack.c.b16 %v303, %v302
  %v324 = vpack.c.b16 %v305, %v304
  %v325 = vpack.c.b16 %v307, %v306
  %v326 = vpack.c.b16 %v309, %v308
  %v327 = vpack.c.b16 %v311, %v310
  %v336 = vunpack.c.l.b16 %v240
  %v337 = vunpack.c.h.b16 %v240
  %v338 = vunpack.c.l.b16 %v241
  %v339 = vunpack.c.l.b16 %v242
  %v340 = vunpack.c.h.b16 %v242
  %v341 = vunpack.c.l.b16 %v243
  %v342 = vunpack.c.l.b16 %v244
  %v343 = vunpack.c.h.b16 %v244
  %v344 = vunpack.c.l.b16 %v245
  %v345 = vunpack.c.l.b16 %v246
  %v346 = vunpack.c.h.b16 %v246
  %v347 = vunpack.c.l.b16 %v247
  %v348 = vpack.c.b16 %v339, %v336
  %v349 = vpack.c.b16 %v340, %v337
  %v350 = vpack.c.b16 %v341, %v338
  %v351 = vpack.c.b16 %v345, %v342
  %v352 = vpack.c.b16 %v346, %v343
  %v353 = vpack.c.b16 %v347, %v344
  %vm360 = vcmask 261120
  %v362 = vsel %vm360, %v312, 0
  %v365 = vsel %vm360, %v313, 0
  %v368 = vsel %vm360, %v314, 0
  %v371 = vsel %vm360, %v315, 0
  %v374 = vsel %vm360, %v316, 0
  %v377 = vsel %vm360, %v317, 0
  %v380 = vsel %vm360, %v318, 0
  %v383 = vsel %vm360, %v319, 0
  %v386 = vsel %vm360, %v320, 0
  %v389 = vsel %vm360, %v321, 0
  %v392 = vsel %vm360, %v322, 0
  %v395 = vsel %vm360, %v323, 0
  %v398 = vsel %vm360, %v324, 0
  %v401 = vsel %vm360, %v325, 0
  %v404 = vsel %vm360, %v326, 0
  %v407 = vsel %vm360, %v327, 0
  %409 = vmatpush.bf16.msra.mxu0 0
  %410 = vmatpush.bf16.msra.mxu0 0
  %411 = vmatpush.bf16.msra.mxu0 0
  %412 = vmatpush.bf16.msra.mxu0 0
  %413 = vmatpush.bf16.msra.mxu0 0
  %414 = vmatpush.bf16.msra.mxu0 0
  %415 = vmatpush.bf16.msra.mxu0 %v351
  %416 = vmatpush.bf16.msra.mxu0 %v348
  %417 = vmatmul.bf16.gmra.mxu0 %v362
  %v418 = vpop.f32.mrf.mxu0
  %v419 = vadd.f32 0.0, %v418
  %v420 = vpop.f32.mrf.mxu0
  %v421 = vadd.f32 0.0, %v420
  %422 = vmatmul.bf16.gmra.mxu0 %v365
  %v423 = vpop.f32.mrf.mxu0
  %v424 = vadd.f32 0.0, %v423
  %v425 = vpop.f32.mrf.mxu0
  %v426 = vadd.f32 0.0, %v425
  %427 = vmatmul.bf16.gmra.mxu0 %v368
  %v428 = vpop.f32.mrf.mxu0
  %v429 = vadd.f32 0.0, %v428
  %v430 = vpop.f32.mrf.mxu0
  %v431 = vadd.f32 0.0, %v430
  %432 = vmatmul.bf16.gmra.mxu0 %v371
  %v433 = vpop.f32.mrf.mxu0
  %v434 = vadd.f32 0.0, %v433
  %v435 = vpop.f32.mrf.mxu0
  %v436 = vadd.f32 0.0, %v435
  %437 = vmatmul.bf16.gmra.mxu0 %v374
  %v438 = vpop.f32.mrf.mxu0
  %v439 = vadd.f32 0.0, %v438
  %v440 = vpop.f32.mrf.mxu0
  %v441 = vadd.f32 0.0, %v440
  %442 = vmatmul.bf16.gmra.mxu0 %v377
  %v443 = vpop.f32.mrf.mxu0
  %v444 = vadd.f32 0.0, %v443
  %v445 = vpop.f32.mrf.mxu0
  %v446 = vadd.f32 0.0, %v445
  %447 = vmatmul.bf16.gmra.mxu0 %v380
  %v448 = vpop.f32.mrf.mxu0
  %v449 = vadd.f32 0.0, %v448
  %v450 = vpop.f32.mrf.mxu0
  %v451 = vadd.f32 0.0, %v450
  %452 = vmatmul.bf16.gmra.mxu0 %v383
  %v453 = vpop.f32.mrf.mxu0
  %v454 = vadd.f32 0.0, %v453
  %v455 = vpop.f32.mrf.mxu0
  %v456 = vadd.f32 0.0, %v455
  %457 = vmatmul.bf16.gmra.mxu0 %v386
  %v458 = vpop.f32.mrf.mxu0
  %v459 = vadd.f32 0.0, %v458
  %v460 = vpop.f32.mrf.mxu0
  %v461 = vadd.f32 0.0, %v460
  %462 = vmatmul.bf16.gmra.mxu0 %v389
  %v463 = vpop.f32.mrf.mxu0
  %v464 = vadd.f32 0.0, %v463
  %v465 = vpop.f32.mrf.mxu0
  %v466 = vadd.f32 0.0, %v465
  %467 = vmatmul.bf16.gmra.mxu0 %v392
  %v468 = vpop.f32.mrf.mxu0
  %v469 = vadd.f32 0.0, %v468
  %v470 = vpop.f32.mrf.mxu0
  %v471 = vadd.f32 0.0, %v470
  %472 = vmatmul.bf16.gmra.mxu0 %v395
  %v473 = vpop.f32.mrf.mxu0
  %v474 = vadd.f32 0.0, %v473
  %v475 = vpop.f32.mrf.mxu0
  %v476 = vadd.f32 0.0, %v475
  %477 = vmatmul.bf16.gmra.mxu0 %v398
  %v478 = vpop.f32.mrf.mxu0
  %v479 = vadd.f32 0.0, %v478
  %v480 = vpop.f32.mrf.mxu0
  %v481 = vadd.f32 0.0, %v480
  %482 = vmatmul.bf16.gmra.mxu0 %v401
  %v483 = vpop.f32.mrf.mxu0
  %v484 = vadd.f32 0.0, %v483
  %v485 = vpop.f32.mrf.mxu0
  %v486 = vadd.f32 0.0, %v485
  %487 = vmatmul.bf16.gmra.mxu0 %v404
  %v488 = vpop.f32.mrf.mxu0
  %v489 = vadd.f32 0.0, %v488
  %v490 = vpop.f32.mrf.mxu0
  %v491 = vadd.f32 0.0, %v490
  %492 = vmatmul.bf16.gmra.mxu0 %v407
  %v493 = vpop.f32.mrf.mxu0
  %v494 = vadd.f32 0.0, %v493
  %v495 = vpop.f32.mrf.mxu0
  %v496 = vadd.f32 0.0, %v495
  %497 = vdwg.mxu0
  %498 = vmatpush.bf16.msra.mxu0 0
  %499 = vmatpush.bf16.msra.mxu0 0
  %500 = vmatpush.bf16.msra.mxu0 0
  %501 = vmatpush.bf16.msra.mxu0 0
  %502 = vmatpush.bf16.msra.mxu0 0
  %503 = vmatpush.bf16.msra.mxu0 0
  %504 = vmatpush.bf16.msra.mxu0 %v352
  %505 = vmatpush.bf16.msra.mxu0 %v349
  %506 = vmatmul.bf16.gmra.mxu0 %v362
  %v507 = vpop.f32.mrf.mxu0
  %v508 = vadd.f32 0.0, %v507
  %v509 = vpop.f32.mrf.mxu0
  %v510 = vadd.f32 0.0, %v509
  %511 = vmatmul.bf16.gmra.mxu0 %v365
  %v512 = vpop.f32.mrf.mxu0
  %v513 = vadd.f32 0.0, %v512
  %v514 = vpop.f32.mrf.mxu0
  %v515 = vadd.f32 0.0, %v514
  %516 = vmatmul.bf16.gmra.mxu0 %v368
  %v517 = vpop.f32.mrf.mxu0
  %v518 = vadd.f32 0.0, %v517
  %v519 = vpop.f32.mrf.mxu0
  %v520 = vadd.f32 0.0, %v519
  %521 = vmatmul.bf16.gmra.mxu0 %v371
  %v522 = vpop.f32.mrf.mxu0
  %v523 = vadd.f32 0.0, %v522
  %v524 = vpop.f32.mrf.mxu0
  %v525 = vadd.f32 0.0, %v524
  %526 = vmatmul.bf16.gmra.mxu0 %v374
  %v527 = vpop.f32.mrf.mxu0
  %v528 = vadd.f32 0.0, %v527
  %v529 = vpop.f32.mrf.mxu0
  %v530 = vadd.f32 0.0, %v529
  %531 = vmatmul.bf16.gmra.mxu0 %v377
  %v532 = vpop.f32.mrf.mxu0
  %v533 = vadd.f32 0.0, %v532
  %v534 = vpop.f32.mrf.mxu0
  %v535 = vadd.f32 0.0, %v534
  %536 = vmatmul.bf16.gmra.mxu0 %v380
  %v537 = vpop.f32.mrf.mxu0
  %v538 = vadd.f32 0.0, %v537
  %v539 = vpop.f32.mrf.mxu0
  %v540 = vadd.f32 0.0, %v539
  %541 = vmatmul.bf16.gmra.mxu0 %v383
  %v542 = vpop.f32.mrf.mxu0
  %v543 = vadd.f32 0.0, %v542
  %v544 = vpop.f32.mrf.mxu0
  %v545 = vadd.f32 0.0, %v544
  %546 = vmatmul.bf16.gmra.mxu0 %v386
  %v547 = vpop.f32.mrf.mxu0
  %v548 = vadd.f32 0.0, %v547
  %v549 = vpop.f32.mrf.mxu0
  %v550 = vadd.f32 0.0, %v549
  %551 = vmatmul.bf16.gmra.mxu0 %v389
  %v552 = vpop.f32.mrf.mxu0
  %v553 = vadd.f32 0.0, %v552
  %v554 = vpop.f32.mrf.mxu0
  %v555 = vadd.f32 0.0, %v554
  %556 = vmatmul.bf16.gmra.mxu0 %v392
  %v557 = vpop.f32.mrf.mxu0
  %v558 = vadd.f32 0.0, %v557
  %v559 = vpop.f32.mrf.mxu0
  %v560 = vadd.f32 0.0, %v559
  %561 = vmatmul.bf16.gmra.mxu0 %v395
  %v562 = vpop.f32.mrf.mxu0
  %v563 = vadd.f32 0.0, %v562
  %v564 = vpop.f32.mrf.mxu0
  %v565 = vadd.f32 0.0, %v564
  %566 = vmatmul.bf16.gmra.mxu0 %v398
  %v567 = vpop.f32.mrf.mxu0
  %v568 = vadd.f32 0.0, %v567
  %v569 = vpop.f32.mrf.mxu0
  %v570 = vadd.f32 0.0, %v569
  %571 = vmatmul.bf16.gmra.mxu0 %v401
  %v572 = vpop.f32.mrf.mxu0
  %v573 = vadd.f32 0.0, %v572
  %v574 = vpop.f32.mrf.mxu0
  %v575 = vadd.f32 0.0, %v574
  %576 = vmatmul.bf16.gmra.mxu0 %v404
  %v577 = vpop.f32.mrf.mxu0
  %v578 = vadd.f32 0.0, %v577
  %v579 = vpop.f32.mrf.mxu0
  %v580 = vadd.f32 0.0, %v579
  %581 = vmatmul.bf16.gmra.mxu0 %v407
  %v582 = vpop.f32.mrf.mxu0
  %v583 = vadd.f32 0.0, %v582
  %v584 = vpop.f32.mrf.mxu0
  %v585 = vadd.f32 0.0, %v584
  %586 = vdwg.mxu0
  %587 = vmatpush.bf16.msra.mxu0 0
  %588 = vmatpush.bf16.msra.mxu0 0
  %589 = vmatpush.bf16.msra.mxu0 0
  %590 = vmatpush.bf16.msra.mxu0 0
  %591 = vmatpush.bf16.msra.mxu0 0
  %592 = vmatpush.bf16.msra.mxu0 0
  %593 = vmatpush.bf16.msra.mxu0 %v353
  %594 = vmatpush.bf16.msra.mxu0 %v350
  %595 = vmatmul.bf16.gmra.mxu0 %v362
  %v596 = vpop.f32.mrf.mxu0
  %v597 = vadd.f32 0.0, %v596
  %v598 = vpop.f32.mrf.mxu0
  %v599 = vadd.f32 0.0, %v598
  %600 = vmatmul.bf16.gmra.mxu0 %v365
  %v601 = vpop.f32.mrf.mxu0
  %v602 = vadd.f32 0.0, %v601
  %v603 = vpop.f32.mrf.mxu0
  %v604 = vadd.f32 0.0, %v603
  %605 = vmatmul.bf16.gmra.mxu0 %v368
  %v606 = vpop.f32.mrf.mxu0
  %v607 = vadd.f32 0.0, %v606
  %v608 = vpop.f32.mrf.mxu0
  %v609 = vadd.f32 0.0, %v608
  %610 = vmatmul.bf16.gmra.mxu0 %v371
  %v611 = vpop.f32.mrf.mxu0
  %v612 = vadd.f32 0.0, %v611
  %v613 = vpop.f32.mrf.mxu0
  %v614 = vadd.f32 0.0, %v613
  %615 = vmatmul.bf16.gmra.mxu0 %v374
  %v616 = vpop.f32.mrf.mxu0
  %v617 = vadd.f32 0.0, %v616
  %v618 = vpop.f32.mrf.mxu0
  %v619 = vadd.f32 0.0, %v618
  %620 = vmatmul.bf16.gmra.mxu0 %v377
  %v621 = vpop.f32.mrf.mxu0
  %v622 = vadd.f32 0.0, %v621
  %v623 = vpop.f32.mrf.mxu0
  %v624 = vadd.f32 0.0, %v623
  %625 = vmatmul.bf16.gmra.mxu0 %v380
  %v626 = vpop.f32.mrf.mxu0
  %v627 = vadd.f32 0.0, %v626
  %v628 = vpop.f32.mrf.mxu0
  %v629 = vadd.f32 0.0, %v628
  %630 = vmatmul.bf16.gmra.mxu0 %v383
  %v631 = vpop.f32.mrf.mxu0
  %v632 = vadd.f32 0.0, %v631
  %v633 = vpop.f32.mrf.mxu0
  %v634 = vadd.f32 0.0, %v633
  %635 = vmatmul.bf16.gmra.mxu0 %v386
  %v636 = vpop.f32.mrf.mxu0
  %v637 = vadd.f32 0.0, %v636
  %v638 = vpop.f32.mrf.mxu0
  %v639 = vadd.f32 0.0, %v638
  %640 = vmatmul.bf16.gmra.mxu0 %v389
  %v641 = vpop.f32.mrf.mxu0
  %v642 = vadd.f32 0.0, %v641
  %v643 = vpop.f32.mrf.mxu0
  %v644 = vadd.f32 0.0, %v643
  %645 = vmatmul.bf16.gmra.mxu0 %v392
  %v646 = vpop.f32.mrf.mxu0
  %v647 = vadd.f32 0.0, %v646
  %v648 = vpop.f32.mrf.mxu0
  %v649 = vadd.f32 0.0, %v648
  %650 = vmatmul.bf16.gmra.mxu0 %v395
  %v651 = vpop.f32.mrf.mxu0
  %v652 = vadd.f32 0.0, %v651
  %v653 = vpop.f32.mrf.mxu0
  %v654 = vadd.f32 0.0, %v653
  %655 = vmatmul.bf16.gmra.mxu0 %v398
  %v656 = vpop.f32.mrf.mxu0
  %v657 = vadd.f32 0.0, %v656
  %v658 = vpop.f32.mrf.mxu0
  %v659 = vadd.f32 0.0, %v658
  %660 = vmatmul.bf16.gmra.mxu0 %v401
  %v661 = vpop.f32.mrf.mxu0
  %v662 = vadd.f32 0.0, %v661
  %v663 = vpop.f32.mrf.mxu0
  %v664 = vadd.f32 0.0, %v663
  %665 = vmatmul.bf16.gmra.mxu0 %v404
  %v666 = vpop.f32.mrf.mxu0
  %v667 = vadd.f32 0.0, %v666
  %v668 = vpop.f32.mrf.mxu0
  %v669 = vadd.f32 0.0, %v668
  %670 = vmatmul.bf16.gmra.mxu0 %v407
  %v671 = vpop.f32.mrf.mxu0
  %v672 = vadd.f32 0.0, %v671
  %v673 = vpop.f32.mrf.mxu0
  %v674 = vadd.f32 0.0, %v673
  %675 = vdwg.mxu0
  %v676 = vadd.f32 %v112, %v419
  %v677 = vadd.f32 %v113, %v508
  %v678 = vadd.f32 %v114, %v597
  %v679 = vadd.f32 %v115, %v421
  %v680 = vadd.f32 %v116, %v510
  %v681 = vadd.f32 %v117, %v599
  %v682 = vadd.f32 %v118, %v424
  %v683 = vadd.f32 %v119, %v513
  %v684 = vadd.f32 %v120, %v602
  %v685 = vadd.f32 %v121, %v426
  %v686 = vadd.f32 %v122, %v515
  %v687 = vadd.f32 %v123, %v604
  %v688 = vadd.f32 %v124, %v429
  %v689 = vadd.f32 %v125, %v518
  %v690 = vadd.f32 %v126, %v607
  %v691 = vadd.f32 %v127, %v431
  %v692 = vadd.f32 %v128, %v520
  %v693 = vadd.f32 %v129, %v609
  %v694 = vadd.f32 %v130, %v434
  %v695 = vadd.f32 %v131, %v523
  %v696 = vadd.f32 %v132, %v612
  %v697 = vadd.f32 %v133, %v436
  %v698 = vadd.f32 %v134, %v525
  %v699 = vadd.f32 %v135, %v614
  %v700 = vadd.f32 %v136, %v439
  %v701 = vadd.f32 %v137, %v528
  %v702 = vadd.f32 %v138, %v617
  %v703 = vadd.f32 %v139, %v441
  %v704 = vadd.f32 %v140, %v530
  %v705 = vadd.f32 %v141, %v619
  %v706 = vadd.f32 %v142, %v444
  %v707 = vadd.f32 %v143, %v533
  %v708 = vadd.f32 %v144, %v622
  %v709 = vadd.f32 %v145, %v446
  %v710 = vadd.f32 %v146, %v535
  %v711 = vadd.f32 %v147, %v624
  %v712 = vadd.f32 %v148, %v449
  %v713 = vadd.f32 %v149, %v538
  %v714 = vadd.f32 %v150, %v627
  %v715 = vadd.f32 %v151, %v451
  %v716 = vadd.f32 %v152, %v540
  %v717 = vadd.f32 %v153, %v629
  %v718 = vadd.f32 %v154, %v454
  %v719 = vadd.f32 %v155, %v543
  %v720 = vadd.f32 %v156, %v632
  %v721 = vadd.f32 %v157, %v456
  %v722 = vadd.f32 %v158, %v545
  %v723 = vadd.f32 %v159, %v634
  %v724 = vadd.f32 %v160, %v459
  %v725 = vadd.f32 %v161, %v548
  %v726 = vadd.f32 %v162, %v637
  %v727 = vadd.f32 %v163, %v461
  %v728 = vadd.f32 %v164, %v550
  %v729 = vadd.f32 %v165, %v639
  %v730 = vadd.f32 %v166, %v464
  %v731 = vadd.f32 %v167, %v553
  %v732 = vadd.f32 %v168, %v642
  %v733 = vadd.f32 %v169, %v466
  %v734 = vadd.f32 %v170, %v555
  %v735 = vadd.f32 %v171, %v644
  %v736 = vadd.f32 %v172, %v469
  %v737 = vadd.f32 %v173, %v558
  %v738 = vadd.f32 %v174, %v647
  %v739 = vadd.f32 %v175, %v471
  %v740 = vadd.f32 %v176, %v560
  %v741 = vadd.f32 %v177, %v649
  %v742 = vadd.f32 %v178, %v474
  %v743 = vadd.f32 %v179, %v563
  %v744 = vadd.f32 %v180, %v652
  %v745 = vadd.f32 %v181, %v476
  %v746 = vadd.f32 %v182, %v565
  %v747 = vadd.f32 %v183, %v654
  %v748 = vadd.f32 %v184, %v479
  %v749 = vadd.f32 %v185, %v568
  %v750 = vadd.f32 %v186, %v657
  %v751 = vadd.f32 %v187, %v481
  %v752 = vadd.f32 %v188, %v570
  %v753 = vadd.f32 %v189, %v659
  %v754 = vadd.f32 %v190, %v484
  %v755 = vadd.f32 %v191, %v573
  %v756 = vadd.f32 %v192, %v662
  %v757 = vadd.f32 %v193, %v486
  %v758 = vadd.f32 %v194, %v575
  %v759 = vadd.f32 %v195, %v664
  %v760 = vadd.f32 %v196, %v489
  %v761 = vadd.f32 %v197, %v578
  %v762 = vadd.f32 %v198, %v667
  %v763 = vadd.f32 %v199, %v491
  %v764 = vadd.f32 %v200, %v580
  %v765 = vadd.f32 %v201, %v669
  %v766 = vadd.f32 %v202, %v494
  %v767 = vadd.f32 %v203, %v583
  %v768 = vadd.f32 %v204, %v672
  %v769 = vadd.f32 %v205, %v496
  %v770 = vadd.f32 %v206, %v585
  %v771 = vadd.f32 %v207, %v674
  %772 = vst [vmem:[#allocation2] sm:$0xff] %v676
  %773 = vst [vmem:[#allocation2 + $0x8] sm:$0xff] %v677
  %774 = vst [vmem:[#allocation2 + $0x10] sm:$0xff] %v678
  %775 = vst [vmem:[#allocation2 + $0x18] sm:$0xff] %v679
  %776 = vst [vmem:[#allocation2 + $0x20] sm:$0xff] %v680
  %777 = vst [vmem:[#allocation2 + $0x28] sm:$0xff] %v681
  %778 = vst [vmem:[#allocation2 + $0x30] sm:$0xff] %v682
  %779 = vst [vmem:[#allocation2 + $0x38] sm:$0xff] %v683
  %780 = vst [vmem:[#allocation2 + $0x40] sm:$0xff] %v684
  %781 = vst [vmem:[#allocation2 + $0x48] sm:$0xff] %v685
  %782 = vst [vmem:[#allocation2 + $0x50] sm:$0xff] %v686
  %783 = vst [vmem:[#allocation2 + $0x58] sm:$0xff] %v687
  %784 = vst [vmem:[#allocation2 + $0x60] sm:$0xff] %v688
  %785 = vst [vmem:[#allocation2 + $0x68] sm:$0xff] %v689
  %786 = vst [vmem:[#allocation2 + $0x70] sm:$0xff] %v690
  %787 = vst [vmem:[#allocation2 + $0x78] sm:$0xff] %v691
  %788 = vst [vmem:[#allocation2 + $0x80] sm:$0xff] %v692
  %789 = vst [vmem:[#allocation2 + $0x88] sm:$0xff] %v693
  %790 = vst [vmem:[#allocation2 + $0x90] sm:$0xff] %v694
  %791 = vst [vmem:[#allocation2 + $0x98] sm:$0xff] %v695
  %792 = vst [vmem:[#allocation2 + $0xa0] sm:$0xff] %v696
  %793 = vst [vmem:[#allocation2 + $0xa8] sm:$0xff] %v697
  %794 = vst [vmem:[#allocation2 + $0xb0] sm:$0xff] %v698
  %795 = vst [vmem:[#allocation2 + $0xb8] sm:$0xff] %v699
  %796 = vst [vmem:[#allocation2 + $0xc0] sm:$0xff] %v700
  %797 = vst [vmem:[#allocation2 + $0xc8] sm:$0xff] %v701
  %798 = vst [vmem:[#allocation2 + $0xd0] sm:$0xff] %v702
  %799 = vst [vmem:[#allocation2 + $0xd8] sm:$0xff] %v703
  %800 = vst [vmem:[#allocation2 + $0xe0] sm:$0xff] %v704
  %801 = vst [vmem:[#allocation2 + $0xe8] sm:$0xff] %v705
  %802 = vst [vmem:[#allocation2 + $0xf0] sm:$0xff] %v706
  %803 = vst [vmem:[#allocation2 + $0xf8] sm:$0xff] %v707
  %804 = vst [vmem:[#allocation2 + $0x100] sm:$0xff] %v708
  %805 = vst [vmem:[#allocation2 + $0x108] sm:$0xff] %v709
  %806 = vst [vmem:[#allocation2 + $0x110] sm:$0xff] %v710
  %807 = vst [vmem:[#allocation2 + $0x118] sm:$0xff] %v711
  %808 = vst [vmem:[#allocation2 + $0x120] sm:$0xff] %v712
  %809 = vst [vmem:[#allocation2 + $0x128] sm:$0xff] %v713
  %810 = vst [vmem:[#allocation2 + $0x130] sm:$0xff] %v714
  %811 = vst [vmem:[#allocation2 + $0x138] sm:$0xff] %v715
  %812 = vst [vmem:[#allocation2 + $0x140] sm:$0xff] %v716
  %813 = vst [vmem:[#allocation2 + $0x148] sm:$0xff] %v717
  %814 = vst [vmem:[#allocation2 + $0x150] sm:$0xff] %v718
  %815 = vst [vmem:[#allocation2 + $0x158] sm:$0xff] %v719
  %816 = vst [vmem:[#allocation2 + $0x160] sm:$0xff] %v720
  %817 = vst [vmem:[#allocation2 + $0x168] sm:$0xff] %v721
  %818 = vst [vmem:[#allocation2 + $0x170] sm:$0xff] %v722
  %819 = vst [vmem:[#allocation2 + $0x178] sm:$0xff] %v723
  %820 = vst [vmem:[#allocation2 + $0x180] sm:$0xff] %v724
  %821 = vst [vmem:[#allocation2 + $0x188] sm:$0xff] %v725
  %822 = vst [vmem:[#allocation2 + $0x190] sm:$0xff] %v726
  %823 = vst [vmem:[#allocation2 + $0x198] sm:$0xff] %v727
  %824 = vst [vmem:[#allocation2 + $0x1a0] sm:$0xff] %v728
  %825 = vst [vmem:[#allocation2 + $0x1a8] sm:$0xff] %v729
  %826 = vst [vmem:[#allocation2 + $0x1b0] sm:$0xff] %v730
  %827 = vst [vmem:[#allocation2 + $0x1b8] sm:$0xff] %v731
  %828 = vst [vmem:[#allocation2 + $0x1c0] sm:$0xff] %v732
  %829 = vst [vmem:[#allocation2 + $0x1c8] sm:$0xff] %v733
  %830 = vst [vmem:[#allocation2 + $0x1d0] sm:$0xff] %v734
  %831 = vst [vmem:[#allocation2 + $0x1d8] sm:$0xff] %v735
  %832 = vst [vmem:[#allocation2 + $0x1e0] sm:$0xff] %v736
  %833 = vst [vmem:[#allocation2 + $0x1e8] sm:$0xff] %v737
  %834 = vst [vmem:[#allocation2 + $0x1f0] sm:$0xff] %v738
  %835 = vst [vmem:[#allocation2 + $0x1f8] sm:$0xff] %v739
  %836 = vst [vmem:[#allocation2 + $0x200] sm:$0xff] %v740
  %837 = vst [vmem:[#allocation2 + $0x208] sm:$0xff] %v741
  %838 = vst [vmem:[#allocation2 + $0x210] sm:$0xff] %v742
  %839 = vst [vmem:[#allocation2 + $0x218] sm:$0xff] %v743
  %840 = vst [vmem:[#allocation2 + $0x220] sm:$0xff] %v744
  %841 = vst [vmem:[#allocation2 + $0x228] sm:$0xff] %v745
  %842 = vst [vmem:[#allocation2 + $0x230] sm:$0xff] %v746
  %843 = vst [vmem:[#allocation2 + $0x238] sm:$0xff] %v747
  %844 = vst [vmem:[#allocation2 + $0x240] sm:$0xff] %v748
  %845 = vst [vmem:[#allocation2 + $0x248] sm:$0xff] %v749
  %846 = vst [vmem:[#allocation2 + $0x250] sm:$0xff] %v750
  %847 = vst [vmem:[#allocation2 + $0x258] sm:$0xff] %v751
  %848 = vst [vmem:[#allocation2 + $0x260] sm:$0xff] %v752
  %849 = vst [vmem:[#allocation2 + $0x268] sm:$0xff] %v753
  %850 = vst [vmem:[#allocation2 + $0x270] sm:$0xff] %v754
  %851 = vst [vmem:[#allocation2 + $0x278] sm:$0xff] %v755
  %852 = vst [vmem:[#allocation2 + $0x280] sm:$0xff] %v756
  %853 = vst [vmem:[#allocation2 + $0x288] sm:$0xff] %v757
  %854 = vst [vmem:[#allocation2 + $0x290] sm:$0xff] %v758
  %855 = vst [vmem:[#allocation2 + $0x298] sm:$0xff] %v759
  %856 = vst [vmem:[#allocation2 + $0x2a0] sm:$0xff] %v760
  %857 = vst [vmem:[#allocation2 + $0x2a8] sm:$0xff] %v761
  %858 = vst [vmem:[#allocation2 + $0x2b0] sm:$0xff] %v762
  %859 = vst [vmem:[#allocation2 + $0x2b8] sm:$0xff] %v763
  %860 = vst [vmem:[#allocation2 + $0x2c0] sm:$0xff] %v764
  %861 = vst [vmem:[#allocation2 + $0x2c8] sm:$0xff] %v765
  %862 = vst [vmem:[#allocation2 + $0x2d0] sm:$0xff] %v766
  %863 = vst [vmem:[#allocation2 + $0x2d8] sm:$0xff] %v767
  %864 = vst [vmem:[#allocation2 + $0x2e0] sm:$0xff] %v768
  %865 = vst [vmem:[#allocation2 + $0x2e8] sm:$0xff] %v769
  %866 = vst [vmem:[#allocation2 + $0x2f0] sm:$0xff] %v770
  %867 = vst [vmem:[#allocation2 + $0x2f8] sm:$0xff] %v771
  // Predicated region
  $region14: #{attention_forward.3} parent=0 // pred_check
    %p868 = pneg %p12
  $region15: #{attention_forward.3} parent=0 // pred_check_branch
    %870 = sbr.rel (%p868) target = $region17
  $region16: #{attention_forward.3} parent=0 // pred_region
    %v871 = vld [vmem:[#allocation2] sm:$0xff]
    %v872 = vld [vmem:[#allocation2 + $0x8] sm:$0xff]
    %v873 = vld [vmem:[#allocation2 + $0x10] sm:$0xff]
    %v874 = vld [vmem:[#allocation2 + $0x18] sm:$0xff]
    %v875 = vld [vmem:[#allocation2 + $0x20] sm:$0xff]
    %v876 = vld [vmem:[#allocation2 + $0x28] sm:$0xff]
    %v877 = vld [vmem:[#allocation2 + $0x30] sm:$0xff]
    %v878 = vld [vmem:[#allocation2 + $0x38] sm:$0xff]
    %v879 = vld [vmem:[#allocation2 + $0x40] sm:$0xff]
    %v880 = vld [vmem:[#allocation2 + $0x48] sm:$0xff]
    %v881 = vld [vmem:[#allocation2 + $0x50] sm:$0xff]
    %v882 = vld [vmem:[#allocation2 + $0x58] sm:$0xff]
    %v883 = vld [vmem:[#allocation2 + $0x60] sm:$0xff]
    %v884 = vld [vmem:[#allocation2 + $0x68] sm:$0xff]
    %v885 = vld [vmem:[#allocation2 + $0x70] sm:$0xff]
    %v886 = vld [vmem:[#allocation2 + $0x78] sm:$0xff]
    %v887 = vld [vmem:[#allocation2 + $0x80] sm:$0xff]
    %v888 = vld [vmem:[#allocation2 + $0x88] sm:$0xff]
    %v889 = vld [vmem:[#allocation2 + $0x90] sm:$0xff]
    %v890 = vld [vmem:[#allocation2 + $0x98] sm:$0xff]
    %v891 = vld [vmem:[#allocation2 + $0xa0] sm:$0xff]
    %v892 = vld [vmem:[#allocation2 + $0xa8] sm:$0xff]
    %v893 = vld [vmem:[#allocation2 + $0xb0] sm:$0xff]
    %v894 = vld [vmem:[#allocation2 + $0xb8] sm:$0xff]
    %v895 = vld [vmem:[#allocation2 + $0xc0] sm:$0xff]
    %v896 = vld [vmem:[#allocation2 + $0xc8] sm:$0xff]
    %v897 = vld [vmem:[#allocation2 + $0xd0] sm:$0xff]
    %v898 = vld [vmem:[#allocation2 + $0xd8] sm:$0xff]
    %v899 = vld [vmem:[#allocation2 + $0xe0] sm:$0xff]
    %v900 = vld [vmem:[#allocation2 + $0xe8] sm:$0xff]
    %v901 = vld [vmem:[#allocation2 + $0xf0] sm:$0xff]
    %v902 = vld [vmem:[#allocation2 + $0xf8] sm:$0xff]
    %v903 = vld [vmem:[#allocation2 + $0x100] sm:$0xff]
    %v904 = vld [vmem:[#allocation2 + $0x108] sm:$0xff]
    %v905 = vld [vmem:[#allocation2 + $0x110] sm:$0xff]
    %v906 = vld [vmem:[#allocation2 + $0x118] sm:$0xff]
    %v907 = vld [vmem:[#allocation2 + $0x120] sm:$0xff]
    %v908 = vld [vmem:[#allocation2 + $0x128] sm:$0xff]
    %v909 = vld [vmem:[#allocation2 + $0x130] sm:$0xff]
    %v910 = vld [vmem:[#allocation2 + $0x138] sm:$0xff]
    %v911 = vld [vmem:[#allocation2 + $0x140] sm:$0xff]
    %v912 = vld [vmem:[#allocation2 + $0x148] sm:$0xff]
    %v913 = vld [vmem:[#allocation2 + $0x150] sm:$0xff]
    %v914 = vld [vmem:[#allocation2 + $0x158] sm:$0xff]
    %v915 = vld [vmem:[#allocation2 + $0x160] sm:$0xff]
    %v916 = vld [vmem:[#allocation2 + $0x168] sm:$0xff]
    %v917 = vld [vmem:[#allocation2 + $0x170] sm:$0xff]
    %v918 = vld [vmem:[#allocation2 + $0x178] sm:$0xff]
    %v919 = vld [vmem:[#allocation2 + $0x180] sm:$0xff]
    %v920 = vld [vmem:[#allocation2 + $0x188] sm:$0xff]
    %v921 = vld [vmem:[#allocation2 + $0x190] sm:$0xff]
    %v922 = vld [vmem:[#allocation2 + $0x198] sm:$0xff]
    %v923 = vld [vmem:[#allocation2 + $0x1a0] sm:$0xff]
    %v924 = vld [vmem:[#allocation2 + $0x1a8] sm:$0xff]
    %v925 = vld [vmem:[#allocation2 + $0x1b0] sm:$0xff]
    %v926 = vld [vmem:[#allocation2 + $0x1b8] sm:$0xff]
    %v927 = vld [vmem:[#allocation2 + $0x1c0] sm:$0xff]
    %v928 = vld [vmem:[#allocation2 + $0x1c8] sm:$0xff]
    %v929 = vld [vmem:[#allocation2 + $0x1d0] sm:$0xff]
    %v930 = vld [vmem:[#allocation2 + $0x1d8] sm:$0xff]
    %v931 = vld [vmem:[#allocation2 + $0x1e0] sm:$0xff]
    %v932 = vld [vmem:[#allocation2 + $0x1e8] sm:$0xff]
    %v933 = vld [vmem:[#allocation2 + $0x1f0] sm:$0xff]
    %v934 = vld [vmem:[#allocation2 + $0x1f8] sm:$0xff]
    %v935 = vld [vmem:[#allocation2 + $0x200] sm:$0xff]
    %v936 = vld [vmem:[#allocation2 + $0x208] sm:$0xff]
    %v937 = vld [vmem:[#allocation2 + $0x210] sm:$0xff]
    %v938 = vld [vmem:[#allocation2 + $0x218] sm:$0xff]
    %v939 = vld [vmem:[#allocation2 + $0x220] sm:$0xff]
    %v940 = vld [vmem:[#allocation2 + $0x228] sm:$0xff]
    %v941 = vld [vmem:[#allocation2 + $0x230] sm:$0xff]
    %v942 = vld [vmem:[#allocation2 + $0x238] sm:$0xff]
    %v943 = vld [vmem:[#allocation2 + $0x240] sm:$0xff]
    %v944 = vld [vmem:[#allocation2 + $0x248] sm:$0xff]
    %v945 = vld [vmem:[#allocation2 + $0x250] sm:$0xff]
    %v946 = vld [vmem:[#allocation2 + $0x258] sm:$0xff]
    %v947 = vld [vmem:[#allocation2 + $0x260] sm:$0xff]
    %v948 = vld [vmem:[#allocation2 + $0x268] sm:$0xff]
    %v949 = vld [vmem:[#allocation2 + $0x270] sm:$0xff]
    %v950 = vld [vmem:[#allocation2 + $0x278] sm:$0xff]
    %v951 = vld [vmem:[#allocation2 + $0x280] sm:$0xff]
    %v952 = vld [vmem:[#allocation2 + $0x288] sm:$0xff]
    %v953 = vld [vmem:[#allocation2 + $0x290] sm:$0xff]
    %v954 = vld [vmem:[#allocation2 + $0x298] sm:$0xff]
    %v955 = vld [vmem:[#allocation2 + $0x2a0] sm:$0xff]
    %v956 = vld [vmem:[#allocation2 + $0x2a8] sm:$0xff]
    %v957 = vld [vmem:[#allocation2 + $0x2b0] sm:$0xff]
    %v958 = vld [vmem:[#allocation2 + $0x2b8] sm:$0xff]
    %v959 = vld [vmem:[#allocation2 + $0x2c0] sm:$0xff]
    %v960 = vld [vmem:[#allocation2 + $0x2c8] sm:$0xff]
    %v961 = vld [vmem:[#allocation2 + $0x2d0] sm:$0xff]
    %v962 = vld [vmem:[#allocation2 + $0x2d8] sm:$0xff]
    %v963 = vld [vmem:[#allocation2 + $0x2e0] sm:$0xff]
    %v964 = vld [vmem:[#allocation2 + $0x2e8] sm:$0xff]
    %v965 = vld [vmem:[#allocation2 + $0x2f0] sm:$0xff]
    %v966 = vld [vmem:[#allocation2 + $0x2f8] sm:$0xff]
    %v967 = vpack.c.bf16 %v872, %v871
    %v968 = vpack.c.bf16 %v873, %v873
    %v969 = vpack.c.bf16 %v875, %v874
    %v970 = vpack.c.bf16 %v876, %v876
    %v971 = vpack.c.bf16 %v878, %v877
    %v972 = vpack.c.bf16 %v879, %v879
    %v973 = vpack.c.bf16 %v881, %v880
    %v974 = vpack.c.bf16 %v882, %v882
    %v975 = vpack.c.bf16 %v884, %v883
    %v976 = vpack.c.bf16 %v885, %v885
    %v977 = vpack.c.bf16 %v887, %v886
    %v978 = vpack.c.bf16 %v888, %v888
    %v979 = vpack.c.bf16 %v890, %v889
    %v980 = vpack.c.bf16 %v891, %v891
    %v981 = vpack.c.bf16 %v893, %v892
    %v982 = vpack.c.bf16 %v894, %v894
    %v983 = vpack.c.bf16 %v896, %v895
    %v984 = vpack.c.bf16 %v897, %v897
    %v985 = vpack.c.bf16 %v899, %v898
    %v986 = vpack.c.bf16 %v900, %v900
    %v987 = vpack.c.bf16 %v902, %v901
    %v988 = vpack.c.bf16 %v903, %v903
    %v989 = vpack.c.bf16 %v905, %v904
    %v990 = vpack.c.bf16 %v906, %v906
    %v991 = vpack.c.bf16 %v908, %v907
    %v992 = vpack.c.bf16 %v909, %v909
    %v993 = vpack.c.bf16 %v911, %v910
    %v994 = vpack.c.bf16 %v912, %v912
    %v995 = vpack.c.bf16 %v914, %v913
    %v996 = vpack.c.bf16 %v915, %v915
    %v997 = vpack.c.bf16 %v917, %v916
    %v998 = vpack.c.bf16 %v918, %v918
    %v999 = vpack.c.bf16 %v920, %v919
    %v1000 = vpack.c.bf16 %v921, %v921
    %v1001 = vpack.c.bf16 %v923, %v922
    %v1002 = vpack.c.bf16 %v924, %v924
    %v1003 = vpack.c.bf16 %v926, %v925
    %v1004 = vpack.c.bf16 %v927, %v927
    %v1005 = vpack.c.bf16 %v929, %v928
    %v1006 = vpack.c.bf16 %v930, %v930
    %v1007 = vpack.c.bf16 %v932, %v931
    %v1008 = vpack.c.bf16 %v933, %v933
    %v1009 = vpack.c.bf16 %v935, %v934
    %v1010 = vpack.c.bf16 %v936, %v936
    %v1011 = vpack.c.bf16 %v938, %v937
    %v1012 = vpack.c.bf16 %v939, %v939
    %v1013 = vpack.c.bf16 %v941, %v940
    %v1014 = vpack.c.bf16 %v942, %v942
    %v1015 = vpack.c.bf16 %v944, %v943
    %v1016 = vpack.c.bf16 %v945, %v945
    %v1017 = vpack.c.bf16 %v947, %v946
    %v1018 = vpack.c.bf16 %v948, %v948
    %v1019 = vpack.c.bf16 %v950, %v949
    %v1020 = vpack.c.bf16 %v951, %v951
    %v1021 = vpack.c.bf16 %v953, %v952
    %v1022 = vpack.c.bf16 %v954, %v954
    %v1023 = vpack.c.bf16 %v956, %v955
    %v1024 = vpack.c.bf16 %v957, %v957
    %v1025 = vpack.c.bf16 %v959, %v958
    %v1026 = vpack.c.bf16 %v960, %v960
    %v1027 = vpack.c.bf16 %v962, %v961
    %v1028 = vpack.c.bf16 %v963, %v963
    %v1029 = vpack.c.bf16 %v965, %v964
    %v1030 = vpack.c.bf16 %v966, %v966
    %1031 = vst [vmem:[%s2] sm:$0xff] %v967
    %1032 = vst [vmem:[%s2 + $0x8] sm:$0xf] %v968
    %1033 = vst [vmem:[%s2 + $0xc] sm:$0xff] %v969
    %1034 = vst [vmem:[%s2 + $0x14] sm:$0xf] %v970
    %1035 = vst [vmem:[%s2 + $0x18] sm:$0xff] %v971
    %1036 = vst [vmem:[%s2 + $0x20] sm:$0xf] %v972
    %1037 = vst [vmem:[%s2 + $0x24] sm:$0xff] %v973
    %1038 = vst [vmem:[%s2 + $0x2c] sm:$0xf] %v974
    %1039 = vst [vmem:[%s2 + $0x30] sm:$0xff] %v975
    %1040 = vst [vmem:[%s2 + $0x38] sm:$0xf] %v976
    %1041 = vst [vmem:[%s2 + $0x3c] sm:$0xff] %v977
    %1042 = vst [vmem:[%s2 + $0x44] sm:$0xf] %v978
    %1043 = vst [vmem:[%s2 + $0x48] sm:$0xff] %v979
    %1044 = vst [vmem:[%s2 + $0x50] sm:$0xf] %v980
    %1045 = vst [vmem:[%s2 + $0x54] sm:$0xff] %v981
    %1046 = vst [vmem:[%s2 + $0x5c] sm:$0xf] %v982
    %1047 = vst [vmem:[%s2 + $0x60] sm:$0xff] %v983
    %1048 = vst [vmem:[%s2 + $0x68] sm:$0xf] %v984
    %1049 = vst [vmem:[%s2 + $0x6c] sm:$0xff] %v985
    %1050 = vst [vmem:[%s2 + $0x74] sm:$0xf] %v986
    %1051 = vst [vmem:[%s2 + $0x78] sm:$0xff] %v987
    %1052 = vst [vmem:[%s2 + $0x80] sm:$0xf] %v988
    %1053 = vst [vmem:[%s2 + $0x84] sm:$0xff] %v989
    %1054 = vst [vmem:[%s2 + $0x8c] sm:$0xf] %v990
    %1055 = vst [vmem:[%s2 + $0x90] sm:$0xff] %v991
    %1056 = vst [vmem:[%s2 + $0x98] sm:$0xf] %v992
    %1057 = vst [vmem:[%s2 + $0x9c] sm:$0xff] %v993
    %1058 = vst [vmem:[%s2 + $0xa4] sm:$0xf] %v994
    %1059 = vst [vmem:[%s2 + $0xa8] sm:$0xff] %v995
    %1060 = vst [vmem:[%s2 + $0xb0] sm:$0xf] %v996
    %1061 = vst [vmem:[%s2 + $0xb4] sm:$0xff] %v997
    %1062 = vst [vmem:[%s2 + $0xbc] sm:$0xf] %v998
    %1063 = vst [vmem:[%s2 + $0xc0] sm:$0xff] %v999
    %1064 = vst [vmem:[%s2 + $0xc8] sm:$0xf] %v1000
    %1065 = vst [vmem:[%s2 + $0xcc] sm:$0xff] %v1001
    %1066 = vst [vmem:[%s2 + $0xd4] sm:$0xf] %v1002
    %1067 = vst [vmem:[%s2 + $0xd8] sm:$0xff] %v1003
    %1068 = vst [vmem:[%s2 + $0xe0] sm:$0xf] %v1004
    %1069 = vst [vmem:[%s2 + $0xe4] sm:$0xff] %v1005
    %1070 = vst [vmem:[%s2 + $0xec] sm:$0xf] %v1006
    %1071 = vst [vmem:[%s2 + $0xf0] sm:$0xff] %v1007
    %1072 = vst [vmem:[%s2 + $0xf8] sm:$0xf] %v1008
    %1073 = vst [vmem:[%s2 + $0xfc] sm:$0xff] %v1009
    %1074 = vst [vmem:[%s2 + $0x104] sm:$0xf] %v1010
    %1075 = vst [vmem:[%s2 + $0x108] sm:$0xff] %v1011
    %1076 = vst [vmem:[%s2 + $0x110] sm:$0xf] %v1012
    %1077 = vst [vmem:[%s2 + $0x114] sm:$0xff] %v1013
    %1078 = vst [vmem:[%s2 + $0x11c] sm:$0xf] %v1014
    %1079 = vst [vmem:[%s2 + $0x120] sm:$0xff] %v1015
    %1080 = vst [vmem:[%s2 + $0x128] sm:$0xf] %v1016
    %1081 = vst [vmem:[%s2 + $0x12c] sm:$0xff] %v1017
    %1082 = vst [vmem:[%s2 + $0x134] sm:$0xf] %v1018
    %1083 = vst [vmem:[%s2 + $0x138] sm:$0xff] %v1019
    %1084 = vst [vmem:[%s2 + $0x140] sm:$0xf] %v1020
    %1085 = vst [vmem:[%s2 + $0x144] sm:$0xff] %v1021
    %1086 = vst [vmem:[%s2 + $0x14c] sm:$0xf] %v1022
    %1087 = vst [vmem:[%s2 + $0x150] sm:$0xff] %v1023
    %1088 = vst [vmem:[%s2 + $0x158] sm:$0xf] %v1024
    %1089 = vst [vmem:[%s2 + $0x15c] sm:$0xff] %v1025
    %1090 = vst [vmem:[%s2 + $0x164] sm:$0xf] %v1026
    %1091 = vst [vmem:[%s2 + $0x168] sm:$0xff] %v1027
    %1092 = vst [vmem:[%s2 + $0x170] sm:$0xf] %v1028
    %1093 = vst [vmem:[%s2 + $0x174] sm:$0xff] %v1029
    %1094 = vst [vmem:[%s2 + $0x17c] sm:$0xf] %v1030
  $region17: #{attention_forward.3} parent=0 // pred_fallthru
    _
  // Predicated region
  $region18: #{attention_forward.3} parent=0 // pred_check
    _
  $region19: #{attention_forward.3} parent=0 // pred_check_branch
    %1096 = sbr.rel (0) target = $region21
  $region20: #{attention_forward.3} parent=0 // pred_region
    _
  $region21: #{attention_forward.3} parent=0 // pred_fallthru
    _
  // Predicated region
  $region22: #{attention_forward.3} parent=0 // pred_check
    _
  $region23: #{attention_forward.3} parent=0 // pred_check_branch
    %1098 = sbr.rel (0) target = $region25
  $region24: #{attention_forward.3} parent=0 // pred_region
    _
  $region25: #{attention_forward.3} parent=0 // pred_fallthru
    _

// kernel: attention_forward.4
$region0: #{attention_forward.4}
  #allocation0 [shape = 'u32[]', space=smem, size = 0x4, offset = 0x4, fixed_abs, tag = 'smem constant byte address 0x4 - core index']
  #allocation1 [shape = 'u32[72,128]{1,0:T(1,128)}', space=vmem, size = 0x9000, scoped, tag = 'internal scratch']
  #allocation2 [shape = 'f32[2,64,1]{2,1,0:T(8,128)}', space=vmem, size = 0x10000, scoped, tag = 'scratch operand']
  #allocation3 [shape = 'f32[2,64,1]{2,1,0:T(8,128)}', space=vmem, size = 0x10000, scoped, tag = 'scratch operand']
  #allocation4 [shape = 'f32[2,64,64]{2,1,0:T(8,128)}', space=vmem, size = 0x10000, scoped, tag = 'scratch operand']
  %s0 = inlined_call_operand.vmem [shape: bf16[2,128,384], index: 0, kind: input, shape index: {}, may-alias: {0,1,2}]
  %s1 = inlined_call_operand.vmem [shape: bf16[2,128,384], index: 1, kind: input, shape index: {}, may-alias: {0,1,2}]
  %s2 = inlined_call_operand.vmem [shape: bf16[2,128,384], index: 2, kind: input, shape index: {}, may-alias: {0,1,2}]
  %s3 = inlined_call_operand.vmem [shape: bf16[2,128,128], index: 3, kind: output, shape index: {}]
  %s4 = sld [smem:[#allocation0]]
  $region176: #{attention_forward.4} parent=0
    _
  %s6 = ssub.s32 1, %s4
  %s7 = scalar_select 0, %s6, %s4
  $region1: #{attention_forward.4} parent=0
    #allocation5 [shape = 'u8[32768]{0}', space=vmem, size = 0x8000, scoped, tag = 'input window, operand 0']
    #allocation6 [shape = 'u8[32768]{0}', space=vmem, size = 0x8000, scoped, tag = 'input window, operand 1']
    #allocation7 [shape = 'u8[32768]{0}', space=vmem, size = 0x8000, scoped, tag = 'input window, operand 2']
    loop: start=0, step=1, limit=10
    $region2: #{attention_forward.4} parent=1 // loop_pre_header
      _
    $region3: #{attention_forward.4} parent=1 // loop_header
      %s9 = sphi 0, %s13
      %p10 = scmp.ge.s32.totalorder %s9, 10
      %s16 = sphi 0, %s35
      %s17 = sphi 0, %s31
      %s18 = sphi 0, %s27
      %s19 = sphi 0, %s16
      %s20 = sphi 0, %s17
      %s21 = sphi 0, %s18
      %s22 = sphi 0, %s19
      %s23 = sphi 0, %s20
      %s24 = sphi 0, %s21
      %s40 = sphi 0, %s42
      %s43 = sphi 0, %s40
      %s44 = sphi 0, %s43
      %s60 = sphi 0, %s44
      %s68 = sphi 0, %s70
      %s71 = sphi 0, %s68
      %s72 = sphi 0, %s71
      %s88 = sphi 0, %s72
      %s96 = sphi 0, %s98
      %s99 = sphi 0, %s96
      %s100 = sphi 0, %s99
      %s116 = sphi 0, %s100
      %s124 = sphi 0, %s126
      %s127 = sphi 0, %s124
      %s128 = sphi 0, %s127
      %s144 = sphi 0, %s128
    $region4: #{attention_forward.4} parent=1 // loop_header_branch
      %12 = sbr.rel (%p10) target = $region8
    $region5: #{attention_forward.4} parent=1 // loop_body
      %s14 = ssub.s32 %s9, 1
      %s15 = ssub.s32 %s9, 2
      %s25 = sadd.s32 1, %s18
      %p26 = scmp.ge.s32.totalorder %s25, 2
      %s27 = scalar_select %p26, 0, %s25
      %s28 = sadd.s32 1, %s17
      %s29 = scalar_select %p26, %s28, %s17
      %p30 = scmp.ge.s32.totalorder %s29, 2
      %s31 = scalar_select %p30, 0, %s29
      %s32 = sadd.s32 1, %s16
      %s33 = scalar_select %p30, %s32, %s16
      %p34 = scmp.ge.s32.totalorder %s33, 2
      %s35 = scalar_select %p34, 0, %s33
      %s36 = ssub.s32 %s16, %s35
      %s37 = ssub.s32 %s17, %s31
      %s38 = sor.u32 %s36, %s37
      %p39 = scmp.eq.s32.totalorder %s38, 0
      %s41 = sadd.s32 %s40, 1
      %s42 = scalar_select %p39, %s40, %s41
      %p45 = pneg %p39
      %p46 = scmp.eq.s32.totalorder %s9, 7
      %p47 = por %p45, %p46
      %p48 = scmp.ne.s32.totalorder %s40, %s43
      %p49 = scmp.eq.s32.totalorder %s9, 0
      %p50 = por %p48, %p49
      %p51 = scmp.ne.s32.totalorder %s40, %s43
      %p52 = scmp.eq.s32.totalorder %s14, 7
      %p53 = por %p51, %p52
      %p54 = scmp.ne.s32.totalorder %s43, %s44
      %p55 = scmp.eq.s32.totalorder %s14, 0
      %p56 = por %p54, %p55
      %p57 = scmp.ne.s32.totalorder %s43, %s44
      %p58 = scmp.eq.s32.totalorder %s15, 7
      %p59 = por %p57, %p58
      %p61 = scmp.ne.s32.totalorder %s44, %s60
      %p62 = scmp.eq.s32.totalorder %s15, 0
      %p63 = por %p61, %p62
      %s64 = ssub.s32 %s16, %s35
      %s65 = ssub.s32 %s18, %s27
      %s66 = sor.u32 %s64, %s65
      %p67 = scmp.eq.s32.totalorder %s66, 0
      %s69 = sadd.s32 %s68, 1
      %s70 = scalar_select %p67, %s68, %s69
      %p73 = pneg %p67
      %p74 = scmp.eq.s32.totalorder %s9, 7
      %p75 = por %p73, %p74
      %p76 = scmp.ne.s32.totalorder %s68, %s71
      %p77 = scmp.eq.s32.totalorder %s9, 0
      %p78 = por %p76, %p77
      %p79 = scmp.ne.s32.totalorder %s68, %s71
      %p80 = scmp.eq.s32.totalorder %s14, 7
      %p81 = por %p79, %p80
      %p82 = scmp.ne.s32.totalorder %s71, %s72
      %p83 = scmp.eq.s32.totalorder %s14, 0
      %p84 = por %p82, %p83
      %p85 = scmp.ne.s32.totalorder %s71, %s72
      %p86 = scmp.eq.s32.totalorder %s15, 7
      %p87 = por %p85, %p86
      %p89 = scmp.ne.s32.totalorder %s72, %s88
      %p90 = scmp.eq.s32.totalorder %s15, 0
      %p91 = por %p89, %p90
      %s92 = ssub.s32 %s16, %s35
      %s93 = ssub.s32 %s18, %s27
      %s94 = sor.u32 %s92, %s93
      %p95 = scmp.eq.s32.totalorder %s94, 0
      %s97 = sadd.s32 %s96, 1
      %s98 = scalar_select %p95, %s96, %s97
      %p101 = pneg %p95
      %p102 = scmp.eq.s32.totalorder %s9, 7
      %p103 = por %p101, %p102
      %p104 = scmp.ne.s32.totalorder %s96, %s99
      %p105 = scmp.eq.s32.totalorder %s9, 0
      %p106 = por %p104, %p105
      %p107 = scmp.ne.s32.totalorder %s96, %s99
      %p108 = scmp.eq.s32.totalorder %s14, 7
      %p109 = por %p107, %p108
      %p110 = scmp.ne.s32.totalorder %s99, %s100
      %p111 = scmp.eq.s32.totalorder %s14, 0
      %p112 = por %p110, %p111
      %p113 = scmp.ne.s32.totalorder %s99, %s100
      %p114 = scmp.eq.s32.totalorder %s15, 7
      %p115 = por %p113, %p114
      %p117 = scmp.ne.s32.totalorder %s100, %s116
      %p118 = scmp.eq.s32.totalorder %s15, 0
      %p119 = por %p117, %p118
      %s120 = ssub.s32 %s16, %s35
      %s121 = ssub.s32 %s17, %s31
      %s122 = sor.u32 %s120, %s121
      %p123 = scmp.eq.s32.totalorder %s122, 0
      %s125 = sadd.s32 %s124, 1
      %s126 = scalar_select %p123, %s124, %s125
      %p129 = pneg %p123
      %p130 = scmp.eq.s32.totalorder %s9, 7
      %p131 = por %p129, %p130
      %p132 = scmp.ne.s32.totalorder %s124, %s127
      %p133 = scmp.eq.s32.totalorder %s9, 0
      %p134 = por %p132, %p133
      %p135 = scmp.ne.s32.totalorder %s124, %s127
      %p136 = scmp.eq.s32.totalorder %s14, 7
      %p137 = por %p135, %p136
      %p138 = scmp.ne.s32.totalorder %s127, %s128
      %p139 = scmp.eq.s32.totalorder %s14, 0
      %p140 = por %p138, %p139
      %p141 = scmp.ne.s32.totalorder %s127, %s128
      %p142 = scmp.eq.s32.totalorder %s15, 7
      %p143 = por %p141, %p142
      %p145 = scmp.ne.s32.totalorder %s128, %s144
      %p146 = scmp.eq.s32.totalorder %s15, 0
      %p147 = por %p145, %p146
      %p148 = scmp.le.s32.totalorder 1, %s9
      %p149 = scmp.lt.s32.totalorder %s9, 9
      %p150 = pnand %p148, %p149
      %p151 = pneg %p150
      // Predicated region
      $region9: #{attention_forward.4} parent=5 // pred_check
        _
      $region10: #{attention_forward.4} parent=5 // pred_check_branch
        %153 = sbr.rel (%p150) target = $region12
      $region11: #{attention_forward.4} parent=5 // pred_region
        %s154 = ssub.s32 %s9, 1
      $region12: #{attention_forward.4} parent=5 // pred_fallthru
        _
      %p155 = scmp.lt.s32.totalorder %s9, 8
      // Predicated region
      $region13: #{attention_forward.4} parent=5 // pred_check
        %p156 = pneg %p155
      $region14: #{attention_forward.4} parent=5 // pred_check_branch
        %158 = sbr.rel (%p156) target = $region16
      $region15: #{attention_forward.4} parent=5 // pred_region
        // Predicated region
        $region17: #{attention_forward.4} parent=15 // pred_check
          %p159 = pneg %p50
        $region18: #{attention_forward.4} parent=15 // pred_check_branch
          %161 = sbr.rel (%p159) target = $region20
        $region19: #{attention_forward.4} parent=15 // pred_region
          %s162 = sand.u32 %s40, 1
          %s163 = sand.u32 %s40, 1
          %s164 = smul.addr %s163, 32
          %s165 = scalar_lea.vmem [#allocation5], %s164
          %s166 = smul.u32 8, %s17
          %s167 = smul.addr %s166, 3
          %s168 = smul.addr %s16, 48
          %s169 = sadd.s32 %s167, %s168
          %s170 = smul.addr %s169, 4
          %s171 = scalar_lea.vmem %s0, %s170
          // Predicated region
          $region21: #{attention_forward.4} parent=19 // pred_check
            _
          $region22: #{attention_forward.4} parent=19 // pred_check_branch
            %173 = sbr.rel (0) target = $region24
          $region23: #{attention_forward.4} parent=19 // pred_region
            // Predicated region
            $region25: #{attention_forward.4} parent=23 // pred_check
              _
            $region26: #{attention_forward.4} parent=23 // pred_check_branch
              %175 = sbr.rel target = $region28
            $region27: #{attention_forward.4} parent=23 // pred_region
              // Predicated region
              $region40: #{attention_forward.4} parent=27 // pred_check
                _
              $region41: #{attention_forward.4} parent=27 // pred_check_branch
                %205 = sbr.rel (0) target = $region43
              $region42: #{attention_forward.4} parent=27 // pred_region
                loop: start=0, step=1, limit=1
                $region44: #{attention_forward.4} parent=42 // loop_pre_header
                  _
                $region45: #{attention_forward.4} parent=42 // loop_header
                  %s207 = sphi 0, %s211
                  %p208 = scmp.ge.s32.totalorder %s207, 1
                  %s212 = sphi %s171, %s171
                  %s213 = sphi %s165, %s165
                $region46: #{attention_forward.4} parent=42 // loop_header_branch
                  %210 = sbr.rel (%p208) target = $region50
                $region47: #{attention_forward.4} parent=42 // loop_body
                  _
                $region48: #{attention_forward.4} parent=42 // loop_footer
                  %s211 = sadd.s32 1, %s207
                $region49: #{attention_forward.4} parent=42 // loop_footer_branch
                  %206 = sbr.rel target = $region45
                $region50: #{attention_forward.4} parent=42 // loop_exit
                  _
                %s215 = ssub.s32 16, 1
                loop: start=0, step=1, limit=1
                $region51: #{attention_forward.4} parent=42 // loop_pre_header
                  _
                $region52: #{attention_forward.4} parent=42 // loop_header
                  %s217 = sphi 0, %s221
                  %p218 = scmp.ge.s32.totalorder %s217, 1
                  %s222 = sphi %s171, %s171
                  %s223 = sphi %s165, %s165
                $region53: #{attention_forward.4} parent=42 // loop_header_branch
                  %220 = sbr.rel (%p218) target = $region57
                $region54: #{attention_forward.4} parent=42 // loop_body
                  %v224 = vld [vmem:[%s222] sm:%s215]
                  %225 = vst [vmem:[%s223] sm:%s215] %v224
                  %v226 = vld [vmem:[%s222 + $0xc] sm:%s215]
                  %227 = vst [vmem:[%s223 + $0x4] sm:%s215] %v226
                  %v228 = vld [vmem:[%s222 + $0x18] sm:%s215]
                  %229 = vst [vmem:[%s223 + $0x8] sm:%s215] %v228
                  %v230 = vld [vmem:[%s222 + $0x24] sm:%s215]
                  %231 = vst [vmem:[%s223 + $0xc] sm:%s215] %v230
                  %v232 = vld [vmem:[%s222 + $0x30] sm:%s215]
                  %233 = vst [vmem:[%s223 + $0x10] sm:%s215] %v232
                  %v234 = vld [vmem:[%s222 + $0x3c] sm:%s215]
                  %235 = vst [vmem:[%s223 + $0x14] sm:%s215] %v234
                  %v236 = vld [vmem:[%s222 + $0x48] sm:%s215]
                  %237 = vst [vmem:[%s223 + $0x18] sm:%s215] %v236
                  %v238 = vld [vmem:[%s222 + $0x54] sm:%s215]
                  %239 = vst [vmem:[%s223 + $0x1c] sm:%s215] %v238
                $region55: #{attention_forward.4} parent=42 // loop_footer
                  %s221 = sadd.s32 1, %s217
                $region56: #{attention_forward.4} parent=42 // loop_footer_branch
                  %216 = sbr.rel target = $region52
                $region57: #{attention_forward.4} parent=42 // loop_exit
                  _
              $region43: #{attention_forward.4} parent=27 // pred_fallthru
                _
            $region28: #{attention_forward.4} parent=23 // pred_fallthru
              _
            // Predicated region
            $region29: #{attention_forward.4} parent=23 // pred_check
              _
            $region30: #{attention_forward.4} parent=23 // pred_check_branch
              %177 = sbr.rel (0) target = $region32
            $region31: #{attention_forward.4} parent=23 // pred_region
              %s179 = ssub.s32 16, 1
              loop: start=0, step=1, limit=1
              $region33: #{attention_forward.4} parent=31 // loop_pre_header
                _
              $region34: #{attention_forward.4} parent=31 // loop_header
                %s181 = sphi 0, %s185
                %p182 = scmp.ge.s32.totalorder %s181, 1
                %s186 = sphi %s171, %s171
                %s187 = sphi %s165, %s165
              $region35: #{attention_forward.4} parent=31 // loop_header_branch
                %184 = sbr.rel (%p182) target = $region39
              $region36: #{attention_forward.4} parent=31 // loop_body
                %v188 = vld [vmem:[%s186] sm:%s179]
                %189 = vst [vmem:[%s187] sm:%s179] %v188
                %v190 = vld [vmem:[%s186 + $0xc] sm:%s179]
                %191 = vst [vmem:[%s187 + $0x4] sm:%s179] %v190
                %v192 = vld [vmem:[%s186 + $0x18] sm:%s179]
                %193 = vst [vmem:[%s187 + $0x8] sm:%s179] %v192
                %v194 = vld [vmem:[%s186 + $0x24] sm:%s179]
                %195 = vst [vmem:[%s187 + $0xc] sm:%s179] %v194
                %v196 = vld [vmem:[%s186 + $0x30] sm:%s179]
                %197 = vst [vmem:[%s187 + $0x10] sm:%s179] %v196
                %v198 = vld [vmem:[%s186 + $0x3c] sm:%s179]
                %199 = vst [vmem:[%s187 + $0x14] sm:%s179] %v198
                %v200 = vld [vmem:[%s186 + $0x48] sm:%s179]
                %201 = vst [vmem:[%s187 + $0x18] sm:%s179] %v200
                %v202 = vld [vmem:[%s186 + $0x54] sm:%s179]
                %203 = vst [vmem:[%s187 + $0x1c] sm:%s179] %v202
              $region37: #{attention_forward.4} parent=31 // loop_footer
                %s185 = sadd.s32 1, %s181
              $region38: #{attention_forward.4} parent=31 // loop_footer_branch
                %180 = sbr.rel target = $region34
              $region39: #{attention_forward.4} parent=31 // loop_exit
                _
            $region32: #{attention_forward.4} parent=23 // pred_fallthru
              _
          $region24: #{attention_forward.4} parent=19 // pred_fallthru
            _
          %240 = vnop
        $region20: #{attention_forward.4} parent=15 // pred_fallthru
          _
        // Predicated region
        $region58: #{attention_forward.4} parent=15 // pred_check
          %p241 = pneg %p78
        $region59: #{attention_forward.4} parent=15 // pred_check_branch
          %243 = sbr.rel (%p241) target = $region61
        $region60: #{attention_forward.4} parent=15 // pred_region
          %s244 = sand.u32 %s68, 1
          %s245 = sand.u32 %s68, 1
          %s246 = smul.addr %s245, 32
          %s247 = scalar_lea.vmem [#allocation6], %s246
          %s248 = smul.u32 8, %s18
          %s249 = smul.addr %s248, 3
          %s250 = sadd.s32 1, %s249
          %s251 = smul.addr %s16, 48
          %s252 = sadd.s32 %s250, %s251
          %s253 = smul.addr %s252, 4
          %s254 = scalar_lea.vmem %s1, %s253
          // Predicated region
          $region62: #{attention_forward.4} parent=60 // pred_check
            _
          $region63: #{attention_forward.4} parent=60 // pred_check_branch
            %256 = sbr.rel (0) target = $region65
          $region64: #{attention_forward.4} parent=60 // pred_region
            // Predicated region
            $region66: #{attention_forward.4} parent=64 // pred_check
              _
            $region67: #{attention_forward.4} parent=64 // pred_check_branch
              %258 = sbr.rel target = $region69
            $region68: #{attention_forward.4} parent=64 // pred_region
              // Predicated region
              $region81: #{attention_forward.4} parent=68 // pred_check
                _
              $region82: #{attention_forward.4} parent=68 // pred_check_branch
                %288 = sbr.rel (0) target = $region84
              $region83: #{attention_forward.4} parent=68 // pred_region
                loop: start=0, step=1, limit=1
                $region85: #{attention_forward.4} parent=83 // loop_pre_header
                  _
                $region86: #{attention_forward.4} parent=83 // loop_header
                  %s290 = sphi 0, %s294
                  %p291 = scmp.ge.s32.totalorder %s290, 1
                  %s295 = sphi %s254, %s254
                  %s296 = sphi %s247, %s247
                $region87: #{attention_forward.4} parent=83 // loop_header_branch
                  %293 = sbr.rel (%p291) target = $region91
                $region88: #{attention_forward.4} parent=83 // loop_body
                  _
                $region89: #{attention_forward.4} parent=83 // loop_footer
                  %s294 = sadd.s32 1, %s290
                $region90: #{attention_forward.4} parent=83 // loop_footer_branch
                  %289 = sbr.rel target = $region86
                $region91: #{attention_forward.4} parent=83 // loop_exit
                  _
                %s298 = ssub.s32 16, 1
                loop: start=0, step=1, limit=1
                $region92: #{attention_forward.4} parent=83 // loop_pre_header
                  _
                $region93: #{attention_forward.4} parent=83 // loop_header
                  %s300 = sphi 0, %s304
                  %p301 = scmp.ge.s32.totalorder %s300, 1
                  %s305 = sphi %s254, %s254
                  %s306 = sphi %s247, %s247
                $region94: #{attention_forward.4} parent=83 // loop_header_branch
                  %303 = sbr.rel (%p301) target = $region98
                $region95: #{attention_forward.4} parent=83 // loop_body
                  %v307 = vld [vmem:[%s305] sm:%s298]
                  %308 = vst [vmem:[%s306] sm:%s298] %v307
                  %v309 = vld [vmem:[%s305 + $0xc] sm:%s298]
                  %310 = vst [vmem:[%s306 + $0x4] sm:%s298] %v309
                  %v311 = vld [vmem:[%s305 + $0x18] sm:%s298]
                  %312 = vst [vmem:[%s306 + $0x8] sm:%s298] %v311
                  %v313 = vld [vmem:[%s305 + $0x24] sm:%s298]
                  %314 = vst [vmem:[%s306 + $0xc] sm:%s298] %v313
                  %v315 = vld [vmem:[%s305 + $0x30] sm:%s298]
                  %316 = vst [vmem:[%s306 + $0x10] sm:%s298] %v315
                  %v317 = vld [vmem:[%s305 + $0x3c] sm:%s298]
                  %318 = vst [vmem:[%s306 + $0x14] sm:%s298] %v317
                  %v319 = vld [vmem:[%s305 + $0x48] sm:%s298]
                  %320 = vst [vmem:[%s306 + $0x18] sm:%s298] %v319
                  %v321 = vld [vmem:[%s305 + $0x54] sm:%s298]
                  %322 = vst [vmem:[%s306 + $0x1c] sm:%s298] %v321
                $region96: #{attention_forward.4} parent=83 // loop_footer
                  %s304 = sadd.s32 1, %s300
                $region97: #{attention_forward.4} parent=83 // loop_footer_branch
                  %299 = sbr.rel target = $region93
                $region98: #{attention_forward.4} parent=83 // loop_exit
                  _
              $region84: #{attention_forward.4} parent=68 // pred_fallthru
                _
            $region69: #{attention_forward.4} parent=64 // pred_fallthru
              _
            // Predicated region
            $region70: #{attention_forward.4} parent=64 // pred_check
              _
            $region71: #{attention_forward.4} parent=64 // pred_check_branch
              %260 = sbr.rel (0) target = $region73
            $region72: #{attention_forward.4} parent=64 // pred_region
              %s262 = ssub.s32 16, 1
              loop: start=0, step=1, limit=1
              $region74: #{attention_forward.4} parent=72 // loop_pre_header
                _
              $region75: #{attention_forward.4} parent=72 // loop_header
                %s264 = sphi 0, %s268
                %p265 = scmp.ge.s32.totalorder %s264, 1
                %s269 = sphi %s254, %s254
                %s270 = sphi %s247, %s247
              $region76: #{attention_forward.4} parent=72 // loop_header_branch
                %267 = sbr.rel (%p265) target = $region80
              $region77: #{attention_forward.4} parent=72 // loop_body
                %v271 = vld [vmem:[%s269] sm:%s262]
                %272 = vst [vmem:[%s270] sm:%s262] %v271
                %v273 = vld [vmem:[%s269 + $0xc] sm:%s262]
                %274 = vst [vmem:[%s270 + $0x4] sm:%s262] %v273
                %v275 = vld [vmem:[%s269 + $0x18] sm:%s262]
                %276 = vst [vmem:[%s270 + $0x8] sm:%s262] %v275
                %v277 = vld [vmem:[%s269 + $0x24] sm:%s262]
                %278 = vst [vmem:[%s270 + $0xc] sm:%s262] %v277
                %v279 = vld [vmem:[%s269 + $0x30] sm:%s262]
                %280 = vst [vmem:[%s270 + $0x10] sm:%s262] %v279
                %v281 = vld [vmem:[%s269 + $0x3c] sm:%s262]
                %282 = vst [vmem:[%s270 + $0x14] sm:%s262] %v281
                %v283 = vld [vmem:[%s269 + $0x48] sm:%s262]
                %284 = vst [vmem:[%s270 + $0x18] sm:%s262] %v283
                %v285 = vld [vmem:[%s269 + $0x54] sm:%s262]
                %286 = vst [vmem:[%s270 + $0x1c] sm:%s262] %v285
              $region78: #{attention_forward.4} parent=72 // loop_footer
                %s268 = sadd.s32 1, %s264
              $region79: #{attention_forward.4} parent=72 // loop_footer_branch
                %263 = sbr.rel target = $region75
              $region80: #{attention_forward.4} parent=72 // loop_exit
                _
            $region73: #{attention_forward.4} parent=64 // pred_fallthru
              _
          $region65: #{attention_forward.4} parent=60 // pred_fallthru
            _
          %323 = vnop
        $region61: #{attention_forward.4} parent=15 // pred_fallthru
          _
        // Predicated region
        $region99: #{attention_forward.4} parent=15 // pred_check
          %p324 = pneg %p106
        $region100: #{attention_forward.4} parent=15 // pred_check_branch
          %326 = sbr.rel (%p324) target = $region102
        $region101: #{attention_forward.4} parent=15 // pred_region
          %s327 = sand.u32 %s96, 1
          %s328 = sand.u32 %s96, 1
          %s329 = smul.addr %s328, 32
          %s330 = scalar_lea.vmem [#allocation7], %s329
          %s331 = smul.u32 8, %s18
          %s332 = smul.addr %s331, 3
          %s333 = sadd.s32 2, %s332
          %s334 = smul.addr %s16, 48
          %s335 = sadd.s32 %s333, %s334
          %s336 = smul.addr %s335, 4
          %s337 = scalar_lea.vmem %s2, %s336
          // Predicated region
          $region103: #{attention_forward.4} parent=101 // pred_check
            _
          $region104: #{attention_forward.4} parent=101 // pred_check_branch
            %339 = sbr.rel (0) target = $region106
          $region105: #{attention_forward.4} parent=101 // pred_region
            // Predicated region
            $region107: #{attention_forward.4} parent=105 // pred_check
              _
            $region108: #{attention_forward.4} parent=105 // pred_check_branch
              %341 = sbr.rel target = $region110
            $region109: #{attention_forward.4} parent=105 // pred_region
              // Predicated region
              $region122: #{attention_forward.4} parent=109 // pred_check
                _
              $region123: #{attention_forward.4} parent=109 // pred_check_branch
                %371 = sbr.rel (0) target = $region125
              $region124: #{attention_forward.4} parent=109 // pred_region
                loop: start=0, step=1, limit=1
                $region126: #{attention_forward.4} parent=124 // loop_pre_header
                  _
                $region127: #{attention_forward.4} parent=124 // loop_header
                  %s373 = sphi 0, %s377
                  %p374 = scmp.ge.s32.totalorder %s373, 1
                  %s378 = sphi %s337, %s337
                  %s379 = sphi %s330, %s330
                $region128: #{attention_forward.4} parent=124 // loop_header_branch
                  %376 = sbr.rel (%p374) target = $region132
                $region129: #{attention_forward.4} parent=124 // loop_body
                  _
                $region130: #{attention_forward.4} parent=124 // loop_footer
                  %s377 = sadd.s32 1, %s373
                $region131: #{attention_forward.4} parent=124 // loop_footer_branch
                  %372 = sbr.rel target = $region127
                $region132: #{attention_forward.4} parent=124 // loop_exit
                  _
                %s381 = ssub.s32 16, 1
                loop: start=0, step=1, limit=1
                $region133: #{attention_forward.4} parent=124 // loop_pre_header
                  _
                $region134: #{attention_forward.4} parent=124 // loop_header
                  %s383 = sphi 0, %s387
                  %p384 = scmp.ge.s32.totalorder %s383, 1
                  %s388 = sphi %s337, %s337
                  %s389 = sphi %s330, %s330
                $region135: #{attention_forward.4} parent=124 // loop_header_branch
                  %386 = sbr.rel (%p384) target = $region139
                $region136: #{attention_forward.4} parent=124 // loop_body
                  %v390 = vld [vmem:[%s388] sm:%s381]
                  %391 = vst [vmem:[%s389] sm:%s381] %v390
                  %v392 = vld [vmem:[%s388 + $0xc] sm:%s381]
                  %393 = vst [vmem:[%s389 + $0x4] sm:%s381] %v392
                  %v394 = vld [vmem:[%s388 + $0x18] sm:%s381]
                  %395 = vst [vmem:[%s389 + $0x8] sm:%s381] %v394
                  %v396 = vld [vmem:[%s388 + $0x24] sm:%s381]
                  %397 = vst [vmem:[%s389 + $0xc] sm:%s381] %v396
                  %v398 = vld [vmem:[%s388 + $0x30] sm:%s381]
                  %399 = vst [vmem:[%s389 + $0x10] sm:%s381] %v398
                  %v400 = vld [vmem:[%s388 + $0x3c] sm:%s381]
                  %401 = vst [vmem:[%s389 + $0x14] sm:%s381] %v400
                  %v402 = vld [vmem:[%s388 + $0x48] sm:%s381]
                  %403 = vst [vmem:[%s389 + $0x18] sm:%s381] %v402
                  %v404 = vld [vmem:[%s388 + $0x54] sm:%s381]
                  %405 = vst [vmem:[%s389 + $0x1c] sm:%s381] %v404
                $region137: #{attention_forward.4} parent=124 // loop_footer
                  %s387 = sadd.s32 1, %s383
                $region138: #{attention_forward.4} parent=124 // loop_footer_branch
                  %382 = sbr.rel target = $region134
                $region139: #{attention_forward.4} parent=124 // loop_exit
                  _
              $region125: #{attention_forward.4} parent=109 // pred_fallthru
                _
            $region110: #{attention_forward.4} parent=105 // pred_fallthru
              _
            // Predicated region
            $region111: #{attention_forward.4} parent=105 // pred_check
              _
            $region112: #{attention_forward.4} parent=105 // pred_check_branch
              %343 = sbr.rel (0) target = $region114
            $region113: #{attention_forward.4} parent=105 // pred_region
              %s345 = ssub.s32 16, 1
              loop: start=0, step=1, limit=1
              $region115: #{attention_forward.4} parent=113 // loop_pre_header
                _
              $region116: #{attention_forward.4} parent=113 // loop_header
                %s347 = sphi 0, %s351
                %p348 = scmp.ge.s32.totalorder %s347, 1
                %s352 = sphi %s337, %s337
                %s353 = sphi %s330, %s330
              $region117: #{attention_forward.4} parent=113 // loop_header_branch
                %350 = sbr.rel (%p348) target = $region121
              $region118: #{attention_forward.4} parent=113 // loop_body
                %v354 = vld [vmem:[%s352] sm:%s345]
                %355 = vst [vmem:[%s353] sm:%s345] %v354
                %v356 = vld [vmem:[%s352 + $0xc] sm:%s345]
                %357 = vst [vmem:[%s353 + $0x4] sm:%s345] %v356
                %v358 = vld [vmem:[%s352 + $0x18] sm:%s345]
                %359 = vst [vmem:[%s353 + $0x8] sm:%s345] %v358
                %v360 = vld [vmem:[%s352 + $0x24] sm:%s345]
                %361 = vst [vmem:[%s353 + $0xc] sm:%s345] %v360
                %v362 = vld [vmem:[%s352 + $0x30] sm:%s345]
                %363 = vst [vmem:[%s353 + $0x10] sm:%s345] %v362
                %v364 = vld [vmem:[%s352 + $0x3c] sm:%s345]
                %365 = vst [vmem:[%s353 + $0x14] sm:%s345] %v364
                %v366 = vld [vmem:[%s352 + $0x48] sm:%s345]
                %367 = vst [vmem:[%s353 + $0x18] sm:%s345] %v366
                %v368 = vld [vmem:[%s352 + $0x54] sm:%s345]
                %369 = vst [vmem:[%s353 + $0x1c] sm:%s345] %v368
              $region119: #{attention_forward.4} parent=113 // loop_footer
                %s351 = sadd.s32 1, %s347
              $region120: #{attention_forward.4} parent=113 // loop_footer_branch
                %346 = sbr.rel target = $region116
              $region121: #{attention_forward.4} parent=113 // loop_exit
                _
            $region114: #{attention_forward.4} parent=105 // pred_fallthru
              _
          $region106: #{attention_forward.4} parent=101 // pred_fallthru
            _
          %406 = vnop
        $region102: #{attention_forward.4} parent=15 // pred_fallthru
          _
      $region16: #{attention_forward.4} parent=5 // pred_fallthru
        _
      %p407 = scmp.le.s32.totalorder 1, %s9
      %p408 = scmp.lt.s32.totalorder %s9, 9
      %p409 = pnand %p407, %p408
      %p410 = pneg %p409
      // Predicated region
      $region140: #{attention_forward.4} parent=5 // pred_check
        _
      $region141: #{attention_forward.4} parent=5 // pred_check_branch
        %412 = sbr.rel (%p409) target = $region143
      $region142: #{attention_forward.4} parent=5 // pred_region
        %s413 = ssub.s32 %s9, 1
        %s414 = sand.u32 %s43, 1
        %s415 = sand.u32 %s43, 1
        %s416 = smul.addr %s415, 32
        %s417 = scalar_lea.vmem [#allocation5], %s416
        // Predicated region
        $region144: #{attention_forward.4} parent=142 // pred_check
          %p418 = pneg %p56
        $region145: #{attention_forward.4} parent=142 // pred_check_branch
          %420 = sbr.rel (%p418) target = $region147
        $region146: #{attention_forward.4} parent=142 // pred_region
          _
        $region147: #{attention_forward.4} parent=142 // pred_fallthru
          _
        %s421 = sand.u32 %s71, 1
        %s422 = sand.u32 %s71, 1
        %s423 = smul.addr %s422, 32
        %s424 = scalar_lea.vmem [#allocation6], %s423
        // Predicated region
        $region148: #{attention_forward.4} parent=142 // pred_check
          %p425 = pneg %p84
        $region149: #{attention_forward.4} parent=142 // pred_check_branch
          %427 = sbr.rel (%p425) target = $region151
        $region150: #{attention_forward.4} parent=142 // pred_region
          _
        $region151: #{attention_forward.4} parent=142 // pred_fallthru
          _
        %s428 = sand.u32 %s99, 1
        %s429 = sand.u32 %s99, 1
        %s430 = smul.addr %s429, 32
        %s431 = scalar_lea.vmem [#allocation7], %s430
        // Predicated region
        $region152: #{attention_forward.4} parent=142 // pred_check
          %p432 = pneg %p112
        $region153: #{attention_forward.4} parent=142 // pred_check_branch
          %434 = sbr.rel (%p432) target = $region155
        $region154: #{attention_forward.4} parent=142 // pred_region
          _
        $region155: #{attention_forward.4} parent=142 // pred_fallthru
          _
        %s435 = sand.u32 %s43, 1
        %s436 = sand.u32 %s43, 1
        %s437 = smul.addr %s436, 32
        %s438 = scalar_lea.vmem [#allocation5], %s437
        %p439 = pneg %p56
        %p440 = pneg %p53
        %s441 = sand.u32 %s71, 1
        %s442 = sand.u32 %s71, 1
        %s443 = smul.addr %s442, 32
        %s444 = scalar_lea.vmem [#allocation6], %s443
        %p445 = pneg %p84
        %p446 = pneg %p81
        %s447 = sand.u32 %s99, 1
        %s448 = sand.u32 %s99, 1
        %s449 = smul.addr %s448, 32
        %s450 = scalar_lea.vmem [#allocation7], %s449
        %p451 = pneg %p112
        %p452 = pneg %p109
        %p453 = pneg %p140
        %p454 = pneg %p137
        %s455 = smul.u32 8, %s20
        %p456 = scmp.lt.s32.totalorder %s19, 1
        %s457 = scalar_select %p456, %s19, 1
        %p458 = scmp.lt.s32.totalorder %s455, 15
        %s459 = scalar_select %p458, %s455, 15
        %s460 = smul.addr %s457, 16
        %s461 = sadd.s32 %s459, %s460
        %s462 = smul.addr %s461, 4
        %s463 = scalar_lea.vmem %s3, %s462
        %s464 = smul.u32 8, %s20
        %s465 = smul.u32 8, %s21
        %s466 = smul.u32 8, %s21
        %s467 = smul.u32 8, %s20
        %p468 = scmp.lt.s32.totalorder %s19, 1
        %s469 = scalar_select %p468, %s19, 1
        %p470 = scmp.lt.s32.totalorder %s467, 15
        %s471 = scalar_select %p470, %s467, 15
        %s472 = smul.addr %s469, 16
        %s473 = sadd.s32 %s471, %s472
        %s474 = smul.addr %s473, 4
        %s475 = scalar_lea.vmem %s3, %s474
        %s476 = smul.u32 8, %s20
        %p478 = scmp.eq.s32.totalorder %s21, 0
        // Predicated region
        $region156: #{attention_forward.4} parent=142 // pred_check
          %p479 = pneg %p478
        $region157: #{attention_forward.4} parent=142 // pred_check_branch
          %481 = sbr.rel (%p479) target = $region159
        $region158: #{attention_forward.4} parent=142 // pred_region
          %vm482 = vcmask 7168
          %483 = vst.msk [vmem:[#allocation2] sm:$0xff] %vm482, -inf
          %484 = vst.msk [vmem:[#allocation2 + $0x8] sm:$0xff] %vm482, -inf
          %485 = vst.msk [vmem:[#allocation2 + $0x10] sm:$0xff] %vm482, -inf
          %486 = vst.msk [vmem:[#allocation2 + $0x18] sm:$0xff] %vm482, -inf
          %487 = vst.msk [vmem:[#allocation2 + $0x20] sm:$0xff] %vm482, -inf
          %488 = vst.msk [vmem:[#allocation2 + $0x28] sm:$0xff] %vm482, -inf
          %489 = vst.msk [vmem:[#allocation2 + $0x30] sm:$0xff] %vm482, -inf
          %490 = vst.msk [vmem:[#allocation2 + $0x38] sm:$0xff] %vm482, -inf
          %491 = vst.msk [vmem:[#allocation2 + $0x40] sm:$0xff] %vm482, -inf
          %492 = vst.msk [vmem:[#allocation2 + $0x48] sm:$0xff] %vm482, -inf
          %493 = vst.msk [vmem:[#allocation2 + $0x50] sm:$0xff] %vm482, -inf
          %494 = vst.msk [vmem:[#allocation2 + $0x58] sm:$0xff] %vm482, -inf
          %495 = vst.msk [vmem:[#allocation2 + $0x60] sm:$0xff] %vm482, -inf
          %496 = vst.msk [vmem:[#allocation2 + $0x68] sm:$0xff] %vm482, -inf
          %497 = vst.msk [vmem:[#allocation2 + $0x70] sm:$0xff] %vm482, -inf
          %498 = vst.msk [vmem:[#allocation2 + $0x78] sm:$0xff] %vm482, -inf
          %499 = vst.msk [vmem:[#allocation3] sm:$0xff] %vm482, 0.0
          %500 = vst.msk [vmem:[#allocation3 + $0x8] sm:$0xff] %vm482, 0.0
          %501 = vst.msk [vmem:[#allocation3 + $0x10] sm:$0xff] %vm482, 0.0
          %502 = vst.msk [vmem:[#allocation3 + $0x18] sm:$0xff] %vm482, 0.0
          %503 = vst.msk [vmem:[#allocation3 + $0x20] sm:$0xff] %vm482, 0.0
          %504 = vst.msk [vmem:[#allocation3 + $0x28] sm:$0xff] %vm482, 0.0
          %505 = vst.msk [vmem:[#allocation3 + $0x30] sm:$0xff] %vm482, 0.0
          %506 = vst.msk [vmem:[#allocation3 + $0x38] sm:$0xff] %vm482, 0.0
          %507 = vst.msk [vmem:[#allocation3 + $0x40] sm:$0xff] %vm482, 0.0
          %508 = vst.msk [vmem:[#allocation3 + $0x48] sm:$0xff] %vm482, 0.0
          %509 = vst.msk [vmem:[#allocation3 + $0x50] sm:$0xff] %vm482, 0.0
          %510 = vst.msk [vmem:[#allocation3 + $0x58] sm:$0xff] %vm482, 0.0
          %511 = vst.msk [vmem:[#allocation3 + $0x60] sm:$0xff] %vm482, 0.0
          %512 = vst.msk [vmem:[#allocation3 + $0x68] sm:$0xff] %vm482, 0.0
          %513 = vst.msk [vmem:[#allocation3 + $0x70] sm:$0xff] %vm482, 0.0
          %514 = vst.msk [vmem:[#allocation3 + $0x78] sm:$0xff] %vm482, 0.0
          %vm515 = vcmask 523264
          %516 = vst.msk [vmem:[#allocation4] sm:$0xff] %vm515, 0.0
          %517 = vst.msk [vmem:[#allocation4 + $0x8] sm:$0xff] %vm515, 0.0
          %518 = vst.msk [vmem:[#allocation4 + $0x10] sm:$0xff] %vm515, 0.0
          %519 = vst.msk [vmem:[#allocation4 + $0x18] sm:$0xff] %vm515, 0.0
          %520 = vst.msk [vmem:[#allocation4 + $0x20] sm:$0xff] %vm515, 0.0
          %521 = vst.msk [vmem:[#allocation4 + $0x28] sm:$0xff] %vm515, 0.0
          %522 = vst.msk [vmem:[#allocation4 + $0x30] sm:$0xff] %vm515, 0.0
          %523 = vst.msk [vmem:[#allocation4 + $0x38] sm:$0xff] %vm515, 0.0
          %524 = vst.msk [vmem:[#allocation4 + $0x40] sm:$0xff] %vm515, 0.0
          %525 = vst.msk [vmem:[#allocation4 + $0x48] sm:$0xff] %vm515, 0.0
          %526 = vst.msk [vmem:[#allocation4 + $0x50] sm:$0xff] %vm515, 0.0
          %527 = vst.msk [vmem:[#allocation4 + $0x58] sm:$0xff] %vm515, 0.0
          %528 = vst.msk [vmem:[#allocation4 + $0x60] sm:$0xff] %vm515, 0.0
          %529 = vst.msk [vmem:[#allocation4 + $0x68] sm:$0xff] %vm515, 0.0
          %530 = vst.msk [vmem:[#allocation4 + $0x70] sm:$0xff] %vm515, 0.0
          %531 = vst.msk [vmem:[#allocation4 + $0x78] sm:$0xff] %vm515, 0.0
        $region159: #{attention_forward.4} parent=142 // pred_fallthru
          _
        %v532 = vld [vmem:[%s417] sm:$0xf]
        %v533 = vld [vmem:[%s417 + $0x4] sm:$0xf]
        %v534 = vld [vmem:[%s417 + $0x8] sm:$0xf]
        %v535 = vld [vmem:[%s417 + $0xc] sm:$0xf]
        %v536 = vld [vmem:[%s417 + $0x10] sm:$0xf]
        %v537 = vld [vmem:[%s417 + $0x14] sm:$0xf]
        %v538 = vld [vmem:[%s417 + $0x18] sm:$0xf]
        %v539 = vld [vmem:[%s417 + $0x1c] sm:$0xf]
        %548 = vrot.lane.b32.xlu0 %v532, 64
        %v549 = vpop.permute.xlu0 %548
        %550 = vrot.lane.b32.xlu0 %v533, 64
        %v551 = vpop.permute.xlu0 %550
        %552 = vrot.lane.b32.xlu0 %v534, 64
        %v553 = vpop.permute.xlu0 %552
        %554 = vrot.lane.b32.xlu0 %v535, 64
        %v555 = vpop.permute.xlu0 %554
        %556 = vrot.lane.b32.xlu0 %v536, 64
        %v557 = vpop.permute.xlu0 %556
        %558 = vrot.lane.b32.xlu0 %v537, 64
        %v559 = vpop.permute.xlu0 %558
        %560 = vrot.lane.b32.xlu0 %v538, 64
        %v561 = vpop.permute.xlu0 %560
        %562 = vrot.lane.b32.xlu0 %v539, 64
        %v563 = vpop.permute.xlu0 %562
        %v566 = vpack.i.b16 %v549, %v532
        %v567 = vshrl.u32 %v532, 16
        %v568 = vshrl.u32 %v549, 16
        %v569 = vpack.i.b16 %v568, %v567
        %v572 = vpack.i.b16 %v551, %v533
        %v573 = vshrl.u32 %v533, 16
        %v574 = vshrl.u32 %v551, 16
        %v575 = vpack.i.b16 %v574, %v573
        %v578 = vpack.i.b16 %v553, %v534
        %v579 = vshrl.u32 %v534, 16
        %v580 = vshrl.u32 %v553, 16
        %v581 = vpack.i.b16 %v580, %v579
        %v584 = vpack.i.b16 %v555, %v535
        %v585 = vshrl.u32 %v535, 16
        %v586 = vshrl.u32 %v555, 16
        %v587 = vpack.i.b16 %v586, %v585
        %v590 = vpack.i.b16 %v557, %v536
        %v591 = vshrl.u32 %v536, 16
        %v592 = vshrl.u32 %v557, 16
        %v593 = vpack.i.b16 %v592, %v591
        %v596 = vpack.i.b16 %v559, %v537
        %v597 = vshrl.u32 %v537, 16
        %v598 = vshrl.u32 %v559, 16
        %v599 = vpack.i.b16 %v598, %v597
        %v602 = vpack.i.b16 %v561, %v538
        %v603 = vshrl.u32 %v538, 16
        %v604 = vshrl.u32 %v561, 16
        %v605 = vpack.i.b16 %v604, %v603
        %v608 = vpack.i.b16 %v563, %v539
        %v609 = vshrl.u32 %v539, 16
        %v610 = vshrl.u32 %v563, 16
        %v611 = vpack.i.b16 %v610, %v609
        %v614 = vunpack.c.l.s4 1983009808
        %v615 = vunpack.c.0.s8 %v614
        %v616 = vperm.slane %v566, %v615
        %v617 = vrot.slane %v616, 4
        %vm618 = vcmask 1047556
        %v619 = vsel %vm618, 0, %v617
        %v621 = vunpack.c.l.s4 1934713408
        %v622 = vunpack.c.0.s8 %v621
        %v623 = vperm.slane %v616, %v622
        %v625 = vunpack.c.l.s4 1934713408
        %v626 = vunpack.c.0.s8 %v625
        %v627 = vperm.slane %v619, %v626
        %v628 = vrot.slane %v623, 4
        %v629 = vsel %vm618, 0, %v628
        %v630 = vrot.slane %v627, 4
        %v631 = vsel %vm618, 0, %v630
        %v634 = vunpack.c.l.s4 1983009808
        %v635 = vunpack.c.0.s8 %v634
        %v636 = vperm.slane %v569, %v635
        %v637 = vrot.slane %v636, 4
        %v638 = vsel %vm618, 0, %v637
        %v640 = vunpack.c.l.s4 1934713408
        %v641 = vunpack.c.0.s8 %v640
        %v642 = vperm.slane %v636, %v641
        %v644 = vunpack.c.l.s4 1934713408
        %v645 = vunpack.c.0.s8 %v644
        %v646 = vperm.slane %v638, %v645
        %v647 = vrot.slane %v642, 4
        %v648 = vsel %vm618, 0, %v647
        %v649 = vrot.slane %v646, 4
        %v650 = vsel %vm618, 0, %v649
        %v653 = vunpack.c.l.s4 1983009808
        %v654 = vunpack.c.0.s8 %v653
        %v655 = vperm.slane %v572, %v654
        %v656 = vrot.slane %v655, 4
        %v657 = vsel %vm618, 0, %v656
        %v659 = vunpack.c.l.s4 1934713408
        %v660 = vunpack.c.0.s8 %v659
        %v661 = vperm.slane %v655, %v660
        %v663 = vunpack.c.l.s4 1934713408
        %v664 = vunpack.c.0.s8 %v663
        %v665 = vperm.slane %v657, %v664
        %v666 = vrot.slane %v661, 4
        %v667 = vsel %vm618, 0, %v666
        %v668 = vrot.slane %v665, 4
        %v669 = vsel %vm618, 0, %v668
        %v672 = vunpack.c.l.s4 1983009808
        %v673 = vunpack.c.0.s8 %v672
        %v674 = vperm.slane %v575, %v673
        %v675 = vrot.slane %v674, 4
        %v676 = vsel %vm618, 0, %v675
        %v678 = vunpack.c.l.s4 1934713408
        %v679 = vunpack.c.0.s8 %v678
        %v680 = vperm.slane %v674, %v679
        %v682 = vunpack.c.l.s4 1934713408
        %v683 = vunpack.c.0.s8 %v682
        %v684 = vperm.slane %v676, %v683
        %v685 = vrot.slane %v680, 4
        %v686 = vsel %vm618, 0, %v685
        %v687 = vrot.slane %v684, 4
        %v688 = vsel %vm618, 0, %v687
        %v691 = vunpack.c.l.s4 1983009808
        %v692 = vunpack.c.0.s8 %v691
        %v693 = vperm.slane %v578, %v692
        %v694 = vrot.slane %v693, 4
        %v695 = vsel %vm618, 0, %v694
        %v697 = vunpack.c.l.s4 1934713408
        %v698 = vunpack.c.0.s8 %v697
        %v699 = vperm.slane %v693, %v698
        %v701 = vunpack.c.l.s4 1934713408
        %v702 = vunpack.c.0.s8 %v701
        %v703 = vperm.slane %v695, %v702
        %v704 = vrot.slane %v699, 4
        %v705 = vsel %vm618, 0, %v704
        %v706 = vrot.slane %v703, 4
        %v707 = vsel %vm618, 0, %v706
        %v710 = vunpack.c.l.s4 1983009808
        %v711 = vunpack.c.0.s8 %v710
        %v712 = vperm.slane %v581, %v711
        %v713 = vrot.slane %v712, 4
        %v714 = vsel %vm618, 0, %v713
        %v716 = vunpack.c.l.s4 1934713408
        %v717 = vunpack.c.0.s8 %v716
        %v718 = vperm.slane %v712, %v717
        %v720 = vunpack.c.l.s4 1934713408
        %v721 = vunpack.c.0.s8 %v720
        %v722 = vperm.slane %v714, %v721
        %v723 = vrot.slane %v718, 4
        %v724 = vsel %vm618, 0, %v723
        %v725 = vrot.slane %v722, 4
        %v726 = vsel %vm618, 0, %v725
        %v729 = vunpack.c.l.s4 1983009808
        %v730 = vunpack.c.0.s8 %v729
        %v731 = vperm.slane %v584, %v730
        %v732 = vrot.slane %v731, 4
        %v733 = vsel %vm618, 0, %v732
        %v735 = vunpack.c.l.s4 1934713408
        %v736 = vunpack.c.0.s8 %v735
        %v737 = vperm.slane %v731, %v736
        %v739 = vunpack.c.l.s4 1934713408
        %v740 = vunpack.c.0.s8 %v739
        %v741 = vperm.slane %v733, %v740
        %v742 = vrot.slane %v737, 4
        %v743 = vsel %vm618, 0, %v742
        %v744 = vrot.slane %v741, 4
        %v745 = vsel %vm618, 0, %v744
        %v748 = vunpack.c.l.s4 1983009808
        %v749 = vunpack.c.0.s8 %v748
        %v750 = vperm.slane %v587, %v749
        %v751 = vrot.slane %v750, 4
        %v752 = vsel %vm618, 0, %v751
        %v754 = vunpack.c.l.s4 1934713408
        %v755 = vunpack.c.0.s8 %v754
        %v756 = vperm.slane %v750, %v755
        %v758 = vunpack.c.l.s4 1934713408
        %v759 = vunpack.c.0.s8 %v758
        %v760 = vperm.slane %v752, %v759
        %v761 = vrot.slane %v756, 4
        %v762 = vsel %vm618, 0, %v761
        %v763 = vrot.slane %v760, 4
        %v764 = vsel %vm618, 0, %v763
        %v767 = vunpack.c.l.s4 1983009808
        %v768 = vunpack.c.0.s8 %v767
        %v769 = vperm.slane %v590, %v768
        %v770 = vrot.slane %v769, 4
        %v771 = vsel %vm618, 0, %v770
        %v773 = vunpack.c.l.s4 1934713408
        %v774 = vunpack.c.0.s8 %v773
        %v775 = vperm.slane %v769, %v774
        %v777 = vunpack.c.l.s4 1934713408
        %v778 = vunpack.c.0.s8 %v777
        %v779 = vperm.slane %v771, %v778
        %v780 = vrot.slane %v775, 4
        %v781 = vsel %vm618, 0, %v780
        %v782 = vrot.slane %v779, 4
        %v783 = vsel %vm618, 0, %v782
        %v786 = vunpack.c.l.s4 1983009808
        %v787 = vunpack.c.0.s8 %v786
        %v788 = vperm.slane %v593, %v787
        %v789 = vrot.slane %v788, 4
        %v790 = vsel %vm618, 0, %v789
        %v792 = vunpack.c.l.s4 1934713408
        %v793 = vunpack.c.0.s8 %v792
        %v794 = vperm.slane %v788, %v793
        %v796 = vunpack.c.l.s4 1934713408
        %v797 = vunpack.c.0.s8 %v796
        %v798 = vperm.slane %v790, %v797
        %v799 = vrot.slane %v794, 4
        %v800 = vsel %vm618, 0, %v799
        %v801 = vrot.slane %v798, 4
        %v802 = vsel %vm618, 0, %v801
        %v805 = vunpack.c.l.s4 1983009808
        %v806 = vunpack.c.0.s8 %v805
        %v807 = vperm.slane %v596, %v806
        %v808 = vrot.slane %v807, 4
        %v809 = vsel %vm618, 0, %v808
        %v811 = vunpack.c.l.s4 1934713408
        %v812 = vunpack.c.0.s8 %v811
        %v813 = vperm.slane %v807, %v812
        %v815 = vunpack.c.l.s4 1934713408
        %v816 = vunpack.c.0.s8 %v815
        %v817 = vperm.slane %v809, %v816
        %v818 = vrot.slane %v813, 4
        %v819 = vsel %vm618, 0, %v818
        %v820 = vrot.slane %v817, 4
        %v821 = vsel %vm618, 0, %v820
        %v824 = vunpack.c.l.s4 1983009808
        %v825 = vunpack.c.0.s8 %v824
        %v826 = vperm.slane %v599, %v825
        %v827 = vrot.slane %v826, 4
        %v828 = vsel %vm618, 0, %v827
        %v830 = vunpack.c.l.s4 1934713408
        %v831 = vunpack.c.0.s8 %v830
        %v832 = vperm.slane %v826, %v831
        %v834 = vunpack.c.l.s4 1934713408
        %v835 = vunpack.c.0.s8 %v834
        %v836 = vperm.slane %v828, %v835
        %v837 = vrot.slane %v832, 4
        %v838 = vsel %vm618, 0, %v837
        %v839 = vrot.slane %v836, 4
        %v840 = vsel %vm618, 0, %v839
        %v843 = vunpack.c.l.s4 1983009808
        %v844 = vunpack.c.0.s8 %v843
        %v845 = vperm.slane %v602, %v844
        %v846 = vrot.slane %v845, 4
        %v847 = vsel %vm618, 0, %v846
        %v849 = vunpack.c.l.s4 1934713408
        %v850 = vunpack.c.0.s8 %v849
        %v851 = vperm.slane %v845, %v850
        %v853 = vunpack.c.l.s4 1934713408
        %v854 = vunpack.c.0.s8 %v853
        %v855 = vperm.slane %v847, %v854
        %v856 = vrot.slane %v851, 4
        %v857 = vsel %vm618, 0, %v856
        %v858 = vrot.slane %v855, 4
        %v859 = vsel %vm618, 0, %v858
        %v862 = vunpack.c.l.s4 1983009808
        %v863 = vunpack.c.0.s8 %v862
        %v864 = vperm.slane %v605, %v863
        %v865 = vrot.slane %v864, 4
        %v866 = vsel %vm618, 0, %v865
        %v868 = vunpack.c.l.s4 1934713408
        %v869 = vunpack.c.0.s8 %v868
        %v870 = vperm.slane %v864, %v869
        %v872 = vunpack.c.l.s4 1934713408
        %v873 = vunpack.c.0.s8 %v872
        %v874 = vperm.slane %v866, %v873
        %v875 = vrot.slane %v870, 4
        %v876 = vsel %vm618, 0, %v875
        %v877 = vrot.slane %v874, 4
        %v878 = vsel %vm618, 0, %v877
        %v881 = vunpack.c.l.s4 1983009808
        %v882 = vunpack.c.0.s8 %v881
        %v883 = vperm.slane %v608, %v882
        %v884 = vrot.slane %v883, 4
        %v885 = vsel %vm618, 0, %v884
        %v887 = vunpack.c.l.s4 1934713408
        %v888 = vunpack.c.0.s8 %v887
        %v889 = vperm.slane %v883, %v888
        %v891 = vunpack.c.l.s4 1934713408
        %v892 = vunpack.c.0.s8 %v891
        %v893 = vperm.slane %v885, %v892
        %v894 = vrot.slane %v889, 4
        %v895 = vsel %vm618, 0, %v894
        %v896 = vrot.slane %v893, 4
        %v897 = vsel %vm618, 0, %v896
        %v900 = vunpack.c.l.s4 1983009808
        %v901 = vunpack.c.0.s8 %v900
        %v902 = vperm.slane %v611, %v901
        %v903 = vrot.slane %v902, 4
        %v904 = vsel %vm618, 0, %v903
        %v906 = vunpack.c.l.s4 1934713408
        %v907 = vunpack.c.0.s8 %v906
        %v908 = vperm.slane %v902, %v907
        %v910 = vunpack.c.l.s4 1934713408
        %v911 = vunpack.c.0.s8 %v910
        %v912 = vperm.slane %v904, %v911
        %v913 = vrot.slane %v908, 4
        %v914 = vsel %vm618, 0, %v913
        %v915 = vrot.slane %v912, 4
        %v916 = vsel %vm618, 0, %v915
        %v917 = vsel %vm618, %v630, %v623
        %v919 = vunpack.c.l.s4 1983009808
        %v920 = vunpack.c.0.s8 %v919
        %v921 = vperm.slane %v917, %v920
        %v922 = vrot.slane %v631, 4
        %v923 = vsel %vm618, %v922, %v629
        %v925 = vunpack.c.l.s4 1983009808
        %v926 = vunpack.c.0.s8 %v925
        %v927 = vperm.slane %v923, %v926
        %v928 = vrot.slane %v927, 4
        %v929 = vsel %vm618, %v928, %v921
        %v931 = vunpack.c.l.s4 1934713408
        %v932 = vunpack.c.0.s8 %v931
        %v933 = vperm.slane %v929, %v932
        %v934 = vsel %vm618, %v649, %v642
        %v936 = vunpack.c.l.s4 1983009808
        %v937 = vunpack.c.0.s8 %v936
        %v938 = vperm.slane %v934, %v937
        %v939 = vrot.slane %v650, 4
        %v940 = vsel %vm618, %v939, %v648
        %v942 = vunpack.c.l.s4 1983009808
        %v943 = vunpack.c.0.s8 %v942
        %v944 = vperm.slane %v940, %v943
        %v945 = vrot.slane %v944, 4
        %v946 = vsel %vm618, %v945, %v938
        %v948 = vunpack.c.l.s4 1934713408
        %v949 = vunpack.c.0.s8 %v948
        %v950 = vperm.slane %v946, %v949
        %v951 = vsel %vm618, %v668, %v661
        %v953 = vunpack.c.l.s4 1983009808
        %v954 = vunpack.c.0.s8 %v953
        %v955 = vperm.slane %v951, %v954
        %v956 = vrot.slane %v669, 4
        %v957 = vsel %vm618, %v956, %v667
        %v959 = vunpack.c.l.s4 1983009808
        %v960 = vunpack.c.0.s8 %v959
        %v961 = vperm.slane %v957, %v960
        %v962 = vrot.slane %v961, 4
        %v963 = vsel %vm618, %v962, %v955
        %v965 = vunpack.c.l.s4 1934713408
        %v966 = vunpack.c.0.s8 %v965
        %v967 = vperm.slane %v963, %v966
        %v968 = vsel %vm618, %v687, %v680
        %v970 = vunpack.c.l.s4 1983009808
        %v971 = vunpack.c.0.s8 %v970
        %v972 = vperm.slane %v968, %v971
        %v973 = vrot.slane %v688, 4
        %v974 = vsel %vm618, %v973, %v686
        %v976 = vunpack.c.l.s4 1983009808
        %v977 = vunpack.c.0.s8 %v976
        %v978 = vperm.slane %v974, %v977
        %v979 = vrot.slane %v978, 4
        %v980 = vsel %vm618, %v979, %v972
        %v982 = vunpack.c.l.s4 1934713408
        %v983 = vunpack.c.0.s8 %v982
        %v984 = vperm.slane %v980, %v983
        %v985 = vsel %vm618, %v706, %v699
        %v987 = vunpack.c.l.s4 1983009808
        %v988 = vunpack.c.0.s8 %v987
        %v989 = vperm.slane %v985, %v988
        %v990 = vrot.slane %v707, 4
        %v991 = vsel %vm618, %v990, %v705
        %v993 = vunpack.c.l.s4 1983009808
        %v994 = vunpack.c.0.s8 %v993
        %v995 = vperm.slane %v991, %v994
        %v996 = vrot.slane %v995, 4
        %v997 = vsel %vm618, %v996, %v989
        %v999 = vunpack.c.l.s4 1934713408
        %v1000 = vunpack.c.0.s8 %v999
        %v1001 = vperm.slane %v997, %v1000
        %v1002 = vsel %vm618, %v725, %v718
        %v1004 = vunpack.c.l.s4 1983009808
        %v1005 = vunpack.c.0.s8 %v1004
        %v1006 = vperm.slane %v1002, %v1005
        %v1007 = vrot.slane %v726, 4
        %v1008 = vsel %vm618, %v1007, %v724
        %v1010 = vunpack.c.l.s4 1983009808
        %v1011 = vunpack.c.0.s8 %v1010
        %v1012 = vperm.slane %v1008, %v1011
        %v1013 = vrot.slane %v1012, 4
        %v1014 = vsel %vm618, %v1013, %v1006
        %v1016 = vunpack.c.l.s4 1934713408
        %v1017 = vunpack.c.0.s8 %v1016
        %v1018 = vperm.slane %v1014, %v1017
        %v1019 = vsel %vm618, %v744, %v737
        %v1021 = vunpack.c.l.s4 1983009808
        %v1022 = vunpack.c.0.s8 %v1021
        %v1023 = vperm.slane %v1019, %v1022
        %v1024 = vrot.slane %v745, 4
        %v1025 = vsel %vm618, %v1024, %v743
        %v1027 = vunpack.c.l.s4 1983009808
        %v1028 = vunpack.c.0.s8 %v1027
        %v1029 = vperm.slane %v1025, %v1028
        %v1030 = vrot.slane %v1029, 4
        %v1031 = vsel %vm618, %v1030, %v1023
        %v1033 = vunpack.c.l.s4 1934713408
        %v1034 = vunpack.c.0.s8 %v1033
        %v1035 = vperm.slane %v1031, %v1034
        %v1036 = vsel %vm618, %v763, %v756
        %v1038 = vunpack.c.l.s4 1983009808
        %v1039 = vunpack.c.0.s8 %v1038
        %v1040 = vperm.slane %v1036, %v1039
        %v1041 = vrot.slane %v764, 4
        %v1042 = vsel %vm618, %v1041, %v762
        %v1044 = vunpack.c.l.s4 1983009808
        %v1045 = vunpack.c.0.s8 %v1044
        %v1046 = vperm.slane %v1042, %v1045
        %v1047 = vrot.slane %v1046, 4
        %v1048 = vsel %vm618, %v1047, %v1040
        %v1050 = vunpack.c.l.s4 1934713408
        %v1051 = vunpack.c.0.s8 %v1050
        %v1052 = vperm.slane %v1048, %v1051
        %v1053 = vsel %vm618, %v782, %v775
        %v1055 = vunpack.c.l.s4 1983009808
        %v1056 = vunpack.c.0.s8 %v1055
        %v1057 = vperm.slane %v1053, %v1056
        %v1058 = vrot.slane %v783, 4
        %v1059 = vsel %vm618, %v1058, %v781
        %v1061 = vunpack.c.l.s4 1983009808
        %v1062 = vunpack.c.0.s8 %v1061
        %v1063 = vperm.slane %v1059, %v1062
        %v1064 = vrot.slane %v1063, 4
        %v1065 = vsel %vm618, %v1064, %v1057
        %v1067 = vunpack.c.l.s4 1934713408
        %v1068 = vunpack.c.0.s8 %v1067
        %v1069 = vperm.slane %v1065, %v1068
        %v1070 = vsel %vm618, %v801, %v794
        %v1072 = vunpack.c.l.s4 1983009808
        %v1073 = vunpack.c.0.s8 %v1072
        %v1074 = vperm.slane %v1070, %v1073
        %v1075 = vrot.slane %v802, 4
        %v1076 = vsel %vm618, %v1075, %v800
        %v1078 = vunpack.c.l.s4 1983009808
        %v1079 = vunpack.c.0.s8 %v1078
        %v1080 = vperm.slane %v1076, %v1079
        %v1081 = vrot.slane %v1080, 4
        %v1082 = vsel %vm618, %v1081, %v1074
        %v1084 = vunpack.c.l.s4 1934713408
        %v1085 = vunpack.c.0.s8 %v1084
        %v1086 = vperm.slane %v1082, %v1085
        %v1087 = vsel %vm618, %v820, %v813
        %v1089 = vunpack.c.l.s4 1983009808
        %v1090 = vunpack.c.0.s8 %v1089
        %v1091 = vperm.slane %v1087, %v1090
        %v1092 = vrot.slane %v821, 4
        %v1093 = vsel %vm618, %v1092, %v819
        %v1095 = vunpack.c.l.s4 1983009808
        %v1096 = vunpack.c.0.s8 %v1095
        %v1097 = vperm.slane %v1093, %v1096
        %v1098 = vrot.slane %v1097, 4
        %v1099 = vsel %vm618, %v1098, %v1091
        %v1101 = vunpack.c.l.s4 1934713408
        %v1102 = vunpack.c.0.s8 %v1101
        %v1103 = vperm.slane %v1099, %v1102
        %v1104 = vsel %vm618, %v839, %v832
        %v1106 = vunpack.c.l.s4 1983009808
        %v1107 = vunpack.c.0.s8 %v1106
        %v1108 = vperm.slane %v1104, %v1107
        %v1109 = vrot.slane %v840, 4
        %v1110 = vsel %vm618, %v1109, %v838
        %v1112 = vunpack.c.l.s4 1983009808
        %v1113 = vunpack.c.0.s8 %v1112
        %v1114 = vperm.slane %v1110, %v1113
        %v1115 = vrot.slane %v1114, 4
        %v1116 = vsel %vm618, %v1115, %v1108
        %v1118 = vunpack.c.l.s4 1934713408
        %v1119 = vunpack.c.0.s8 %v1118
        %v1120 = vperm.slane %v1116, %v1119
        %v1121 = vsel %vm618, %v858, %v851
        %v1123 = vunpack.c.l.s4 1983009808
        %v1124 = vunpack.c.0.s8 %v1123
        %v1125 = vperm.slane %v1121, %v1124
        %v1126 = vrot.slane %v859, 4
        %v1127 = vsel %vm618, %v1126, %v857
        %v1129 = vunpack.c.l.s4 1983009808
        %v1130 = vunpack.c.0.s8 %v1129
        %v1131 = vperm.slane %v1127, %v1130
        %v1132 = vrot.slane %v1131, 4
        %v1133 = vsel %vm618, %v1132, %v1125
        %v1135 = vunpack.c.l.s4 1934713408
        %v1136 = vunpack.c.0.s8 %v1135
        %v1137 = vperm.slane %v1133, %v1136
        %v1138 = vsel %vm618, %v877, %v870
        %v1140 = vunpack.c.l.s4 1983009808
        %v1141 = vunpack.c.0.s8 %v1140
        %v1142 = vperm.slane %v1138, %v1141
        %v1143 = vrot.slane %v878, 4
        %v1144 = vsel %vm618, %v1143, %v876
        %v1146 = vunpack.c.l.s4 1983009808
        %v1147 = vunpack.c.0.s8 %v1146
        %v1148 = vperm.slane %v1144, %v1147
        %v1149 = vrot.slane %v1148, 4
        %v1150 = vsel %vm618, %v1149, %v1142
        %v1152 = vunpack.c.l.s4 1934713408
        %v1153 = vunpack.c.0.s8 %v1152
        %v1154 = vperm.slane %v1150, %v1153
        %v1155 = vsel %vm618, %v896, %v889
        %v1157 = vunpack.c.l.s4 1983009808
        %v1158 = vunpack.c.0.s8 %v1157
        %v1159 = vperm.slane %v1155, %v1158
        %v1160 = vrot.slane %v897, 4
        %v1161 = vsel %vm618, %v1160, %v895
        %v1163 = vunpack.c.l.s4 1983009808
        %v1164 = vunpack.c.0.s8 %v1163
        %v1165 = vperm.slane %v1161, %v1164
        %v1166 = vrot.slane %v1165, 4
        %v1167 = vsel %vm618, %v1166, %v1159
        %v1169 = vunpack.c.l.s4 1934713408
        %v1170 = vunpack.c.0.s8 %v1169
        %v1171 = vperm.slane %v1167, %v1170
        %v1172 = vsel %vm618, %v915, %v908
        %v1174 = vunpack.c.l.s4 1983009808
        %v1175 = vunpack.c.0.s8 %v1174
        %v1176 = vperm.slane %v1172, %v1175
        %v1177 = vrot.slane %v916, 4
        %v1178 = vsel %vm618, %v1177, %v914
        %v1180 = vunpack.c.l.s4 1983009808
        %v1181 = vunpack.c.0.s8 %v1180
        %v1182 = vperm.slane %v1178, %v1181
        %v1183 = vrot.slane %v1182, 4
        %v1184 = vsel %vm618, %v1183, %v1176
        %v1186 = vunpack.c.l.s4 1934713408
        %v1187 = vunpack.c.0.s8 %v1186
        %v1188 = vperm.slane %v1184, %v1187
        %v1191 = vpack.i.b16 %v950, %v933
        %v1192 = vshrl.u32 %v933, 16
        %v1193 = vshrl.u32 %v950, 16
        %v1194 = vpack.i.b16 %v1193, %v1192
        %v1197 = vpack.i.b16 %v984, %v967
        %v1198 = vshrl.u32 %v967, 16
        %v1199 = vshrl.u32 %v984, 16
        %v1200 = vpack.i.b16 %v1199, %v1198
        %v1203 = vpack.i.b16 %v1018, %v1001
        %v1204 = vshrl.u32 %v1001, 16
        %v1205 = vshrl.u32 %v1018, 16
        %v1206 = vpack.i.b16 %v1205, %v1204
        %v1209 = vpack.i.b16 %v1052, %v1035
        %v1210 = vshrl.u32 %v1035, 16
        %v1211 = vshrl.u32 %v1052, 16
        %v1212 = vpack.i.b16 %v1211, %v1210
        %v1215 = vpack.i.b16 %v1086, %v1069
        %v1216 = vshrl.u32 %v1069, 16
        %v1217 = vshrl.u32 %v1086, 16
        %v1218 = vpack.i.b16 %v1217, %v1216
        %v1221 = vpack.i.b16 %v1120, %v1103
        %v1222 = vshrl.u32 %v1103, 16
        %v1223 = vshrl.u32 %v1120, 16
        %v1224 = vpack.i.b16 %v1223, %v1222
        %v1227 = vpack.i.b16 %v1154, %v1137
        %v1228 = vshrl.u32 %v1137, 16
        %v1229 = vshrl.u32 %v1154, 16
        %v1230 = vpack.i.b16 %v1229, %v1228
        %v1233 = vpack.i.b16 %v1188, %v1171
        %v1234 = vshrl.u32 %v1171, 16
        %v1235 = vshrl.u32 %v1188, 16
        %v1236 = vpack.i.b16 %v1235, %v1234
        %v1237 = vld [vmem:[%s424] sm:$0xf]
        %v1238 = vld [vmem:[%s424 + $0x4] sm:$0xf]
        %v1239 = vld [vmem:[%s424 + $0x8] sm:$0xf]
        %v1240 = vld [vmem:[%s424 + $0xc] sm:$0xf]
        %v1241 = vld [vmem:[%s424 + $0x10] sm:$0xf]
        %v1242 = vld [vmem:[%s424 + $0x14] sm:$0xf]
        %v1243 = vld [vmem:[%s424 + $0x18] sm:$0xf]
        %v1244 = vld [vmem:[%s424 + $0x1c] sm:$0xf]
        %1253 = vrot.lane.b32.xlu0 %v1237, 64
        %v1254 = vpop.permute.xlu0 %1253
        %1255 = vrot.lane.b32.xlu0 %v1238, 64
        %v1256 = vpop.permute.xlu0 %1255
        %1257 = vrot.lane.b32.xlu0 %v1239, 64
        %v1258 = vpop.permute.xlu0 %1257
        %1259 = vrot.lane.b32.xlu0 %v1240, 64
        %v1260 = vpop.permute.xlu0 %1259
        %1261 = vrot.lane.b32.xlu0 %v1241, 64
        %v1262 = vpop.permute.xlu0 %1261
        %1263 = vrot.lane.b32.xlu0 %v1242, 64
        %v1264 = vpop.permute.xlu0 %1263
        %1265 = vrot.lane.b32.xlu0 %v1243, 64
        %v1266 = vpop.permute.xlu0 %1265
        %1267 = vrot.lane.b32.xlu0 %v1244, 64
        %v1268 = vpop.permute.xlu0 %1267
        %v1271 = vpack.i.b16 %v1254, %v1237
        %v1272 = vshrl.u32 %v1237, 16
        %v1273 = vshrl.u32 %v1254, 16
        %v1274 = vpack.i.b16 %v1273, %v1272
        %v1277 = vpack.i.b16 %v1256, %v1238
        %v1278 = vshrl.u32 %v1238, 16
        %v1279 = vshrl.u32 %v1256, 16
        %v1280 = vpack.i.b16 %v1279, %v1278
        %v1283 = vpack.i.b16 %v1258, %v1239
        %v1284 = vshrl.u32 %v1239, 16
        %v1285 = vshrl.u32 %v1258, 16
        %v1286 = vpack.i.b16 %v1285, %v1284
        %v1289 = vpack.i.b16 %v1260, %v1240
        %v1290 = vshrl.u32 %v1240, 16
        %v1291 = vshrl.u32 %v1260, 16
        %v1292 = vpack.i.b16 %v1291, %v1290
        %v1295 = vpack.i.b16 %v1262, %v1241
        %v1296 = vshrl.u32 %v1241, 16
        %v1297 = vshrl.u32 %v1262, 16
        %v1298 = vpack.i.b16 %v1297, %v1296
        %v1301 = vpack.i.b16 %v1264, %v1242
        %v1302 = vshrl.u32 %v1242, 16
        %v1303 = vshrl.u32 %v1264, 16
        %v1304 = vpack.i.b16 %v1303, %v1302
        %v1307 = vpack.i.b16 %v1266, %v1243
        %v1308 = vshrl.u32 %v1243, 16
        %v1309 = vshrl.u32 %v1266, 16
        %v1310 = vpack.i.b16 %v1309, %v1308
        %v1313 = vpack.i.b16 %v1268, %v1244
        %v1314 = vshrl.u32 %v1244, 16
        %v1315 = vshrl.u32 %v1268, 16
        %v1316 = vpack.i.b16 %v1315, %v1314
        %v1319 = vunpack.c.l.s4 1983009808
        %v1320 = vunpack.c.0.s8 %v1319
        %v1321 = vperm.slane %v1271, %v1320
        %v1322 = vrot.slane %v1321, 4
        %v1323 = vsel %vm618, 0, %v1322
        %v1325 = vunpack.c.l.s4 1934713408
        %v1326 = vunpack.c.0.s8 %v1325
        %v1327 = vperm.slane %v1321, %v1326
        %v1329 = vunpack.c.l.s4 1934713408
        %v1330 = vunpack.c.0.s8 %v1329
        %v1331 = vperm.slane %v1323, %v1330
        %v1332 = vrot.slane %v1327, 4
        %v1333 = vsel %vm618, 0, %v1332
        %v1334 = vrot.slane %v1331, 4
        %v1335 = vsel %vm618, 0, %v1334
        %v1338 = vunpack.c.l.s4 1983009808
        %v1339 = vunpack.c.0.s8 %v1338
        %v1340 = vperm.slane %v1274, %v1339
        %v1341 = vrot.slane %v1340, 4
        %v1342 = vsel %vm618, 0, %v1341
        %v1344 = vunpack.c.l.s4 1934713408
        %v1345 = vunpack.c.0.s8 %v1344
        %v1346 = vperm.slane %v1340, %v1345
        %v1348 = vunpack.c.l.s4 1934713408
        %v1349 = vunpack.c.0.s8 %v1348
        %v1350 = vperm.slane %v1342, %v1349
        %v1351 = vrot.slane %v1346, 4
        %v1352 = vsel %vm618, 0, %v1351
        %v1353 = vrot.slane %v1350, 4
        %v1354 = vsel %vm618, 0, %v1353
        %v1357 = vunpack.c.l.s4 1983009808
        %v1358 = vunpack.c.0.s8 %v1357
        %v1359 = vperm.slane %v1277, %v1358
        %v1360 = vrot.slane %v1359, 4
        %v1361 = vsel %vm618, 0, %v1360
        %v1363 = vunpack.c.l.s4 1934713408
        %v1364 = vunpack.c.0.s8 %v1363
        %v1365 = vperm.slane %v1359, %v1364
        %v1367 = vunpack.c.l.s4 1934713408
        %v1368 = vunpack.c.0.s8 %v1367
        %v1369 = vperm.slane %v1361, %v1368
        %v1370 = vrot.slane %v1365, 4
        %v1371 = vsel %vm618, 0, %v1370
        %v1372 = vrot.slane %v1369, 4
        %v1373 = vsel %vm618, 0, %v1372
        %v1376 = vunpack.c.l.s4 1983009808
        %v1377 = vunpack.c.0.s8 %v1376
        %v1378 = vperm.slane %v1280, %v1377
        %v1379 = vrot.slane %v1378, 4
        %v1380 = vsel %vm618, 0, %v1379
        %v1382 = vunpack.c.l.s4 1934713408
        %v1383 = vunpack.c.0.s8 %v1382
        %v1384 = vperm.slane %v1378, %v1383
        %v1386 = vunpack.c.l.s4 1934713408
        %v1387 = vunpack.c.0.s8 %v1386
        %v1388 = vperm.slane %v1380, %v1387
        %v1389 = vrot.slane %v1384, 4
        %v1390 = vsel %vm618, 0, %v1389
        %v1391 = vrot.slane %v1388, 4
        %v1392 = vsel %vm618, 0, %v1391
        %v1395 = vunpack.c.l.s4 1983009808
        %v1396 = vunpack.c.0.s8 %v1395
        %v1397 = vperm.slane %v1283, %v1396
        %v1398 = vrot.slane %v1397, 4
        %v1399 = vsel %vm618, 0, %v1398
        %v1401 = vunpack.c.l.s4 1934713408
        %v1402 = vunpack.c.0.s8 %v1401
        %v1403 = vperm.slane %v1397, %v1402
        %v1405 = vunpack.c.l.s4 1934713408
        %v1406 = vunpack.c.0.s8 %v1405
        %v1407 = vperm.slane %v1399, %v1406
        %v1408 = vrot.slane %v1403, 4
        %v1409 = vsel %vm618, 0, %v1408
        %v1410 = vrot.slane %v1407, 4
        %v1411 = vsel %vm618, 0, %v1410
        %v1414 = vunpack.c.l.s4 1983009808
        %v1415 = vunpack.c.0.s8 %v1414
        %v1416 = vperm.slane %v1286, %v1415
        %v1417 = vrot.slane %v1416, 4
        %v1418 = vsel %vm618, 0, %v1417
        %v1420 = vunpack.c.l.s4 1934713408
        %v1421 = vunpack.c.0.s8 %v1420
        %v1422 = vperm.slane %v1416, %v1421
        %v1424 = vunpack.c.l.s4 1934713408
        %v1425 = vunpack.c.0.s8 %v1424
        %v1426 = vperm.slane %v1418, %v1425
        %v1427 = vrot.slane %v1422, 4
        %v1428 = vsel %vm618, 0, %v1427
        %v1429 = vrot.slane %v1426, 4
        %v1430 = vsel %vm618, 0, %v1429
        %v1433 = vunpack.c.l.s4 1983009808
        %v1434 = vunpack.c.0.s8 %v1433
        %v1435 = vperm.slane %v1289, %v1434
        %v1436 = vrot.slane %v1435, 4
        %v1437 = vsel %vm618, 0, %v1436
        %v1439 = vunpack.c.l.s4 1934713408
        %v1440 = vunpack.c.0.s8 %v1439
        %v1441 = vperm.slane %v1435, %v1440
        %v1443 = vunpack.c.l.s4 1934713408
        %v1444 = vunpack.c.0.s8 %v1443
        %v1445 = vperm.slane %v1437, %v1444
        %v1446 = vrot.slane %v1441, 4
        %v1447 = vsel %vm618, 0, %v1446
        %v1448 = vrot.slane %v1445, 4
        %v1449 = vsel %vm618, 0, %v1448
        %v1452 = vunpack.c.l.s4 1983009808
        %v1453 = vunpack.c.0.s8 %v1452
        %v1454 = vperm.slane %v1292, %v1453
        %v1455 = vrot.slane %v1454, 4
        %v1456 = vsel %vm618, 0, %v1455
        %v1458 = vunpack.c.l.s4 1934713408
        %v1459 = vunpack.c.0.s8 %v1458
        %v1460 = vperm.slane %v1454, %v1459
        %v1462 = vunpack.c.l.s4 1934713408
        %v1463 = vunpack.c.0.s8 %v1462
        %v1464 = vperm.slane %v1456, %v1463
        %v1465 = vrot.slane %v1460, 4
        %v1466 = vsel %vm618, 0, %v1465
        %v1467 = vrot.slane %v1464, 4
        %v1468 = vsel %vm618, 0, %v1467
        %v1471 = vunpack.c.l.s4 1983009808
        %v1472 = vunpack.c.0.s8 %v1471
        %v1473 = vperm.slane %v1295, %v1472
        %v1474 = vrot.slane %v1473, 4
        %v1475 = vsel %vm618, 0, %v1474
        %v1477 = vunpack.c.l.s4 1934713408
        %v1478 = vunpack.c.0.s8 %v1477
        %v1479 = vperm.slane %v1473, %v1478
        %v1481 = vunpack.c.l.s4 1934713408
        %v1482 = vunpack.c.0.s8 %v1481
        %v1483 = vperm.slane %v1475, %v1482
        %v1484 = vrot.slane %v1479, 4
        %v1485 = vsel %vm618, 0, %v1484
        %v1486 = vrot.slane %v1483, 4
        %v1487 = vsel %vm618, 0, %v1486
        %v1490 = vunpack.c.l.s4 1983009808
        %v1491 = vunpack.c.0.s8 %v1490
        %v1492 = vperm.slane %v1298, %v1491
        %v1493 = vrot.slane %v1492, 4
        %v1494 = vsel %vm618, 0, %v1493
        %v1496 = vunpack.c.l.s4 1934713408
        %v1497 = vunpack.c.0.s8 %v1496
        %v1498 = vperm.slane %v1492, %v1497
        %v1500 = vunpack.c.l.s4 1934713408
        %v1501 = vunpack.c.0.s8 %v1500
        %v1502 = vperm.slane %v1494, %v1501
        %v1503 = vrot.slane %v1498, 4
        %v1504 = vsel %vm618, 0, %v1503
        %v1505 = vrot.slane %v1502, 4
        %v1506 = vsel %vm618, 0, %v1505
        %v1509 = vunpack.c.l.s4 1983009808
        %v1510 = vunpack.c.0.s8 %v1509
        %v1511 = vperm.slane %v1301, %v1510
        %v1512 = vrot.slane %v1511, 4
        %v1513 = vsel %vm618, 0, %v1512
        %v1515 = vunpack.c.l.s4 1934713408
        %v1516 = vunpack.c.0.s8 %v1515
        %v1517 = vperm.slane %v1511, %v1516
        %v1519 = vunpack.c.l.s4 1934713408
        %v1520 = vunpack.c.0.s8 %v1519
        %v1521 = vperm.slane %v1513, %v1520
        %v1522 = vrot.slane %v1517, 4
        %v1523 = vsel %vm618, 0, %v1522
        %v1524 = vrot.slane %v1521, 4
        %v1525 = vsel %vm618, 0, %v1524
        %v1528 = vunpack.c.l.s4 1983009808
        %v1529 = vunpack.c.0.s8 %v1528
        %v1530 = vperm.slane %v1304, %v1529
        %v1531 = vrot.slane %v1530, 4
        %v1532 = vsel %vm618, 0, %v1531
        %v1534 = vunpack.c.l.s4 1934713408
        %v1535 = vunpack.c.0.s8 %v1534
        %v1536 = vperm.slane %v1530, %v1535
        %v1538 = vunpack.c.l.s4 1934713408
        %v1539 = vunpack.c.0.s8 %v1538
        %v1540 = vperm.slane %v1532, %v1539
        %v1541 = vrot.slane %v1536, 4
        %v1542 = vsel %vm618, 0, %v1541
        %v1543 = vrot.slane %v1540, 4
        %v1544 = vsel %vm618, 0, %v1543
        %v1547 = vunpack.c.l.s4 1983009808
        %v1548 = vunpack.c.0.s8 %v1547
        %v1549 = vperm.slane %v1307, %v1548
        %v1550 = vrot.slane %v1549, 4
        %v1551 = vsel %vm618, 0, %v1550
        %v1553 = vunpack.c.l.s4 1934713408
        %v1554 = vunpack.c.0.s8 %v1553
        %v1555 = vperm.slane %v1549, %v1554
        %v1557 = vunpack.c.l.s4 1934713408
        %v1558 = vunpack.c.0.s8 %v1557
        %v1559 = vperm.slane %v1551, %v1558
        %v1560 = vrot.slane %v1555, 4
        %v1561 = vsel %vm618, 0, %v1560
        %v1562 = vrot.slane %v1559, 4
        %v1563 = vsel %vm618, 0, %v1562
        %v1566 = vunpack.c.l.s4 1983009808
        %v1567 = vunpack.c.0.s8 %v1566
        %v1568 = vperm.slane %v1310, %v1567
        %v1569 = vrot.slane %v1568, 4
        %v1570 = vsel %vm618, 0, %v1569
        %v1572 = vunpack.c.l.s4 1934713408
        %v1573 = vunpack.c.0.s8 %v1572
        %v1574 = vperm.slane %v1568, %v1573
        %v1576 = vunpack.c.l.s4 1934713408
        %v1577 = vunpack.c.0.s8 %v1576
        %v1578 = vperm.slane %v1570, %v1577
        %v1579 = vrot.slane %v1574, 4
        %v1580 = vsel %vm618, 0, %v1579
        %v1581 = vrot.slane %v1578, 4
        %v1582 = vsel %vm618, 0, %v1581
        %v1585 = vunpack.c.l.s4 1983009808
        %v1586 = vunpack.c.0.s8 %v1585
        %v1587 = vperm.slane %v1313, %v1586
        %v1588 = vrot.slane %v1587, 4
        %v1589 = vsel %vm618, 0, %v1588
        %v1591 = vunpack.c.l.s4 1934713408
        %v1592 = vunpack.c.0.s8 %v1591
        %v1593 = vperm.slane %v1587, %v1592
        %v1595 = vunpack.c.l.s4 1934713408
        %v1596 = vunpack.c.0.s8 %v1595
        %v1597 = vperm.slane %v1589, %v1596
        %v1598 = vrot.slane %v1593, 4
        %v1599 = vsel %vm618, 0, %v1598
        %v1600 = vrot.slane %v1597, 4
        %v1601 = vsel %vm618, 0, %v1600
        %v1604 = vunpack.c.l.s4 1983009808
        %v1605 = vunpack.c.0.s8 %v1604
        %v1606 = vperm.slane %v1316, %v1605
        %v1607 = vrot.slane %v1606, 4
        %v1608 = vsel %vm618, 0, %v1607
        %v1610 = vunpack.c.l.s4 1934713408
        %v1611 = vunpack.c.0.s8 %v1610
        %v1612 = vperm.slane %v1606, %v1611
        %v1614 = vunpack.c.l.s4 1934713408
        %v1615 = vunpack.c.0.s8 %v1614
        %v1616 = vperm.slane %v1608, %v1615
        %v1617 = vrot.slane %v1612, 4
        %v1618 = vsel %vm618, 0, %v1617
        %v1619 = vrot.slane %v1616, 4
        %v1620 = vsel %vm618, 0, %v1619
        %v1621 = vsel %vm618, %v1334, %v1327
        %v1623 = vunpack.c.l.s4 1983009808
        %v1624 = vunpack.c.0.s8 %v1623
        %v1625 = vperm.slane %v1621, %v1624
        %v1626 = vrot.slane %v1335, 4
        %v1627 = vsel %vm618, %v1626, %v1333
        %v1629 = vunpack.c.l.s4 1983009808
        %v1630 = vunpack.c.0.s8 %v1629
        %v1631 = vperm.slane %v1627, %v1630
        %v1632 = vrot.slane %v1631, 4
        %v1633 = vsel %vm618, %v1632, %v1625
        %v1635 = vunpack.c.l.s4 1934713408
        %v1636 = vunpack.c.0.s8 %v1635
        %v1637 = vperm.slane %v1633, %v1636
        %v1638 = vsel %vm618, %v1353, %v1346
        %v1640 = vunpack.c.l.s4 1983009808
        %v1641 = vunpack.c.0.s8 %v1640
        %v1642 = vperm.slane %v1638, %v1641
        %v1643 = vrot.slane %v1354, 4
        %v1644 = vsel %vm618, %v1643, %v1352
        %v1646 = vunpack.c.l.s4 1983009808
        %v1647 = vunpack.c.0.s8 %v1646
        %v1648 = vperm.slane %v1644, %v1647
        %v1649 = vrot.slane %v1648, 4
        %v1650 = vsel %vm618, %v1649, %v1642
        %v1652 = vunpack.c.l.s4 1934713408
        %v1653 = vunpack.c.0.s8 %v1652
        %v1654 = vperm.slane %v1650, %v1653
        %v1655 = vsel %vm618, %v1372, %v1365
        %v1657 = vunpack.c.l.s4 1983009808
        %v1658 = vunpack.c.0.s8 %v1657
        %v1659 = vperm.slane %v1655, %v1658
        %v1660 = vrot.slane %v1373, 4
        %v1661 = vsel %vm618, %v1660, %v1371
        %v1663 = vunpack.c.l.s4 1983009808
        %v1664 = vunpack.c.0.s8 %v1663
        %v1665 = vperm.slane %v1661, %v1664
        %v1666 = vrot.slane %v1665, 4
        %v1667 = vsel %vm618, %v1666, %v1659
        %v1669 = vunpack.c.l.s4 1934713408
        %v1670 = vunpack.c.0.s8 %v1669
        %v1671 = vperm.slane %v1667, %v1670
        %v1672 = vsel %vm618, %v1391, %v1384
        %v1674 = vunpack.c.l.s4 1983009808
        %v1675 = vunpack.c.0.s8 %v1674
        %v1676 = vperm.slane %v1672, %v1675
        %v1677 = vrot.slane %v1392, 4
        %v1678 = vsel %vm618, %v1677, %v1390
        %v1680 = vunpack.c.l.s4 1983009808
        %v1681 = vunpack.c.0.s8 %v1680
        %v1682 = vperm.slane %v1678, %v1681
        %v1683 = vrot.slane %v1682, 4
        %v1684 = vsel %vm618, %v1683, %v1676
        %v1686 = vunpack.c.l.s4 1934713408
        %v1687 = vunpack.c.0.s8 %v1686
        %v1688 = vperm.slane %v1684, %v1687
        %v1689 = vsel %vm618, %v1410, %v1403
        %v1691 = vunpack.c.l.s4 1983009808
        %v1692 = vunpack.c.0.s8 %v1691
        %v1693 = vperm.slane %v1689, %v1692
        %v1694 = vrot.slane %v1411, 4
        %v1695 = vsel %vm618, %v1694, %v1409
        %v1697 = vunpack.c.l.s4 1983009808
        %v1698 = vunpack.c.0.s8 %v1697
        %v1699 = vperm.slane %v1695, %v1698
        %v1700 = vrot.slane %v1699, 4
        %v1701 = vsel %vm618, %v1700, %v1693
        %v1703 = vunpack.c.l.s4 1934713408
        %v1704 = vunpack.c.0.s8 %v1703
        %v1705 = vperm.slane %v1701, %v1704
        %v1706 = vsel %vm618, %v1429, %v1422
        %v1708 = vunpack.c.l.s4 1983009808
        %v1709 = vunpack.c.0.s8 %v1708
        %v1710 = vperm.slane %v1706, %v1709
        %v1711 = vrot.slane %v1430, 4
        %v1712 = vsel %vm618, %v1711, %v1428
        %v1714 = vunpack.c.l.s4 1983009808
        %v1715 = vunpack.c.0.s8 %v1714
        %v1716 = vperm.slane %v1712, %v1715
        %v1717 = vrot.slane %v1716, 4
        %v1718 = vsel %vm618, %v1717, %v1710
        %v1720 = vunpack.c.l.s4 1934713408
        %v1721 = vunpack.c.0.s8 %v1720
        %v1722 = vperm.slane %v1718, %v1721
        %v1723 = vsel %vm618, %v1448, %v1441
        %v1725 = vunpack.c.l.s4 1983009808
        %v1726 = vunpack.c.0.s8 %v1725
        %v1727 = vperm.slane %v1723, %v1726
        %v1728 = vrot.slane %v1449, 4
        %v1729 = vsel %vm618, %v1728, %v1447
        %v1731 = vunpack.c.l.s4 1983009808
        %v1732 = vunpack.c.0.s8 %v1731
        %v1733 = vperm.slane %v1729, %v1732
        %v1734 = vrot.slane %v1733, 4
        %v1735 = vsel %vm618, %v1734, %v1727
        %v1737 = vunpack.c.l.s4 1934713408
        %v1738 = vunpack.c.0.s8 %v1737
        %v1739 = vperm.slane %v1735, %v1738
        %v1740 = vsel %vm618, %v1467, %v1460
        %v1742 = vunpack.c.l.s4 1983009808
        %v1743 = vunpack.c.0.s8 %v1742
        %v1744 = vperm.slane %v1740, %v1743
        %v1745 = vrot.slane %v1468, 4
        %v1746 = vsel %vm618, %v1745, %v1466
        %v1748 = vunpack.c.l.s4 1983009808
        %v1749 = vunpack.c.0.s8 %v1748
        %v1750 = vperm.slane %v1746, %v1749
        %v1751 = vrot.slane %v1750, 4
        %v1752 = vsel %vm618, %v1751, %v1744
        %v1754 = vunpack.c.l.s4 1934713408
        %v1755 = vunpack.c.0.s8 %v1754
        %v1756 = vperm.slane %v1752, %v1755
        %v1757 = vsel %vm618, %v1486, %v1479
        %v1759 = vunpack.c.l.s4 1983009808
        %v1760 = vunpack.c.0.s8 %v1759
        %v1761 = vperm.slane %v1757, %v1760
        %v1762 = vrot.slane %v1487, 4
        %v1763 = vsel %vm618, %v1762, %v1485
        %v1765 = vunpack.c.l.s4 1983009808
        %v1766 = vunpack.c.0.s8 %v1765
        %v1767 = vperm.slane %v1763, %v1766
        %v1768 = vrot.slane %v1767, 4
        %v1769 = vsel %vm618, %v1768, %v1761
        %v1771 = vunpack.c.l.s4 1934713408
        %v1772 = vunpack.c.0.s8 %v1771
        %v1773 = vperm.slane %v1769, %v1772
        %v1774 = vsel %vm618, %v1505, %v1498
        %v1776 = vunpack.c.l.s4 1983009808
        %v1777 = vunpack.c.0.s8 %v1776
        %v1778 = vperm.slane %v1774, %v1777
        %v1779 = vrot.slane %v1506, 4
        %v1780 = vsel %vm618, %v1779, %v1504
        %v1782 = vunpack.c.l.s4 1983009808
        %v1783 = vunpack.c.0.s8 %v1782
        %v1784 = vperm.slane %v1780, %v1783
        %v1785 = vrot.slane %v1784, 4
        %v1786 = vsel %vm618, %v1785, %v1778
        %v1788 = vunpack.c.l.s4 1934713408
        %v1789 = vunpack.c.0.s8 %v1788
        %v1790 = vperm.slane %v1786, %v1789
        %v1791 = vsel %vm618, %v1524, %v1517
        %v1793 = vunpack.c.l.s4 1983009808
        %v1794 = vunpack.c.0.s8 %v1793
        %v1795 = vperm.slane %v1791, %v1794
        %v1796 = vrot.slane %v1525, 4
        %v1797 = vsel %vm618, %v1796, %v1523
        %v1799 = vunpack.c.l.s4 1983009808
        %v1800 = vunpack.c.0.s8 %v1799
        %v1801 = vperm.slane %v1797, %v1800
        %v1802 = vrot.slane %v1801, 4
        %v1803 = vsel %vm618, %v1802, %v1795
        %v1805 = vunpack.c.l.s4 1934713408
        %v1806 = vunpack.c.0.s8 %v1805
        %v1807 = vperm.slane %v1803, %v1806
        %v1808 = vsel %vm618, %v1543, %v1536
        %v1810 = vunpack.c.l.s4 1983009808
        %v1811 = vunpack.c.0.s8 %v1810
        %v1812 = vperm.slane %v1808, %v1811
        %v1813 = vrot.slane %v1544, 4
        %v1814 = vsel %vm618, %v1813, %v1542
        %v1816 = vunpack.c.l.s4 1983009808
        %v1817 = vunpack.c.0.s8 %v1816
        %v1818 = vperm.slane %v1814, %v1817
        %v1819 = vrot.slane %v1818, 4
        %v1820 = vsel %vm618, %v1819, %v1812
        %v1822 = vunpack.c.l.s4 1934713408
        %v1823 = vunpack.c.0.s8 %v1822
        %v1824 = vperm.slane %v1820, %v1823
        %v1825 = vsel %vm618, %v1562, %v1555
        %v1827 = vunpack.c.l.s4 1983009808
        %v1828 = vunpack.c.0.s8 %v1827
        %v1829 = vperm.slane %v1825, %v1828
        %v1830 = vrot.slane %v1563, 4
        %v1831 = vsel %vm618, %v1830, %v1561
        %v1833 = vunpack.c.l.s4 1983009808
        %v1834 = vunpack.c.0.s8 %v1833
        %v1835 = vperm.slane %v1831, %v1834
        %v1836 = vrot.slane %v1835, 4
        %v1837 = vsel %vm618, %v1836, %v1829
        %v1839 = vunpack.c.l.s4 1934713408
        %v1840 = vunpack.c.0.s8 %v1839
        %v1841 = vperm.slane %v1837, %v1840
        %v1842 = vsel %vm618, %v1581, %v1574
        %v1844 = vunpack.c.l.s4 1983009808
        %v1845 = vunpack.c.0.s8 %v1844
        %v1846 = vperm.slane %v1842, %v1845
        %v1847 = vrot.slane %v1582, 4
        %v1848 = vsel %vm618, %v1847, %v1580
        %v1850 = vunpack.c.l.s4 1983009808
        %v1851 = vunpack.c.0.s8 %v1850
        %v1852 = vperm.slane %v1848, %v1851
        %v1853 = vrot.slane %v1852, 4
        %v1854 = vsel %vm618, %v1853, %v1846
        %v1856 = vunpack.c.l.s4 1934713408
        %v1857 = vunpack.c.0.s8 %v1856
        %v1858 = vperm.slane %v1854, %v1857
        %v1859 = vsel %vm618, %v1600, %v1593
        %v1861 = vunpack.c.l.s4 1983009808
        %v1862 = vunpack.c.0.s8 %v1861
        %v1863 = vperm.slane %v1859, %v1862
        %v1864 = vrot.slane %v1601, 4
        %v1865 = vsel %vm618, %v1864, %v1599
        %v1867 = vunpack.c.l.s4 1983009808
        %v1868 = vunpack.c.0.s8 %v1867
        %v1869 = vperm.slane %v1865, %v1868
        %v1870 = vrot.slane %v1869, 4
        %v1871 = vsel %vm618, %v1870, %v1863
        %v1873 = vunpack.c.l.s4 1934713408
        %v1874 = vunpack.c.0.s8 %v1873
        %v1875 = vperm.slane %v1871, %v1874
        %v1876 = vsel %vm618, %v1619, %v1612
        %v1878 = vunpack.c.l.s4 1983009808
        %v1879 = vunpack.c.0.s8 %v1878
        %v1880 = vperm.slane %v1876, %v1879
        %v1881 = vrot.slane %v1620, 4
        %v1882 = vsel %vm618, %v1881, %v1618
        %v1884 = vunpack.c.l.s4 1983009808
        %v1885 = vunpack.c.0.s8 %v1884
        %v1886 = vperm.slane %v1882, %v1885
        %v1887 = vrot.slane %v1886, 4
        %v1888 = vsel %vm618, %v1887, %v1880
        %v1890 = vunpack.c.l.s4 1934713408
        %v1891 = vunpack.c.0.s8 %v1890
        %v1892 = vperm.slane %v1888, %v1891
        %v1895 = vpack.i.b16 %v1654, %v1637
        %v1896 = vshrl.u32 %v1637, 16
        %v1897 = vshrl.u32 %v1654, 16
        %v1898 = vpack.i.b16 %v1897, %v1896
        %v1901 = vpack.i.b16 %v1688, %v1671
        %v1902 = vshrl.u32 %v1671, 16
        %v1903 = vshrl.u32 %v1688, 16
        %v1904 = vpack.i.b16 %v1903, %v1902
        %v1907 = vpack.i.b16 %v1722, %v1705
        %v1908 = vshrl.u32 %v1705, 16
        %v1909 = vshrl.u32 %v1722, 16
        %v1910 = vpack.i.b16 %v1909, %v1908
        %v1913 = vpack.i.b16 %v1756, %v1739
        %v1914 = vshrl.u32 %v1739, 16
        %v1915 = vshrl.u32 %v1756, 16
        %v1916 = vpack.i.b16 %v1915, %v1914
        %v1919 = vpack.i.b16 %v1790, %v1773
        %v1920 = vshrl.u32 %v1773, 16
        %v1921 = vshrl.u32 %v1790, 16
        %v1922 = vpack.i.b16 %v1921, %v1920
        %v1925 = vpack.i.b16 %v1824, %v1807
        %v1926 = vshrl.u32 %v1807, 16
        %v1927 = vshrl.u32 %v1824, 16
        %v1928 = vpack.i.b16 %v1927, %v1926
        %v1931 = vpack.i.b16 %v1858, %v1841
        %v1932 = vshrl.u32 %v1841, 16
        %v1933 = vshrl.u32 %v1858, 16
        %v1934 = vpack.i.b16 %v1933, %v1932
        %v1937 = vpack.i.b16 %v1892, %v1875
        %v1938 = vshrl.u32 %v1875, 16
        %v1939 = vshrl.u32 %v1892, 16
        %v1940 = vpack.i.b16 %v1939, %v1938
        %v1941 = vld [vmem:[%s431] sm:$0xf]
        %v1942 = vld [vmem:[%s431 + $0x4] sm:$0xf]
        %v1943 = vld [vmem:[%s431 + $0x8] sm:$0xf]
        %v1944 = vld [vmem:[%s431 + $0xc] sm:$0xf]
        %v1945 = vld [vmem:[%s431 + $0x10] sm:$0xf]
        %v1946 = vld [vmem:[%s431 + $0x14] sm:$0xf]
        %v1947 = vld [vmem:[%s431 + $0x18] sm:$0xf]
        %v1948 = vld [vmem:[%s431 + $0x1c] sm:$0xf]
        %1957 = vrot.lane.b32.xlu0 %v1941, 64
        %v1958 = vpop.permute.xlu0 %1957
        %1959 = vrot.lane.b32.xlu0 %v1942, 64
        %v1960 = vpop.permute.xlu0 %1959
        %1961 = vrot.lane.b32.xlu0 %v1943, 64
        %v1962 = vpop.permute.xlu0 %1961
        %1963 = vrot.lane.b32.xlu0 %v1944, 64
        %v1964 = vpop.permute.xlu0 %1963
        %1965 = vrot.lane.b32.xlu0 %v1945, 64
        %v1966 = vpop.permute.xlu0 %1965
        %1967 = vrot.lane.b32.xlu0 %v1946, 64
        %v1968 = vpop.permute.xlu0 %1967
        %1969 = vrot.lane.b32.xlu0 %v1947, 64
        %v1970 = vpop.permute.xlu0 %1969
        %1971 = vrot.lane.b32.xlu0 %v1948, 64
        %v1972 = vpop.permute.xlu0 %1971
        %v1975 = vpack.i.b16 %v1958, %v1941
        %v1976 = vshrl.u32 %v1941, 16
        %v1977 = vshrl.u32 %v1958, 16
        %v1978 = vpack.i.b16 %v1977, %v1976
        %v1981 = vpack.i.b16 %v1960, %v1942
        %v1982 = vshrl.u32 %v1942, 16
        %v1983 = vshrl.u32 %v1960, 16
        %v1984 = vpack.i.b16 %v1983, %v1982
        %v1987 = vpack.i.b16 %v1962, %v1943
        %v1988 = vshrl.u32 %v1943, 16
        %v1989 = vshrl.u32 %v1962, 16
        %v1990 = vpack.i.b16 %v1989, %v1988
        %v1993 = vpack.i.b16 %v1964, %v1944
        %v1994 = vshrl.u32 %v1944, 16
        %v1995 = vshrl.u32 %v1964, 16
        %v1996 = vpack.i.b16 %v1995, %v1994
        %v1999 = vpack.i.b16 %v1966, %v1945
        %v2000 = vshrl.u32 %v1945, 16
        %v2001 = vshrl.u32 %v1966, 16
        %v2002 = vpack.i.b16 %v2001, %v2000
        %v2005 = vpack.i.b16 %v1968, %v1946
        %v2006 = vshrl.u32 %v1946, 16
        %v2007 = vshrl.u32 %v1968, 16
        %v2008 = vpack.i.b16 %v2007, %v2006
        %v2011 = vpack.i.b16 %v1970, %v1947
        %v2012 = vshrl.u32 %v1947, 16
        %v2013 = vshrl.u32 %v1970, 16
        %v2014 = vpack.i.b16 %v2013, %v2012
        %v2017 = vpack.i.b16 %v1972, %v1948
        %v2018 = vshrl.u32 %v1948, 16
        %v2019 = vshrl.u32 %v1972, 16
        %v2020 = vpack.i.b16 %v2019, %v2018
        %v2023 = vunpack.c.l.s4 1983009808
        %v2024 = vunpack.c.0.s8 %v2023
        %v2025 = vperm.slane %v1975, %v2024
        %v2026 = vrot.slane %v2025, 4
        %v2027 = vsel %vm618, 0, %v2026
        %v2029 = vunpack.c.l.s4 1934713408
        %v2030 = vunpack.c.0.s8 %v2029
        %v2031 = vperm.slane %v2025, %v2030
        %v2033 = vunpack.c.l.s4 1934713408
        %v2034 = vunpack.c.0.s8 %v2033
        %v2035 = vperm.slane %v2027, %v2034
        %v2036 = vrot.slane %v2031, 4
        %v2037 = vsel %vm618, 0, %v2036
        %v2038 = vrot.slane %v2035, 4
        %v2039 = vsel %vm618, 0, %v2038
        %v2042 = vunpack.c.l.s4 1983009808
        %v2043 = vunpack.c.0.s8 %v2042
        %v2044 = vperm.slane %v1978, %v2043
        %v2045 = vrot.slane %v2044, 4
        %v2046 = vsel %vm618, 0, %v2045
        %v2048 = vunpack.c.l.s4 1934713408
        %v2049 = vunpack.c.0.s8 %v2048
        %v2050 = vperm.slane %v2044, %v2049
        %v2052 = vunpack.c.l.s4 1934713408
        %v2053 = vunpack.c.0.s8 %v2052
        %v2054 = vperm.slane %v2046, %v2053
        %v2055 = vrot.slane %v2050, 4
        %v2056 = vsel %vm618, 0, %v2055
        %v2057 = vrot.slane %v2054, 4
        %v2058 = vsel %vm618, 0, %v2057
        %v2061 = vunpack.c.l.s4 1983009808
        %v2062 = vunpack.c.0.s8 %v2061
        %v2063 = vperm.slane %v1981, %v2062
        %v2064 = vrot.slane %v2063, 4
        %v2065 = vsel %vm618, 0, %v2064
        %v2067 = vunpack.c.l.s4 1934713408
        %v2068 = vunpack.c.0.s8 %v2067
        %v2069 = vperm.slane %v2063, %v2068
        %v2071 = vunpack.c.l.s4 1934713408
        %v2072 = vunpack.c.0.s8 %v2071
        %v2073 = vperm.slane %v2065, %v2072
        %v2074 = vrot.slane %v2069, 4
        %v2075 = vsel %vm618, 0, %v2074
        %v2076 = vrot.slane %v2073, 4
        %v2077 = vsel %vm618, 0, %v2076
        %v2080 = vunpack.c.l.s4 1983009808
        %v2081 = vunpack.c.0.s8 %v2080
        %v2082 = vperm.slane %v1984, %v2081
        %v2083 = vrot.slane %v2082, 4
        %v2084 = vsel %vm618, 0, %v2083
        %v2086 = vunpack.c.l.s4 1934713408
        %v2087 = vunpack.c.0.s8 %v2086
        %v2088 = vperm.slane %v2082, %v2087
        %v2090 = vunpack.c.l.s4 1934713408
        %v2091 = vunpack.c.0.s8 %v2090
        %v2092 = vperm.slane %v2084, %v2091
        %v2093 = vrot.slane %v2088, 4
        %v2094 = vsel %vm618, 0, %v2093
        %v2095 = vrot.slane %v2092, 4
        %v2096 = vsel %vm618, 0, %v2095
        %v2099 = vunpack.c.l.s4 1983009808
        %v2100 = vunpack.c.0.s8 %v2099
        %v2101 = vperm.slane %v1987, %v2100
        %v2102 = vrot.slane %v2101, 4
        %v2103 = vsel %vm618, 0, %v2102
        %v2105 = vunpack.c.l.s4 1934713408
        %v2106 = vunpack.c.0.s8 %v2105
        %v2107 = vperm.slane %v2101, %v2106
        %v2109 = vunpack.c.l.s4 1934713408
        %v2110 = vunpack.c.0.s8 %v2109
        %v2111 = vperm.slane %v2103, %v2110
        %v2112 = vrot.slane %v2107, 4
        %v2113 = vsel %vm618, 0, %v2112
        %v2114 = vrot.slane %v2111, 4
        %v2115 = vsel %vm618, 0, %v2114
        %v2118 = vunpack.c.l.s4 1983009808
        %v2119 = vunpack.c.0.s8 %v2118
        %v2120 = vperm.slane %v1990, %v2119
        %v2121 = vrot.slane %v2120, 4
        %v2122 = vsel %vm618, 0, %v2121
        %v2124 = vunpack.c.l.s4 1934713408
        %v2125 = vunpack.c.0.s8 %v2124
        %v2126 = vperm.slane %v2120, %v2125
        %v2128 = vunpack.c.l.s4 1934713408
        %v2129 = vunpack.c.0.s8 %v2128
        %v2130 = vperm.slane %v2122, %v2129
        %v2131 = vrot.slane %v2126, 4
        %v2132 = vsel %vm618, 0, %v2131
        %v2133 = vrot.slane %v2130, 4
        %v2134 = vsel %vm618, 0, %v2133
        %v2137 = vunpack.c.l.s4 1983009808
        %v2138 = vunpack.c.0.s8 %v2137
        %v2139 = vperm.slane %v1993, %v2138
        %v2140 = vrot.slane %v2139, 4
        %v2141 = vsel %vm618, 0, %v2140
        %v2143 = vunpack.c.l.s4 1934713408
        %v2144 = vunpack.c.0.s8 %v2143
        %v2145 = vperm.slane %v2139, %v2144
        %v2147 = vunpack.c.l.s4 1934713408
        %v2148 = vunpack.c.0.s8 %v2147
        %v2149 = vperm.slane %v2141, %v2148
        %v2150 = vrot.slane %v2145, 4
        %v2151 = vsel %vm618, 0, %v2150
        %v2152 = vrot.slane %v2149, 4
        %v2153 = vsel %vm618, 0, %v2152
        %v2156 = vunpack.c.l.s4 1983009808
        %v2157 = vunpack.c.0.s8 %v2156
        %v2158 = vperm.slane %v1996, %v2157
        %v2159 = vrot.slane %v2158, 4
        %v2160 = vsel %vm618, 0, %v2159
        %v2162 = vunpack.c.l.s4 1934713408
        %v2163 = vunpack.c.0.s8 %v2162
        %v2164 = vperm.slane %v2158, %v2163
        %v2166 = vunpack.c.l.s4 1934713408
        %v2167 = vunpack.c.0.s8 %v2166
        %v2168 = vperm.slane %v2160, %v2167
        %v2169 = vrot.slane %v2164, 4
        %v2170 = vsel %vm618, 0, %v2169
        %v2171 = vrot.slane %v2168, 4
        %v2172 = vsel %vm618, 0, %v2171
        %v2175 = vunpack.c.l.s4 1983009808
        %v2176 = vunpack.c.0.s8 %v2175
        %v2177 = vperm.slane %v1999, %v2176
        %v2178 = vrot.slane %v2177, 4
        %v2179 = vsel %vm618, 0, %v2178
        %v2181 = vunpack.c.l.s4 1934713408
        %v2182 = vunpack.c.0.s8 %v2181
        %v2183 = vperm.slane %v2177, %v2182
        %v2185 = vunpack.c.l.s4 1934713408
        %v2186 = vunpack.c.0.s8 %v2185
        %v2187 = vperm.slane %v2179, %v2186
        %v2188 = vrot.slane %v2183, 4
        %v2189 = vsel %vm618, 0, %v2188
        %v2190 = vrot.slane %v2187, 4
        %v2191 = vsel %vm618, 0, %v2190
        %v2194 = vunpack.c.l.s4 1983009808
        %v2195 = vunpack.c.0.s8 %v2194
        %v2196 = vperm.slane %v2002, %v2195
        %v2197 = vrot.slane %v2196, 4
        %v2198 = vsel %vm618, 0, %v2197
        %v2200 = vunpack.c.l.s4 1934713408
        %v2201 = vunpack.c.0.s8 %v2200
        %v2202 = vperm.slane %v2196, %v2201
        %v2204 = vunpack.c.l.s4 1934713408
        %v2205 = vunpack.c.0.s8 %v2204
        %v2206 = vperm.slane %v2198, %v2205
        %v2207 = vrot.slane %v2202, 4
        %v2208 = vsel %vm618, 0, %v2207
        %v2209 = vrot.slane %v2206, 4
        %v2210 = vsel %vm618, 0, %v2209
        %v2213 = vunpack.c.l.s4 1983009808
        %v2214 = vunpack.c.0.s8 %v2213
        %v2215 = vperm.slane %v2005, %v2214
        %v2216 = vrot.slane %v2215, 4
        %v2217 = vsel %vm618, 0, %v2216
        %v2219 = vunpack.c.l.s4 1934713408
        %v2220 = vunpack.c.0.s8 %v2219
        %v2221 = vperm.slane %v2215, %v2220
        %v2223 = vunpack.c.l.s4 1934713408
        %v2224 = vunpack.c.0.s8 %v2223
        %v2225 = vperm.slane %v2217, %v2224
        %v2226 = vrot.slane %v2221, 4
        %v2227 = vsel %vm618, 0, %v2226
        %v2228 = vrot.slane %v2225, 4
        %v2229 = vsel %vm618, 0, %v2228
        %v2232 = vunpack.c.l.s4 1983009808
        %v2233 = vunpack.c.0.s8 %v2232
        %v2234 = vperm.slane %v2008, %v2233
        %v2235 = vrot.slane %v2234, 4
        %v2236 = vsel %vm618, 0, %v2235
        %v2238 = vunpack.c.l.s4 1934713408
        %v2239 = vunpack.c.0.s8 %v2238
        %v2240 = vperm.slane %v2234, %v2239
        %v2242 = vunpack.c.l.s4 1934713408
        %v2243 = vunpack.c.0.s8 %v2242
        %v2244 = vperm.slane %v2236, %v2243
        %v2245 = vrot.slane %v2240, 4
        %v2246 = vsel %vm618, 0, %v2245
        %v2247 = vrot.slane %v2244, 4
        %v2248 = vsel %vm618, 0, %v2247
        %v2251 = vunpack.c.l.s4 1983009808
        %v2252 = vunpack.c.0.s8 %v2251
        %v2253 = vperm.slane %v2011, %v2252
        %v2254 = vrot.slane %v2253, 4
        %v2255 = vsel %vm618, 0, %v2254
        %v2257 = vunpack.c.l.s4 1934713408
        %v2258 = vunpack.c.0.s8 %v2257
        %v2259 = vperm.slane %v2253, %v2258
        %v2261 = vunpack.c.l.s4 1934713408
        %v2262 = vunpack.c.0.s8 %v2261
        %v2263 = vperm.slane %v2255, %v2262
        %v2264 = vrot.slane %v2259, 4
        %v2265 = vsel %vm618, 0, %v2264
        %v2266 = vrot.slane %v2263, 4
        %v2267 = vsel %vm618, 0, %v2266
        %v2270 = vunpack.c.l.s4 1983009808
        %v2271 = vunpack.c.0.s8 %v2270
        %v2272 = vperm.slane %v2014, %v2271
        %v2273 = vrot.slane %v2272, 4
        %v2274 = vsel %vm618, 0, %v2273
        %v2276 = vunpack.c.l.s4 1934713408
        %v2277 = vunpack.c.0.s8 %v2276
        %v2278 = vperm.slane %v2272, %v2277
        %v2280 = vunpack.c.l.s4 1934713408
        %v2281 = vunpack.c.0.s8 %v2280
        %v2282 = vperm.slane %v2274, %v2281
        %v2283 = vrot.slane %v2278, 4
        %v2284 = vsel %vm618, 0, %v2283
        %v2285 = vrot.slane %v2282, 4
        %v2286 = vsel %vm618, 0, %v2285
        %v2289 = vunpack.c.l.s4 1983009808
        %v2290 = vunpack.c.0.s8 %v2289
        %v2291 = vperm.slane %v2017, %v2290
        %v2292 = vrot.slane %v2291, 4
        %v2293 = vsel %vm618, 0, %v2292
        %v2295 = vunpack.c.l.s4 1934713408
        %v2296 = vunpack.c.0.s8 %v2295
        %v2297 = vperm.slane %v2291, %v2296
        %v2299 = vunpack.c.l.s4 1934713408
        %v2300 = vunpack.c.0.s8 %v2299
        %v2301 = vperm.slane %v2293, %v2300
        %v2302 = vrot.slane %v2297, 4
        %v2303 = vsel %vm618, 0, %v2302
        %v2304 = vrot.slane %v2301, 4
        %v2305 = vsel %vm618, 0, %v2304
        %v2308 = vunpack.c.l.s4 1983009808
        %v2309 = vunpack.c.0.s8 %v2308
        %v2310 = vperm.slane %v2020, %v2309
        %v2311 = vrot.slane %v2310, 4
        %v2312 = vsel %vm618, 0, %v2311
        %v2314 = vunpack.c.l.s4 1934713408
        %v2315 = vunpack.c.0.s8 %v2314
        %v2316 = vperm.slane %v2310, %v2315
        %v2318 = vunpack.c.l.s4 1934713408
        %v2319 = vunpack.c.0.s8 %v2318
        %v2320 = vperm.slane %v2312, %v2319
        %v2321 = vrot.slane %v2316, 4
        %v2322 = vsel %vm618, 0, %v2321
        %v2323 = vrot.slane %v2320, 4
        %v2324 = vsel %vm618, 0, %v2323
        %v2325 = vsel %vm618, %v2038, %v2031
        %v2327 = vunpack.c.l.s4 1983009808
        %v2328 = vunpack.c.0.s8 %v2327
        %v2329 = vperm.slane %v2325, %v2328
        %v2330 = vrot.slane %v2039, 4
        %v2331 = vsel %vm618, %v2330, %v2037
        %v2333 = vunpack.c.l.s4 1983009808
        %v2334 = vunpack.c.0.s8 %v2333
        %v2335 = vperm.slane %v2331, %v2334
        %v2336 = vrot.slane %v2335, 4
        %v2337 = vsel %vm618, %v2336, %v2329
        %v2339 = vunpack.c.l.s4 1934713408
        %v2340 = vunpack.c.0.s8 %v2339
        %v2341 = vperm.slane %v2337, %v2340
        %v2342 = vsel %vm618, %v2057, %v2050
        %v2344 = vunpack.c.l.s4 1983009808
        %v2345 = vunpack.c.0.s8 %v2344
        %v2346 = vperm.slane %v2342, %v2345
        %v2347 = vrot.slane %v2058, 4
        %v2348 = vsel %vm618, %v2347, %v2056
        %v2350 = vunpack.c.l.s4 1983009808
        %v2351 = vunpack.c.0.s8 %v2350
        %v2352 = vperm.slane %v2348, %v2351
        %v2353 = vrot.slane %v2352, 4
        %v2354 = vsel %vm618, %v2353, %v2346
        %v2356 = vunpack.c.l.s4 1934713408
        %v2357 = vunpack.c.0.s8 %v2356
        %v2358 = vperm.slane %v2354, %v2357
        %v2359 = vsel %vm618, %v2076, %v2069
        %v2361 = vunpack.c.l.s4 1983009808
        %v2362 = vunpack.c.0.s8 %v2361
        %v2363 = vperm.slane %v2359, %v2362
        %v2364 = vrot.slane %v2077, 4
        %v2365 = vsel %vm618, %v2364, %v2075
        %v2367 = vunpack.c.l.s4 1983009808
        %v2368 = vunpack.c.0.s8 %v2367
        %v2369 = vperm.slane %v2365, %v2368
        %v2370 = vrot.slane %v2369, 4
        %v2371 = vsel %vm618, %v2370, %v2363
        %v2373 = vunpack.c.l.s4 1934713408
        %v2374 = vunpack.c.0.s8 %v2373
        %v2375 = vperm.slane %v2371, %v2374
        %v2376 = vsel %vm618, %v2095, %v2088
        %v2378 = vunpack.c.l.s4 1983009808
        %v2379 = vunpack.c.0.s8 %v2378
        %v2380 = vperm.slane %v2376, %v2379
        %v2381 = vrot.slane %v2096, 4
        %v2382 = vsel %vm618, %v2381, %v2094
        %v2384 = vunpack.c.l.s4 1983009808
        %v2385 = vunpack.c.0.s8 %v2384
        %v2386 = vperm.slane %v2382, %v2385
        %v2387 = vrot.slane %v2386, 4
        %v2388 = vsel %vm618, %v2387, %v2380
        %v2390 = vunpack.c.l.s4 1934713408
        %v2391 = vunpack.c.0.s8 %v2390
        %v2392 = vperm.slane %v2388, %v2391
        %v2393 = vsel %vm618, %v2114, %v2107
        %v2395 = vunpack.c.l.s4 1983009808
        %v2396 = vunpack.c.0.s8 %v2395
        %v2397 = vperm.slane %v2393, %v2396
        %v2398 = vrot.slane %v2115, 4
        %v2399 = vsel %vm618, %v2398, %v2113
        %v2401 = vunpack.c.l.s4 1983009808
        %v2402 = vunpack.c.0.s8 %v2401
        %v2403 = vperm.slane %v2399, %v2402
        %v2404 = vrot.slane %v2403, 4
        %v2405 = vsel %vm618, %v2404, %v2397
        %v2407 = vunpack.c.l.s4 1934713408
        %v2408 = vunpack.c.0.s8 %v2407
        %v2409 = vperm.slane %v2405, %v2408
        %v2410 = vsel %vm618, %v2133, %v2126
        %v2412 = vunpack.c.l.s4 1983009808
        %v2413 = vunpack.c.0.s8 %v2412
        %v2414 = vperm.slane %v2410, %v2413
        %v2415 = vrot.slane %v2134, 4
        %v2416 = vsel %vm618, %v2415, %v2132
        %v2418 = vunpack.c.l.s4 1983009808
        %v2419 = vunpack.c.0.s8 %v2418
        %v2420 = vperm.slane %v2416, %v2419
        %v2421 = vrot.slane %v2420, 4
        %v2422 = vsel %vm618, %v2421, %v2414
        %v2424 = vunpack.c.l.s4 1934713408
        %v2425 = vunpack.c.0.s8 %v2424
        %v2426 = vperm.slane %v2422, %v2425
        %v2427 = vsel %vm618, %v2152, %v2145
        %v2429 = vunpack.c.l.s4 1983009808
        %v2430 = vunpack.c.0.s8 %v2429
        %v2431 = vperm.slane %v2427, %v2430
        %v2432 = vrot.slane %v2153, 4
        %v2433 = vsel %vm618, %v2432, %v2151
        %v2435 = vunpack.c.l.s4 1983009808
        %v2436 = vunpack.c.0.s8 %v2435
        %v2437 = vperm.slane %v2433, %v2436
        %v2438 = vrot.slane %v2437, 4
        %v2439 = vsel %vm618, %v2438, %v2431
        %v2441 = vunpack.c.l.s4 1934713408
        %v2442 = vunpack.c.0.s8 %v2441
        %v2443 = vperm.slane %v2439, %v2442
        %v2444 = vsel %vm618, %v2171, %v2164
        %v2446 = vunpack.c.l.s4 1983009808
        %v2447 = vunpack.c.0.s8 %v2446
        %v2448 = vperm.slane %v2444, %v2447
        %v2449 = vrot.slane %v2172, 4
        %v2450 = vsel %vm618, %v2449, %v2170
        %v2452 = vunpack.c.l.s4 1983009808
        %v2453 = vunpack.c.0.s8 %v2452
        %v2454 = vperm.slane %v2450, %v2453
        %v2455 = vrot.slane %v2454, 4
        %v2456 = vsel %vm618, %v2455, %v2448
        %v2458 = vunpack.c.l.s4 1934713408
        %v2459 = vunpack.c.0.s8 %v2458
        %v2460 = vperm.slane %v2456, %v2459
        %v2461 = vsel %vm618, %v2190, %v2183
        %v2463 = vunpack.c.l.s4 1983009808
        %v2464 = vunpack.c.0.s8 %v2463
        %v2465 = vperm.slane %v2461, %v2464
        %v2466 = vrot.slane %v2191, 4
        %v2467 = vsel %vm618, %v2466, %v2189
        %v2469 = vunpack.c.l.s4 1983009808
        %v2470 = vunpack.c.0.s8 %v2469
        %v2471 = vperm.slane %v2467, %v2470
        %v2472 = vrot.slane %v2471, 4
        %v2473 = vsel %vm618, %v2472, %v2465
        %v2475 = vunpack.c.l.s4 1934713408
        %v2476 = vunpack.c.0.s8 %v2475
        %v2477 = vperm.slane %v2473, %v2476
        %v2478 = vsel %vm618, %v2209, %v2202
        %v2480 = vunpack.c.l.s4 1983009808
        %v2481 = vunpack.c.0.s8 %v2480
        %v2482 = vperm.slane %v2478, %v2481
        %v2483 = vrot.slane %v2210, 4
        %v2484 = vsel %vm618, %v2483, %v2208
        %v2486 = vunpack.c.l.s4 1983009808
        %v2487 = vunpack.c.0.s8 %v2486
        %v2488 = vperm.slane %v2484, %v2487
        %v2489 = vrot.slane %v2488, 4
        %v2490 = vsel %vm618, %v2489, %v2482
        %v2492 = vunpack.c.l.s4 1934713408
        %v2493 = vunpack.c.0.s8 %v2492
        %v2494 = vperm.slane %v2490, %v2493
        %v2495 = vsel %vm618, %v2228, %v2221
        %v2497 = vunpack.c.l.s4 1983009808
        %v2498 = vunpack.c.0.s8 %v2497
        %v2499 = vperm.slane %v2495, %v2498
        %v2500 = vrot.slane %v2229, 4
        %v2501 = vsel %vm618, %v2500, %v2227
        %v2503 = vunpack.c.l.s4 1983009808
        %v2504 = vunpack.c.0.s8 %v2503
        %v2505 = vperm.slane %v2501, %v2504
        %v2506 = vrot.slane %v2505, 4
        %v2507 = vsel %vm618, %v2506, %v2499
        %v2509 = vunpack.c.l.s4 1934713408
        %v2510 = vunpack.c.0.s8 %v2509
        %v2511 = vperm.slane %v2507, %v2510
        %v2512 = vsel %vm618, %v2247, %v2240
        %v2514 = vunpack.c.l.s4 1983009808
        %v2515 = vunpack.c.0.s8 %v2514
        %v2516 = vperm.slane %v2512, %v2515
        %v2517 = vrot.slane %v2248, 4
        %v2518 = vsel %vm618, %v2517, %v2246
        %v2520 = vunpack.c.l.s4 1983009808
        %v2521 = vunpack.c.0.s8 %v2520
        %v2522 = vperm.slane %v2518, %v2521
        %v2523 = vrot.slane %v2522, 4
        %v2524 = vsel %vm618, %v2523, %v2516
        %v2526 = vunpack.c.l.s4 1934713408
        %v2527 = vunpack.c.0.s8 %v2526
        %v2528 = vperm.slane %v2524, %v2527
        %v2529 = vsel %vm618, %v2266, %v2259
        %v2531 = vunpack.c.l.s4 1983009808
        %v2532 = vunpack.c.0.s8 %v2531
        %v2533 = vperm.slane %v2529, %v2532
        %v2534 = vrot.slane %v2267, 4
        %v2535 = vsel %vm618, %v2534, %v2265
        %v2537 = vunpack.c.l.s4 1983009808
        %v2538 = vunpack.c.0.s8 %v2537
        %v2539 = vperm.slane %v2535, %v2538
        %v2540 = vrot.slane %v2539, 4
        %v2541 = vsel %vm618, %v2540, %v2533
        %v2543 = vunpack.c.l.s4 1934713408
        %v2544 = vunpack.c.0.s8 %v2543
        %v2545 = vperm.slane %v2541, %v2544
        %v2546 = vsel %vm618, %v2285, %v2278
        %v2548 = vunpack.c.l.s4 1983009808
        %v2549 = vunpack.c.0.s8 %v2548
        %v2550 = vperm.slane %v2546, %v2549
        %v2551 = vrot.slane %v2286, 4
        %v2552 = vsel %vm618, %v2551, %v2284
        %v2554 = vunpack.c.l.s4 1983009808
        %v2555 = vunpack.c.0.s8 %v2554
        %v2556 = vperm.slane %v2552, %v2555
        %v2557 = vrot.slane %v2556, 4
        %v2558 = vsel %vm618, %v2557, %v2550
        %v2560 = vunpack.c.l.s4 1934713408
        %v2561 = vunpack.c.0.s8 %v2560
        %v2562 = vperm.slane %v2558, %v2561
        %v2563 = vsel %vm618, %v2304, %v2297
        %v2565 = vunpack.c.l.s4 1983009808
        %v2566 = vunpack.c.0.s8 %v2565
        %v2567 = vperm.slane %v2563, %v2566
        %v2568 = vrot.slane %v2305, 4
        %v2569 = vsel %vm618, %v2568, %v2303
        %v2571 = vunpack.c.l.s4 1983009808
        %v2572 = vunpack.c.0.s8 %v2571
        %v2573 = vperm.slane %v2569, %v2572
        %v2574 = vrot.slane %v2573, 4
        %v2575 = vsel %vm618, %v2574, %v2567
        %v2577 = vunpack.c.l.s4 1934713408
        %v2578 = vunpack.c.0.s8 %v2577
        %v2579 = vperm.slane %v2575, %v2578
        %v2580 = vsel %vm618, %v2323, %v2316
        %v2582 = vunpack.c.l.s4 1983009808
        %v2583 = vunpack.c.0.s8 %v2582
        %v2584 = vperm.slane %v2580, %v2583
        %v2585 = vrot.slane %v2324, 4
        %v2586 = vsel %vm618, %v2585, %v2322
        %v2588 = vunpack.c.l.s4 1983009808
        %v2589 = vunpack.c.0.s8 %v2588
        %v2590 = vperm.slane %v2586, %v2589
        %v2591 = vrot.slane %v2590, 4
        %v2592 = vsel %vm618, %v2591, %v2584
        %v2594 = vunpack.c.l.s4 1934713408
        %v2595 = vunpack.c.0.s8 %v2594
        %v2596 = vperm.slane %v2592, %v2595
        %v2599 = vpack.i.b16 %v2358, %v2341
        %v2600 = vshrl.u32 %v2341, 16
        %v2601 = vshrl.u32 %v2358, 16
        %v2602 = vpack.i.b16 %v2601, %v2600
        %v2605 = vpack.i.b16 %v2392, %v2375
        %v2606 = vshrl.u32 %v2375, 16
        %v2607 = vshrl.u32 %v2392, 16
        %v2608 = vpack.i.b16 %v2607, %v2606
        %v2611 = vpack.i.b16 %v2426, %v2409
        %v2612 = vshrl.u32 %v2409, 16
        %v2613 = vshrl.u32 %v2426, 16
        %v2614 = vpack.i.b16 %v2613, %v2612
        %v2617 = vpack.i.b16 %v2460, %v2443
        %v2618 = vshrl.u32 %v2443, 16
        %v2619 = vshrl.u32 %v2460, 16
        %v2620 = vpack.i.b16 %v2619, %v2618
        %v2623 = vpack.i.b16 %v2494, %v2477
        %v2624 = vshrl.u32 %v2477, 16
        %v2625 = vshrl.u32 %v2494, 16
        %v2626 = vpack.i.b16 %v2625, %v2624
        %v2629 = vpack.i.b16 %v2528, %v2511
        %v2630 = vshrl.u32 %v2511, 16
        %v2631 = vshrl.u32 %v2528, 16
        %v2632 = vpack.i.b16 %v2631, %v2630
        %v2635 = vpack.i.b16 %v2562, %v2545
        %v2636 = vshrl.u32 %v2545, 16
        %v2637 = vshrl.u32 %v2562, 16
        %v2638 = vpack.i.b16 %v2637, %v2636
        %v2641 = vpack.i.b16 %v2596, %v2579
        %v2642 = vshrl.u32 %v2579, 16
        %v2643 = vshrl.u32 %v2596, 16
        %v2644 = vpack.i.b16 %v2643, %v2642
        %v2645 = vunpack.c.l.b16 %v1191
        %v2646 = vunpack.c.l.b16 %v1197
        %v2647 = vunpack.c.l.b16 %v1203
        %v2648 = vunpack.c.l.b16 %v1209
        %v2649 = vunpack.c.l.b16 %v1215
        %v2650 = vunpack.c.l.b16 %v1221
        %v2651 = vunpack.c.l.b16 %v1227
        %v2652 = vunpack.c.l.b16 %v1233
        %v2653 = vpack.c.b16 %v2646, %v2645
        %v2654 = vpack.c.b16 %v2648, %v2647
        %v2655 = vpack.c.b16 %v2650, %v2649
        %v2656 = vpack.c.b16 %v2652, %v2651
        %v2657 = vunpack.c.l.b16 %v1895
        %v2658 = vunpack.c.l.b16 %v1901
        %v2659 = vunpack.c.l.b16 %v1907
        %v2660 = vunpack.c.l.b16 %v1913
        %v2661 = vunpack.c.l.b16 %v1919
        %v2662 = vunpack.c.l.b16 %v1925
        %v2663 = vunpack.c.l.b16 %v1931
        %v2664 = vunpack.c.l.b16 %v1937
        %v2665 = vpack.c.b16 %v2658, %v2657
        %v2666 = vpack.c.b16 %v2660, %v2659
        %v2667 = vpack.c.b16 %v2662, %v2661
        %v2668 = vpack.c.b16 %v2664, %v2663
        %vm2669 = vcmask 523264
        %v2671 = vsel %vm2669, %v2653, 0
        %v2674 = vsel %vm2669, %v2654, 0
        %v2677 = vsel %vm2669, %v2655, 0
        %v2680 = vsel %vm2669, %v2656, 0
        %v2683 = vsel %vm2669, %v2665, 0
        %v2686 = vsel %vm2669, %v2666, 0
        %v2689 = vsel %vm2669, %v2667, 0
        %v2692 = vsel %vm2669, %v2668, 0
        %2694 = vmatpush.bf16.xpose.msra.mxu0 0
        %2695 = vmatpush.bf16.xpose.msra.mxu0 0
        %2696 = vmatpush.bf16.xpose.msra.mxu0 0
        %2697 = vmatpush.bf16.xpose.msra.mxu0 0
        %2698 = vmatpush.bf16.xpose.msra.mxu0 %v2692
        %2699 = vmatpush.bf16.xpose.msra.mxu0 %v2689
        %2700 = vmatpush.bf16.xpose.msra.mxu0 %v2686
        %2701 = vmatpush.bf16.xpose.msra.mxu0 %v2683
        %2702 = vmatmul.bf16.gmra.mxu0 %v2671
        %v2703 = vpop.f32.mrf.mxu0
        %v2704 = vadd.f32 0.0, %v2703
        %v2705 = vpop.f32.mrf.mxu0
        %v2706 = vadd.f32 0.0, %v2705
        %2707 = vmatmul.bf16.gmra.mxu0 %v2674
        %v2708 = vpop.f32.mrf.mxu0
        %v2709 = vadd.f32 0.0, %v2708
        %v2710 = vpop.f32.mrf.mxu0
        %v2711 = vadd.f32 0.0, %v2710
        %2712 = vmatmul.bf16.gmra.mxu0 %v2677
        %v2713 = vpop.f32.mrf.mxu0
        %v2714 = vadd.f32 0.0, %v2713
        %v2715 = vpop.f32.mrf.mxu0
        %v2716 = vadd.f32 0.0, %v2715
        %2717 = vmatmul.bf16.gmra.mxu0 %v2680
        %v2718 = vpop.f32.mrf.mxu0
        %v2719 = vadd.f32 0.0, %v2718
        %v2720 = vpop.f32.mrf.mxu0
        %v2721 = vadd.f32 0.0, %v2720
        %2722 = vdwg.mxu0
        %v2723 = vunpack.c.l.b16 %v1194
        %v2724 = vunpack.c.l.b16 %v1200
        %v2725 = vunpack.c.l.b16 %v1206
        %v2726 = vunpack.c.l.b16 %v1212
        %v2727 = vunpack.c.l.b16 %v1218
        %v2728 = vunpack.c.l.b16 %v1224
        %v2729 = vunpack.c.l.b16 %v1230
        %v2730 = vunpack.c.l.b16 %v1236
        %v2731 = vpack.c.b16 %v2724, %v2723
        %v2732 = vpack.c.b16 %v2726, %v2725
        %v2733 = vpack.c.b16 %v2728, %v2727
        %v2734 = vpack.c.b16 %v2730, %v2729
        %v2735 = vunpack.c.l.b16 %v1898
        %v2736 = vunpack.c.l.b16 %v1904
        %v2737 = vunpack.c.l.b16 %v1910
        %v2738 = vunpack.c.l.b16 %v1916
        %v2739 = vunpack.c.l.b16 %v1922
        %v2740 = vunpack.c.l.b16 %v1928
        %v2741 = vunpack.c.l.b16 %v1934
        %v2742 = vunpack.c.l.b16 %v1940
        %v2743 = vpack.c.b16 %v2736, %v2735
        %v2744 = vpack.c.b16 %v2738, %v2737
        %v2745 = vpack.c.b16 %v2740, %v2739
        %v2746 = vpack.c.b16 %v2742, %v2741
        %v2748 = vsel %vm2669, %v2731, 0
        %v2751 = vsel %vm2669, %v2732, 0
        %v2754 = vsel %vm2669, %v2733, 0
        %v2757 = vsel %vm2669, %v2734, 0
        %v2760 = vsel %vm2669, %v2743, 0
        %v2763 = vsel %vm2669, %v2744, 0
        %v2766 = vsel %vm2669, %v2745, 0
        %v2769 = vsel %vm2669, %v2746, 0
        %2771 = vmatpush.bf16.xpose.msra.mxu0 0
        %2772 = vmatpush.bf16.xpose.msra.mxu0 0
        %2773 = vmatpush.bf16.xpose.msra.mxu0 0
        %2774 = vmatpush.bf16.xpose.msra.mxu0 0
        %2775 = vmatpush.bf16.xpose.msra.mxu0 %v2769
        %2776 = vmatpush.bf16.xpose.msra.mxu0 %v2766
        %2777 = vmatpush.bf16.xpose.msra.mxu0 %v2763
        %2778 = vmatpush.bf16.xpose.msra.mxu0 %v2760
        %2779 = vmatmul.bf16.gmra.mxu0 %v2748
        %v2780 = vpop.f32.mrf.mxu0
        %v2781 = vadd.f32 0.0, %v2780
        %v2782 = vpop.f32.mrf.mxu0
        %v2783 = vadd.f32 0.0, %v2782
        %2784 = vmatmul.bf16.gmra.mxu0 %v2751
        %v2785 = vpop.f32.mrf.mxu0
        %v2786 = vadd.f32 0.0, %v2785
        %v2787 = vpop.f32.mrf.mxu0
        %v2788 = vadd.f32 0.0, %v2787
        %2789 = vmatmul.bf16.gmra.mxu0 %v2754
        %v2790 = vpop.f32.mrf.mxu0
        %v2791 = vadd.f32 0.0, %v2790
        %v2792 = vpop.f32.mrf.mxu0
        %v2793 = vadd.f32 0.0, %v2792
        %2794 = vmatmul.bf16.gmra.mxu0 %v2757
        %v2795 = vpop.f32.mrf.mxu0
        %v2796 = vadd.f32 0.0, %v2795
        %v2797 = vpop.f32.mrf.mxu0
        %v2798 = vadd.f32 0.0, %v2797
        %2799 = vdwg.mxu0
        %v2800 = vld [vmem:[#allocation2] sm:$0xff]
        %v2801 = vld [vmem:[#allocation2 + $0x8] sm:$0xff]
        %v2802 = vld [vmem:[#allocation2 + $0x10] sm:$0xff]
        %v2803 = vld [vmem:[#allocation2 + $0x18] sm:$0xff]
        %v2804 = vld [vmem:[#allocation2 + $0x20] sm:$0xff]
        %v2805 = vld [vmem:[#allocation2 + $0x28] sm:$0xff]
        %v2806 = vld [vmem:[#allocation2 + $0x30] sm:$0xff]
        %v2807 = vld [vmem:[#allocation2 + $0x38] sm:$0xff]
        %v2808 = vld [vmem:[#allocation2 + $0x40] sm:$0xff]
        %v2809 = vld [vmem:[#allocation2 + $0x48] sm:$0xff]
        %v2810 = vld [vmem:[#allocation2 + $0x50] sm:$0xff]
        %v2811 = vld [vmem:[#allocation2 + $0x58] sm:$0xff]
        %v2812 = vld [vmem:[#allocation2 + $0x60] sm:$0xff]
        %v2813 = vld [vmem:[#allocation2 + $0x68] sm:$0xff]
        %v2814 = vld [vmem:[#allocation2 + $0x70] sm:$0xff]
        %v2815 = vld [vmem:[#allocation2 + $0x78] sm:$0xff]
        %v2816 = vsel %vm2669, %v2704, -inf
        %2817 = vmax.xlane.f32.xlu0 %v2816
        %v2818 = vpop.xlane.xlu0 %2817
        %v2819 = vsel %vm2669, %v2706, -inf
        %2820 = vmax.xlane.f32.xlu0 %v2819
        %v2821 = vpop.xlane.xlu0 %2820
        %v2822 = vsel %vm2669, %v2709, -inf
        %2823 = vmax.xlane.f32.xlu0 %v2822
        %v2824 = vpop.xlane.xlu0 %2823
        %v2825 = vsel %vm2669, %v2711, -inf
        %2826 = vmax.xlane.f32.xlu0 %v2825
        %v2827 = vpop.xlane.xlu0 %2826
        %v2828 = vsel %vm2669, %v2714, -inf
        %2829 = vmax.xlane.f32.xlu0 %v2828
        %v2830 = vpop.xlane.xlu0 %2829
        %v2831 = vsel %vm2669, %v2716, -inf
        %2832 = vmax.xlane.f32.xlu0 %v2831
        %v2833 = vpop.xlane.xlu0 %2832
        %v2834 = vsel %vm2669, %v2719, -inf
        %2835 = vmax.xlane.f32.xlu0 %v2834
        %v2836 = vpop.xlane.xlu0 %2835
        %v2837 = vsel %vm2669, %v2721, -inf
        %2838 = vmax.xlane.f32.xlu0 %v2837
        %v2839 = vpop.xlane.xlu0 %2838
        %v2840 = vsel %vm2669, %v2781, -inf
        %2841 = vmax.xlane.f32.xlu0 %v2840
        %v2842 = vpop.xlane.xlu0 %2841
        %v2843 = vsel %vm2669, %v2783, -inf
        %2844 = vmax.xlane.f32.xlu0 %v2843
        %v2845 = vpop.xlane.xlu0 %2844
        %v2846 = vsel %vm2669, %v2786, -inf
        %2847 = vmax.xlane.f32.xlu0 %v2846
        %v2848 = vpop.xlane.xlu0 %2847
        %v2849 = vsel %vm2669, %v2788, -inf
        %2850 = vmax.xlane.f32.xlu0 %v2849
        %v2851 = vpop.xlane.xlu0 %2850
        %v2852 = vsel %vm2669, %v2791, -inf
        %2853 = vmax.xlane.f32.xlu0 %v2852
        %v2854 = vpop.xlane.xlu0 %2853
        %v2855 = vsel %vm2669, %v2793, -inf
        %2856 = vmax.xlane.f32.xlu0 %v2855
        %v2857 = vpop.xlane.xlu0 %2856
        %v2858 = vsel %vm2669, %v2796, -inf
        %2859 = vmax.xlane.f32.xlu0 %v2858
        %v2860 = vpop.xlane.xlu0 %2859
        %v2861 = vsel %vm2669, %v2798, -inf
        %2862 = vmax.xlane.f32.xlu0 %v2861
        %v2863 = vpop.xlane.xlu0 %2862
        %v2864 = vmax.f32 %v2800, %v2818
        %v2865 = vmax.f32 %v2801, %v2821
        %v2866 = vmax.f32 %v2802, %v2824
        %v2867 = vmax.f32 %v2803, %v2827
        %v2868 = vmax.f32 %v2804, %v2830
        %v2869 = vmax.f32 %v2805, %v2833
        %v2870 = vmax.f32 %v2806, %v2836
        %v2871 = vmax.f32 %v2807, %v2839
        %v2872 = vmax.f32 %v2808, %v2842
        %v2873 = vmax.f32 %v2809, %v2845
        %v2874 = vmax.f32 %v2810, %v2848
        %v2875 = vmax.f32 %v2811, %v2851
        %v2876 = vmax.f32 %v2812, %v2854
        %v2877 = vmax.f32 %v2813, %v2857
        %v2878 = vmax.f32 %v2814, %v2860
        %v2879 = vmax.f32 %v2815, %v2863
        %v2880 = vsub.f32 %v2800, %v2864
        %v2881 = vsub.f32 %v2801, %v2865
        %v2882 = vsub.f32 %v2802, %v2866
        %v2883 = vsub.f32 %v2803, %v2867
        %v2884 = vsub.f32 %v2804, %v2868
        %v2885 = vsub.f32 %v2805, %v2869
        %v2886 = vsub.f32 %v2806, %v2870
        %v2887 = vsub.f32 %v2807, %v2871
        %v2888 = vsub.f32 %v2808, %v2872
        %v2889 = vsub.f32 %v2809, %v2873
        %v2890 = vsub.f32 %v2810, %v2874
        %v2891 = vsub.f32 %v2811, %v2875
        %v2892 = vsub.f32 %v2812, %v2876
        %v2893 = vsub.f32 %v2813, %v2877
        %v2894 = vsub.f32 %v2814, %v2878
        %v2895 = vsub.f32 %v2815, %v2879
        %v2896 = vpow.pop %v2880
        %v2897 = vpow.pop %v2881
        %v2898 = vpow.pop %v2882
        %v2899 = vpow.pop %v2883
        %v2900 = vpow.pop %v2884
        %v2901 = vpow.pop %v2885
        %v2902 = vpow.pop %v2886
        %v2903 = vpow.pop %v2887
        %v2904 = vpow.pop %v2888
        %v2905 = vpow.pop %v2889
        %v2906 = vpow.pop %v2890
        %v2907 = vpow.pop %v2891
        %v2908 = vpow.pop %v2892
        %v2909 = vpow.pop %v2893
        %v2910 = vpow.pop %v2894
        %v2911 = vpow.pop %v2895
        %2913 = vset.pattern.permute.xlu0 0
        %2914 = vperm.xlu0 %2913, %v2864
        %v2915 = vpop.permute.xlu0 %2914
        %2918 = vset.pattern.permute.xlu0 0
        %2919 = vperm.xlu0 %2918, %v2865
        %v2920 = vpop.permute.xlu0 %2919
        %2923 = vset.pattern.permute.xlu0 0
        %2924 = vperm.xlu0 %2923, %v2866
        %v2925 = vpop.permute.xlu0 %2924
        %2928 = vset.pattern.permute.xlu0 0
        %2929 = vperm.xlu0 %2928, %v2867
        %v2930 = vpop.permute.xlu0 %2929
        %2933 = vset.pattern.permute.xlu0 0
        %2934 = vperm.xlu0 %2933, %v2868
        %v2935 = vpop.permute.xlu0 %2934
        %2938 = vset.pattern.permute.xlu0 0
        %2939 = vperm.xlu0 %2938, %v2869
        %v2940 = vpop.permute.xlu0 %2939
        %2943 = vset.pattern.permute.xlu0 0
        %2944 = vperm.xlu0 %2943, %v2870
        %v2945 = vpop.permute.xlu0 %2944
        %2948 = vset.pattern.permute.xlu0 0
        %2949 = vperm.xlu0 %2948, %v2871
        %v2950 = vpop.permute.xlu0 %2949
        %2953 = vset.pattern.permute.xlu0 0
        %2954 = vperm.xlu0 %2953, %v2872
        %v2955 = vpop.permute.xlu0 %2954
        %2958 = vset.pattern.permute.xlu0 0
        %2959 = vperm.xlu0 %2958, %v2873
        %v2960 = vpop.permute.xlu0 %2959
        %2963 = vset.pattern.permute.xlu0 0
        %2964 = vperm.xlu0 %2963, %v2874
        %v2965 = vpop.permute.xlu0 %2964
        %2968 = vset.pattern.permute.xlu0 0
        %2969 = vperm.xlu0 %2968, %v2875
        %v2970 = vpop.permute.xlu0 %2969
        %2973 = vset.pattern.permute.xlu0 0
        %2974 = vperm.xlu0 %2973, %v2876
        %v2975 = vpop.permute.xlu0 %2974
        %2978 = vset.pattern.permute.xlu0 0
        %2979 = vperm.xlu0 %2978, %v2877
        %v2980 = vpop.permute.xlu0 %2979
        %2983 = vset.pattern.permute.xlu0 0
        %2984 = vperm.xlu0 %2983, %v2878
        %v2985 = vpop.permute.xlu0 %2984
        %2988 = vset.pattern.permute.xlu0 0
        %2989 = vperm.xlu0 %2988, %v2879
        %v2990 = vpop.permute.xlu0 %2989
        %v2992 = vsub.f32 %v2704, %v2915
        %v2993 = vsub.f32 %v2706, %v2920
        %v2994 = vsub.f32 %v2709, %v2925
        %v2995 = vsub.f32 %v2711, %v2930
        %v2996 = vsub.f32 %v2714, %v2935
        %v2997 = vsub.f32 %v2716, %v2940
        %v2998 = vsub.f32 %v2719, %v2945
        %v2999 = vsub.f32 %v2721, %v2950
        %v3000 = vsub.f32 %v2781, %v2955
        %v3001 = vsub.f32 %v2783, %v2960
        %v3002 = vsub.f32 %v2786, %v2965
        %v3003 = vsub.f32 %v2788, %v2970
        %v3004 = vsub.f32 %v2791, %v2975
        %v3005 = vsub.f32 %v2793, %v2980
        %v3006 = vsub.f32 %v2796, %v2985
        %v3007 = vsub.f32 %v2798, %v2990
        %v3008 = vpow.pop %v2992
        %v3009 = vpow.pop %v2993
        %v3010 = vpow.pop %v2994
        %v3011 = vpow.pop %v2995
        %v3012 = vpow.pop %v2996
        %v3013 = vpow.pop %v2997
        %v3014 = vpow.pop %v2998
        %v3015 = vpow.pop %v2999
        %v3016 = vpow.pop %v3000
        %v3017 = vpow.pop %v3001
        %v3018 = vpow.pop %v3002
        %v3019 = vpow.pop %v3003
        %v3020 = vpow.pop %v3004
        %v3021 = vpow.pop %v3005
        %v3022 = vpow.pop %v3006
        %v3023 = vpow.pop %v3007
        %v3024 = vld [vmem:[#allocation3] sm:$0xff]
        %v3025 = vld [vmem:[#allocation3 + $0x8] sm:$0xff]
        %v3026 = vld [vmem:[#allocation3 + $0x10] sm:$0xff]
        %v3027 = vld [vmem:[#allocation3 + $0x18] sm:$0xff]
        %v3028 = vld [vmem:[#allocation3 + $0x20] sm:$0xff]
        %v3029 = vld [vmem:[#allocation3 + $0x28] sm:$0xff]
        %v3030 = vld [vmem:[#allocation3 + $0x30] sm:$0xff]
        %v3031 = vld [vmem:[#allocation3 + $0x38] sm:$0xff]
        %v3032 = vld [vmem:[#allocation3 + $0x40] sm:$0xff]
        %v3033 = vld [vmem:[#allocation3 + $0x48] sm:$0xff]
        %v3034 = vld [vmem:[#allocation3 + $0x50] sm:$0xff]
        %v3035 = vld [vmem:[#allocation3 + $0x58] sm:$0xff]
        %v3036 = vld [vmem:[#allocation3 + $0x60] sm:$0xff]
        %v3037 = vld [vmem:[#allocation3 + $0x68] sm:$0xff]
        %v3038 = vld [vmem:[#allocation3 + $0x70] sm:$0xff]
        %v3039 = vld [vmem:[#allocation3 + $0x78] sm:$0xff]
        %v3040 = vmul.f32 %v2896, %v3024
        %v3041 = vmul.f32 %v2897, %v3025
        %v3042 = vmul.f32 %v2898, %v3026
        %v3043 = vmul.f32 %v2899, %v3027
        %v3044 = vmul.f32 %v2900, %v3028
        %v3045 = vmul.f32 %v2901, %v3029
        %v3046 = vmul.f32 %v2902, %v3030
        %v3047 = vmul.f32 %v2903, %v3031
        %v3048 = vmul.f32 %v2904, %v3032
        %v3049 = vmul.f32 %v2905, %v3033
        %v3050 = vmul.f32 %v2906, %v3034
        %v3051 = vmul.f32 %v2907, %v3035
        %v3052 = vmul.f32 %v2908, %v3036
        %v3053 = vmul.f32 %v2909, %v3037
        %v3054 = vmul.f32 %v2910, %v3038
        %v3055 = vmul.f32 %v2911, %v3039
        %v3056 = vsel %vm2669, %v3008, 0.0
        %3057 = vadd.xlane.f32.xlu0 %v3056
        %v3058 = vpop.xlane.xlu0 %3057
        %v3059 = vsel %vm2669, %v3009, 0.0
        %3060 = vadd.xlane.f32.xlu0 %v3059
        %v3061 = vpop.xlane.xlu0 %3060
        %v3062 = vsel %vm2669, %v3010, 0.0
        %3063 = vadd.xlane.f32.xlu0 %v3062
        %v3064 = vpop.xlane.xlu0 %3063
        %v3065 = vsel %vm2669, %v3011, 0.0
        %3066 = vadd.xlane.f32.xlu0 %v3065
        %v3067 = vpop.xlane.xlu0 %3066
        %v3068 = vsel %vm2669, %v3012, 0.0
        %3069 = vadd.xlane.f32.xlu0 %v3068
        %v3070 = vpop.xlane.xlu0 %3069
        %v3071 = vsel %vm2669, %v3013, 0.0
        %3072 = vadd.xlane.f32.xlu0 %v3071
        %v3073 = vpop.xlane.xlu0 %3072
        %v3074 = vsel %vm2669, %v3014, 0.0
        %3075 = vadd.xlane.f32.xlu0 %v3074
        %v3076 = vpop.xlane.xlu0 %3075
        %v3077 = vsel %vm2669, %v3015, 0.0
        %3078 = vadd.xlane.f32.xlu0 %v3077
        %v3079 = vpop.xlane.xlu0 %3078
        %v3080 = vsel %vm2669, %v3016, 0.0
        %3081 = vadd.xlane.f32.xlu0 %v3080
        %v3082 = vpop.xlane.xlu0 %3081
        %v3083 = vsel %vm2669, %v3017, 0.0
        %3084 = vadd.xlane.f32.xlu0 %v3083
        %v3085 = vpop.xlane.xlu0 %3084
        %v3086 = vsel %vm2669, %v3018, 0.0
        %3087 = vadd.xlane.f32.xlu0 %v3086
        %v3088 = vpop.xlane.xlu0 %3087
        %v3089 = vsel %vm2669, %v3019, 0.0
        %3090 = vadd.xlane.f32.xlu0 %v3089
        %v3091 = vpop.xlane.xlu0 %3090
        %v3092 = vsel %vm2669, %v3020, 0.0
        %3093 = vadd.xlane.f32.xlu0 %v3092
        %v3094 = vpop.xlane.xlu0 %3093
        %v3095 = vsel %vm2669, %v3021, 0.0
        %3096 = vadd.xlane.f32.xlu0 %v3095
        %v3097 = vpop.xlane.xlu0 %3096
        %v3098 = vsel %vm2669, %v3022, 0.0
        %3099 = vadd.xlane.f32.xlu0 %v3098
        %v3100 = vpop.xlane.xlu0 %3099
        %v3101 = vsel %vm2669, %v3023, 0.0
        %3102 = vadd.xlane.f32.xlu0 %v3101
        %v3103 = vpop.xlane.xlu0 %3102
        %v3104 = vadd.f32 %v3040, %v3058
        %v3105 = vadd.f32 %v3041, %v3061
        %v3106 = vadd.f32 %v3042, %v3064
        %v3107 = vadd.f32 %v3043, %v3067
        %v3108 = vadd.f32 %v3044, %v3070
        %v3109 = vadd.f32 %v3045, %v3073
        %v3110 = vadd.f32 %v3046, %v3076
        %v3111 = vadd.f32 %v3047, %v3079
        %v3112 = vadd.f32 %v3048, %v3082
        %v3113 = vadd.f32 %v3049, %v3085
        %v3114 = vadd.f32 %v3050, %v3088
        %v3115 = vadd.f32 %v3051, %v3091
        %v3116 = vadd.f32 %v3052, %v3094
        %v3117 = vadd.f32 %v3053, %v3097
        %v3118 = vadd.f32 %v3054, %v3100
        %v3119 = vadd.f32 %v3055, %v3103
        %vm3120 = vcmask 7168
        %3121 = vst.msk [vmem:[#allocation3] sm:$0xff] %vm3120, %v3104
        %3122 = vst.msk [vmem:[#allocation3 + $0x8] sm:$0xff] %vm3120, %v3105
        %3123 = vst.msk [vmem:[#allocation3 + $0x10] sm:$0xff] %vm3120, %v3106
        %3124 = vst.msk [vmem:[#allocation3 + $0x18] sm:$0xff] %vm3120, %v3107
        %3125 = vst.msk [vmem:[#allocation3 + $0x20] sm:$0xff] %vm3120, %v3108
        %3126 = vst.msk [vmem:[#allocation3 + $0x28] sm:$0xff] %vm3120, %v3109
        %3127 = vst.msk [vmem:[#allocation3 + $0x30] sm:$0xff] %vm3120, %v3110
        %3128 = vst.msk [vmem:[#allocation3 + $0x38] sm:$0xff] %vm3120, %v3111
        %3129 = vst.msk [vmem:[#allocation3 + $0x40] sm:$0xff] %vm3120, %v3112
        %3130 = vst.msk [vmem:[#allocation3 + $0x48] sm:$0xff] %vm3120, %v3113
        %3131 = vst.msk [vmem:[#allocation3 + $0x50] sm:$0xff] %vm3120, %v3114
        %3132 = vst.msk [vmem:[#allocation3 + $0x58] sm:$0xff] %vm3120, %v3115
        %3133 = vst.msk [vmem:[#allocation3 + $0x60] sm:$0xff] %vm3120, %v3116
        %3134 = vst.msk [vmem:[#allocation3 + $0x68] sm:$0xff] %vm3120, %v3117
        %3135 = vst.msk [vmem:[#allocation3 + $0x70] sm:$0xff] %vm3120, %v3118
        %3136 = vst.msk [vmem:[#allocation3 + $0x78] sm:$0xff] %vm3120, %v3119
        %v3137 = vld [vmem:[#allocation4] sm:$0xff]
        %v3138 = vld [vmem:[#allocation4 + $0x8] sm:$0xff]
        %v3139 = vld [vmem:[#allocation4 + $0x10] sm:$0xff]
        %v3140 = vld [vmem:[#allocation4 + $0x18] sm:$0xff]
        %v3141 = vld [vmem:[#allocation4 + $0x20] sm:$0xff]
        %v3142 = vld [vmem:[#allocation4 + $0x28] sm:$0xff]
        %v3143 = vld [vmem:[#allocation4 + $0x30] sm:$0xff]
        %v3144 = vld [vmem:[#allocation4 + $0x38] sm:$0xff]
        %v3145 = vld [vmem:[#allocation4 + $0x40] sm:$0xff]
        %v3146 = vld [vmem:[#allocation4 + $0x48] sm:$0xff]
        %v3147 = vld [vmem:[#allocation4 + $0x50] sm:$0xff]
        %v3148 = vld [vmem:[#allocation4 + $0x58] sm:$0xff]
        %v3149 = vld [vmem:[#allocation4 + $0x60] sm:$0xff]
        %v3150 = vld [vmem:[#allocation4 + $0x68] sm:$0xff]
        %v3151 = vld [vmem:[#allocation4 + $0x70] sm:$0xff]
        %v3152 = vld [vmem:[#allocation4 + $0x78] sm:$0xff]
        %3154 = vset.pattern.permute.xlu0 0
        %3155 = vperm.xlu0 %3154, %v2896
        %v3156 = vpop.permute.xlu0 %3155
        %3159 = vset.pattern.permute.xlu0 0
        %3160 = vperm.xlu0 %3159, %v2897
        %v3161 = vpop.permute.xlu0 %3160
        %3164 = vset.pattern.permute.xlu0 0
        %3165 = vperm.xlu0 %3164, %v2898
        %v3166 = vpop.permute.xlu0 %3165
        %3169 = vset.pattern.permute.xlu0 0
        %3170 = vperm.xlu0 %3169, %v2899
        %v3171 = vpop.permute.xlu0 %3170
        %3174 = vset.pattern.permute.xlu0 0
        %3175 = vperm.xlu0 %3174, %v2900
        %v3176 = vpop.permute.xlu0 %3175
        %3179 = vset.pattern.permute.xlu0 0
        %3180 = vperm.xlu0 %3179, %v2901
        %v3181 = vpop.permute.xlu0 %3180
        %3184 = vset.pattern.permute.xlu0 0
        %3185 = vperm.xlu0 %3184, %v2902
        %v3186 = vpop.permute.xlu0 %3185
        %3189 = vset.pattern.permute.xlu0 0
        %3190 = vperm.xlu0 %3189, %v2903
        %v3191 = vpop.permute.xlu0 %3190
        %3194 = vset.pattern.permute.xlu0 0
        %3195 = vperm.xlu0 %3194, %v2904
        %v3196 = vpop.permute.xlu0 %3195
        %3199 = vset.pattern.permute.xlu0 0
        %3200 = vperm.xlu0 %3199, %v2905
        %v3201 = vpop.permute.xlu0 %3200
        %3204 = vset.pattern.permute.xlu0 0
        %3205 = vperm.xlu0 %3204, %v2906
        %v3206 = vpop.permute.xlu0 %3205
        %3209 = vset.pattern.permute.xlu0 0
        %3210 = vperm.xlu0 %3209, %v2907
        %v3211 = vpop.permute.xlu0 %3210
        %3214 = vset.pattern.permute.xlu0 0
        %3215 = vperm.xlu0 %3214, %v2908
        %v3216 = vpop.permute.xlu0 %3215
        %3219 = vset.pattern.permute.xlu0 0
        %3220 = vperm.xlu0 %3219, %v2909
        %v3221 = vpop.permute.xlu0 %3220
        %3224 = vset.pattern.permute.xlu0 0
        %3225 = vperm.xlu0 %3224, %v2910
        %v3226 = vpop.permute.xlu0 %3225
        %3229 = vset.pattern.permute.xlu0 0
        %3230 = vperm.xlu0 %3229, %v2911
        %v3231 = vpop.permute.xlu0 %3230
        %v3233 = vmul.f32 %v3156, %v3137
        %v3234 = vmul.f32 %v3161, %v3138
        %v3235 = vmul.f32 %v3166, %v3139
        %v3236 = vmul.f32 %v3171, %v3140
        %v3237 = vmul.f32 %v3176, %v3141
        %v3238 = vmul.f32 %v3181, %v3142
        %v3239 = vmul.f32 %v3186, %v3143
        %v3240 = vmul.f32 %v3191, %v3144
        %v3241 = vmul.f32 %v3196, %v3145
        %v3242 = vmul.f32 %v3201, %v3146
        %v3243 = vmul.f32 %v3206, %v3147
        %v3244 = vmul.f32 %v3211, %v3148
        %v3245 = vmul.f32 %v3216, %v3149
        %v3246 = vmul.f32 %v3221, %v3150
        %v3247 = vmul.f32 %v3226, %v3151
        %v3248 = vmul.f32 %v3231, %v3152
        %v3249 = vpack.c.bf16 %v3008, %v3008
        %v3250 = vpack.c.bf16 %v3009, %v3009
        %v3251 = vpack.c.bf16 %v3010, %v3010
        %v3252 = vpack.c.bf16 %v3011, %v3011
        %v3253 = vpack.c.bf16 %v3012, %v3012
        %v3254 = vpack.c.bf16 %v3013, %v3013
        %v3255 = vpack.c.bf16 %v3014, %v3014
        %v3256 = vpack.c.bf16 %v3015, %v3015
        %v3257 = vpack.c.bf16 %v3016, %v3016
        %v3258 = vpack.c.bf16 %v3017, %v3017
        %v3259 = vpack.c.bf16 %v3018, %v3018
        %v3260 = vpack.c.bf16 %v3019, %v3019
        %v3261 = vpack.c.bf16 %v3020, %v3020
        %v3262 = vpack.c.bf16 %v3021, %v3021
        %v3263 = vpack.c.bf16 %v3022, %v3022
        %v3264 = vpack.c.bf16 %v3023, %v3023
        %v3273 = vunpack.c.l.b16 %v3249
        %v3274 = vunpack.c.l.b16 %v3250
        %v3275 = vunpack.c.l.b16 %v3251
        %v3276 = vunpack.c.l.b16 %v3252
        %v3277 = vunpack.c.l.b16 %v3253
        %v3278 = vunpack.c.l.b16 %v3254
        %v3279 = vunpack.c.l.b16 %v3255
        %v3280 = vunpack.c.l.b16 %v3256
        %v3281 = vpack.c.b16 %v3274, %v3273
        %v3282 = vpack.c.b16 %v3276, %v3275
        %v3283 = vpack.c.b16 %v3278, %v3277
        %v3284 = vpack.c.b16 %v3280, %v3279
        %v3285 = vunpack.c.l.b16 %v2599
        %v3286 = vunpack.c.l.b16 %v2605
        %v3287 = vunpack.c.l.b16 %v2611
        %v3288 = vunpack.c.l.b16 %v2617
        %v3289 = vunpack.c.l.b16 %v2623
        %v3290 = vunpack.c.l.b16 %v2629
        %v3291 = vunpack.c.l.b16 %v2635
        %v3292 = vunpack.c.l.b16 %v2641
        %v3293 = vpack.c.b16 %v3286, %v3285
        %v3294 = vpack.c.b16 %v3288, %v3287
        %v3295 = vpack.c.b16 %v3290, %v3289
        %v3296 = vpack.c.b16 %v3292, %v3291
        %v3302 = vsel %vm2669, %v3281, 0
        %v3305 = vsel %vm2669, %v3282, 0
        %v3308 = vsel %vm2669, %v3283, 0
        %v3311 = vsel %vm2669, %v3284, 0
        %3313 = vmatpush.bf16.msra.mxu0 0
        %3314 = vmatpush.bf16.msra.mxu0 0
        %3315 = vmatpush.bf16.msra.mxu0 0
        %3316 = vmatpush.bf16.msra.mxu0 0
        %3317 = vmatpush.bf16.msra.mxu0 %v3296
        %3318 = vmatpush.bf16.msra.mxu0 %v3295
        %3319 = vmatpush.bf16.msra.mxu0 %v3294
        %3320 = vmatpush.bf16.msra.mxu0 %v3293
        %3321 = vmatmul.bf16.gmra.mxu0 %v3302
        %v3322 = vpop.f32.mrf.mxu0
        %v3323 = vadd.f32 0.0, %v3322
        %v3324 = vpop.f32.mrf.mxu0
        %v3325 = vadd.f32 0.0, %v3324
        %3326 = vmatmul.bf16.gmra.mxu0 %v3305
        %v3327 = vpop.f32.mrf.mxu0
        %v3328 = vadd.f32 0.0, %v3327
        %v3329 = vpop.f32.mrf.mxu0
        %v3330 = vadd.f32 0.0, %v3329
        %3331 = vmatmul.bf16.gmra.mxu0 %v3308
        %v3332 = vpop.f32.mrf.mxu0
        %v3333 = vadd.f32 0.0, %v3332
        %v3334 = vpop.f32.mrf.mxu0
        %v3335 = vadd.f32 0.0, %v3334
        %3336 = vmatmul.bf16.gmra.mxu0 %v3311
        %v3337 = vpop.f32.mrf.mxu0
        %v3338 = vadd.f32 0.0, %v3337
        %v3339 = vpop.f32.mrf.mxu0
        %v3340 = vadd.f32 0.0, %v3339
        %3341 = vdwg.mxu0
        %v3350 = vunpack.c.l.b16 %v3257
        %v3351 = vunpack.c.l.b16 %v3258
        %v3352 = vunpack.c.l.b16 %v3259
        %v3353 = vunpack.c.l.b16 %v3260
        %v3354 = vunpack.c.l.b16 %v3261
        %v3355 = vunpack.c.l.b16 %v3262
        %v3356 = vunpack.c.l.b16 %v3263
        %v3357 = vunpack.c.l.b16 %v3264
        %v3358 = vpack.c.b16 %v3351, %v3350
        %v3359 = vpack.c.b16 %v3353, %v3352
        %v3360 = vpack.c.b16 %v3355, %v3354
        %v3361 = vpack.c.b16 %v3357, %v3356
        %v3362 = vunpack.c.l.b16 %v2602
        %v3363 = vunpack.c.l.b16 %v2608
        %v3364 = vunpack.c.l.b16 %v2614
        %v3365 = vunpack.c.l.b16 %v2620
        %v3366 = vunpack.c.l.b16 %v2626
        %v3367 = vunpack.c.l.b16 %v2632
        %v3368 = vunpack.c.l.b16 %v2638
        %v3369 = vunpack.c.l.b16 %v2644
        %v3370 = vpack.c.b16 %v3363, %v3362
        %v3371 = vpack.c.b16 %v3365, %v3364
        %v3372 = vpack.c.b16 %v3367, %v3366
        %v3373 = vpack.c.b16 %v3369, %v3368
        %v3379 = vsel %vm2669, %v3358, 0
        %v3382 = vsel %vm2669, %v3359, 0
        %v3385 = vsel %vm2669, %v3360, 0
        %v3388 = vsel %vm2669, %v3361, 0
        %3390 = vmatpush.bf16.msra.mxu0 0
        %3391 = vmatpush.bf16.msra.mxu0 0
        %3392 = vmatpush.bf16.msra.mxu0 0
        %3393 = vmatpush.bf16.msra.mxu0 0
        %3394 = vmatpush.bf16.msra.mxu0 %v3373
        %3395 = vmatpush.bf16.msra.mxu0 %v3372
        %3396 = vmatpush.bf16.msra.mxu0 %v3371
        %3397 = vmatpush.bf16.msra.mxu0 %v3370
        %3398 = vmatmul.bf16.gmra.mxu0 %v3379
        %v3399 = vpop.f32.mrf.mxu0
        %v3400 = vadd.f32 0.0, %v3399
        %v3401 = vpop.f32.mrf.mxu0
        %v3402 = vadd.f32 0.0, %v3401
        %3403 = vmatmul.bf16.gmra.mxu0 %v3382
        %v3404 = vpop.f32.mrf.mxu0
        %v3405 = vadd.f32 0.0, %v3404
        %v3406 = vpop.f32.mrf.mxu0
        %v3407 = vadd.f32 0.0, %v3406
        %3408 = vmatmul.bf16.gmra.mxu0 %v3385
        %v3409 = vpop.f32.mrf.mxu0
        %v3410 = vadd.f32 0.0, %v3409
        %v3411 = vpop.f32.mrf.mxu0
        %v3412 = vadd.f32 0.0, %v3411
        %3413 = vmatmul.bf16.gmra.mxu0 %v3388
        %v3414 = vpop.f32.mrf.mxu0
        %v3415 = vadd.f32 0.0, %v3414
        %v3416 = vpop.f32.mrf.mxu0
        %v3417 = vadd.f32 0.0, %v3416
        %3418 = vdwg.mxu0
        %v3419 = vadd.f32 %v3233, %v3323
        %v3420 = vadd.f32 %v3234, %v3325
        %v3421 = vadd.f32 %v3235, %v3328
        %v3422 = vadd.f32 %v3236, %v3330
        %v3423 = vadd.f32 %v3237, %v3333
        %v3424 = vadd.f32 %v3238, %v3335
        %v3425 = vadd.f32 %v3239, %v3338
        %v3426 = vadd.f32 %v3240, %v3340
        %v3427 = vadd.f32 %v3241, %v3400
        %v3428 = vadd.f32 %v3242, %v3402
        %v3429 = vadd.f32 %v3243, %v3405
        %v3430 = vadd.f32 %v3244, %v3407
        %v3431 = vadd.f32 %v3245, %v3410
        %v3432 = vadd.f32 %v3246, %v3412
        %v3433 = vadd.f32 %v3247, %v3415
        %v3434 = vadd.f32 %v3248, %v3417
        %3435 = vst.msk [vmem:[#allocation4] sm:$0xff] %vm2669, %v3419
        %3436 = vst.msk [vmem:[#allocation4 + $0x8] sm:$0xff] %vm2669, %v3420
        %3437 = vst.msk [vmem:[#allocation4 + $0x10] sm:$0xff] %vm2669, %v3421
        %3438 = vst.msk [vmem:[#allocation4 + $0x18] sm:$0xff] %vm2669, %v3422
        %3439 = vst.msk [vmem:[#allocation4 + $0x20] sm:$0xff] %vm2669, %v3423
        %3440 = vst.msk [vmem:[#allocation4 + $0x28] sm:$0xff] %vm2669, %v3424
        %3441 = vst.msk [vmem:[#allocation4 + $0x30] sm:$0xff] %vm2669, %v3425
        %3442 = vst.msk [vmem:[#allocation4 + $0x38] sm:$0xff] %vm2669, %v3426
        %3443 = vst.msk [vmem:[#allocation4 + $0x40] sm:$0xff] %vm2669, %v3427
        %3444 = vst.msk [vmem:[#allocation4 + $0x48] sm:$0xff] %vm2669, %v3428
        %3445 = vst.msk [vmem:[#allocation4 + $0x50] sm:$0xff] %vm2669, %v3429
        %3446 = vst.msk [vmem:[#allocation4 + $0x58] sm:$0xff] %vm2669, %v3430
        %3447 = vst.msk [vmem:[#allocation4 + $0x60] sm:$0xff] %vm2669, %v3431
        %3448 = vst.msk [vmem:[#allocation4 + $0x68] sm:$0xff] %vm2669, %v3432
        %3449 = vst.msk [vmem:[#allocation4 + $0x70] sm:$0xff] %vm2669, %v3433
        %3450 = vst.msk [vmem:[#allocation4 + $0x78] sm:$0xff] %vm2669, %v3434
        %3451 = vst.msk [vmem:[#allocation2] sm:$0xff] %vm3120, %v2864
        %3452 = vst.msk [vmem:[#allocation2 + $0x8] sm:$0xff] %vm3120, %v2865
        %3453 = vst.msk [vmem:[#allocation2 + $0x10] sm:$0xff] %vm3120, %v2866
        %3454 = vst.msk [vmem:[#allocation2 + $0x18] sm:$0xff] %vm3120, %v2867
        %3455 = vst.msk [vmem:[#allocation2 + $0x20] sm:$0xff] %vm3120, %v2868
        %3456 = vst.msk [vmem:[#allocation2 + $0x28] sm:$0xff] %vm3120, %v2869
        %3457 = vst.msk [vmem:[#allocation2 + $0x30] sm:$0xff] %vm3120, %v2870
        %3458 = vst.msk [vmem:[#allocation2 + $0x38] sm:$0xff] %vm3120, %v2871
        %3459 = vst.msk [vmem:[#allocation2 + $0x40] sm:$0xff] %vm3120, %v2872
        %3460 = vst.msk [vmem:[#allocation2 + $0x48] sm:$0xff] %vm3120, %v2873
        %3461 = vst.msk [vmem:[#allocation2 + $0x50] sm:$0xff] %vm3120, %v2874
        %3462 = vst.msk [vmem:[#allocation2 + $0x58] sm:$0xff] %vm3120, %v2875
        %3463 = vst.msk [vmem:[#allocation2 + $0x60] sm:$0xff] %vm3120, %v2876
        %3464 = vst.msk [vmem:[#allocation2 + $0x68] sm:$0xff] %vm3120, %v2877
        %3465 = vst.msk [vmem:[#allocation2 + $0x70] sm:$0xff] %vm3120, %v2878
        %3466 = vst.msk [vmem:[#allocation2 + $0x78] sm:$0xff] %vm3120, %v2879
        %p3467 = scmp.eq.s32.totalorder %s21, 1
        // Predicated region
        $region160: #{attention_forward.4} parent=142 // pred_check
          %p3468 = pneg %p3467
        $region161: #{attention_forward.4} parent=142 // pred_check_branch
          %3470 = sbr.rel (%p3468) target = $region163
        $region162: #{attention_forward.4} parent=142 // pred_region
          %v3471 = vld [vmem:[#allocation4] sm:$0xff]
          %v3472 = vld [vmem:[#allocation4 + $0x8] sm:$0xff]
          %v3473 = vld [vmem:[#allocation4 + $0x10] sm:$0xff]
          %v3474 = vld [vmem:[#allocation4 + $0x18] sm:$0xff]
          %v3475 = vld [vmem:[#allocation4 + $0x20] sm:$0xff]
          %v3476 = vld [vmem:[#allocation4 + $0x28] sm:$0xff]
          %v3477 = vld [vmem:[#allocation4 + $0x30] sm:$0xff]
          %v3478 = vld [vmem:[#allocation4 + $0x38] sm:$0xff]
          %v3479 = vld [vmem:[#allocation4 + $0x40] sm:$0xff]
          %v3480 = vld [vmem:[#allocation4 + $0x48] sm:$0xff]
          %v3481 = vld [vmem:[#allocation4 + $0x50] sm:$0xff]
          %v3482 = vld [vmem:[#allocation4 + $0x58] sm:$0xff]
          %v3483 = vld [vmem:[#allocation4 + $0x60] sm:$0xff]
          %v3484 = vld [vmem:[#allocation4 + $0x68] sm:$0xff]
          %v3485 = vld [vmem:[#allocation4 + $0x70] sm:$0xff]
          %v3486 = vld [vmem:[#allocation4 + $0x78] sm:$0xff]
          %v3487 = vld [vmem:[#allocation3] sm:$0xff]
          %v3488 = vld [vmem:[#allocation3 + $0x8] sm:$0xff]
          %v3489 = vld [vmem:[#allocation3 + $0x10] sm:$0xff]
          %v3490 = vld [vmem:[#allocation3 + $0x18] sm:$0xff]
          %v3491 = vld [vmem:[#allocation3 + $0x20] sm:$0xff]
          %v3492 = vld [vmem:[#allocation3 + $0x28] sm:$0xff]
          %v3493 = vld [vmem:[#allocation3 + $0x30] sm:$0xff]
          %v3494 = vld [vmem:[#allocation3 + $0x38] sm:$0xff]
          %v3495 = vld [vmem:[#allocation3 + $0x40] sm:$0xff]
          %v3496 = vld [vmem:[#allocation3 + $0x48] sm:$0xff]
          %v3497 = vld [vmem:[#allocation3 + $0x50] sm:$0xff]
          %v3498 = vld [vmem:[#allocation3 + $0x58] sm:$0xff]
          %v3499 = vld [vmem:[#allocation3 + $0x60] sm:$0xff]
          %v3500 = vld [vmem:[#allocation3 + $0x68] sm:$0xff]
          %v3501 = vld [vmem:[#allocation3 + $0x70] sm:$0xff]
          %v3502 = vld [vmem:[#allocation3 + $0x78] sm:$0xff]
          %v3503 = vrcp.pop %v3487
          %v3504 = vrcp.pop %v3488
          %v3505 = vrcp.pop %v3489
          %v3506 = vrcp.pop %v3490
          %v3507 = vrcp.pop %v3491
          %v3508 = vrcp.pop %v3492
          %v3509 = vrcp.pop %v3493
          %v3510 = vrcp.pop %v3494
          %v3511 = vrcp.pop %v3495
          %v3512 = vrcp.pop %v3496
          %v3513 = vrcp.pop %v3497
          %v3514 = vrcp.pop %v3498
          %v3515 = vrcp.pop %v3499
          %v3516 = vrcp.pop %v3500
          %v3517 = vrcp.pop %v3501
          %v3518 = vrcp.pop %v3502
          %3520 = vset.pattern.permute.xlu0 0
          %3521 = vperm.xlu0 %3520, %v3503
          %v3522 = vpop.permute.xlu0 %3521
          %3525 = vset.pattern.permute.xlu0 0
          %3526 = vperm.xlu0 %3525, %v3504
          %v3527 = vpop.permute.xlu0 %3526
          %3530 = vset.pattern.permute.xlu0 0
          %3531 = vperm.xlu0 %3530, %v3505
          %v3532 = vpop.permute.xlu0 %3531
          %3535 = vset.pattern.permute.xlu0 0
          %3536 = vperm.xlu0 %3535, %v3506
          %v3537 = vpop.permute.xlu0 %3536
          %3540 = vset.pattern.permute.xlu0 0
          %3541 = vperm.xlu0 %3540, %v3507
          %v3542 = vpop.permute.xlu0 %3541
          %3545 = vset.pattern.permute.xlu0 0
          %3546 = vperm.xlu0 %3545, %v3508
          %v3547 = vpop.permute.xlu0 %3546
          %3550 = vset.pattern.permute.xlu0 0
          %3551 = vperm.xlu0 %3550, %v3509
          %v3552 = vpop.permute.xlu0 %3551
          %3555 = vset.pattern.permute.xlu0 0
          %3556 = vperm.xlu0 %3555, %v3510
          %v3557 = vpop.permute.xlu0 %3556
          %3560 = vset.pattern.permute.xlu0 0
          %3561 = vperm.xlu0 %3560, %v3511
          %v3562 = vpop.permute.xlu0 %3561
          %3565 = vset.pattern.permute.xlu0 0
          %3566 = vperm.xlu0 %3565, %v3512
          %v3567 = vpop.permute.xlu0 %3566
          %3570 = vset.pattern.permute.xlu0 0
          %3571 = vperm.xlu0 %3570, %v3513
          %v3572 = vpop.permute.xlu0 %3571
          %3575 = vset.pattern.permute.xlu0 0
          %3576 = vperm.xlu0 %3575, %v3514
          %v3577 = vpop.permute.xlu0 %3576
          %3580 = vset.pattern.permute.xlu0 0
          %3581 = vperm.xlu0 %3580, %v3515
          %v3582 = vpop.permute.xlu0 %3581
          %3585 = vset.pattern.permute.xlu0 0
          %3586 = vperm.xlu0 %3585, %v3516
          %v3587 = vpop.permute.xlu0 %3586
          %3590 = vset.pattern.permute.xlu0 0
          %3591 = vperm.xlu0 %3590, %v3517
          %v3592 = vpop.permute.xlu0 %3591
          %3595 = vset.pattern.permute.xlu0 0
          %3596 = vperm.xlu0 %3595, %v3518
          %v3597 = vpop.permute.xlu0 %3596
          %v3599 = vmul.f32 %v3471, %v3522
          %v3600 = vmul.f32 %v3472, %v3527
          %v3601 = vmul.f32 %v3473, %v3532
          %v3602 = vmul.f32 %v3474, %v3537
          %v3603 = vmul.f32 %v3475, %v3542
          %v3604 = vmul.f32 %v3476, %v3547
          %v3605 = vmul.f32 %v3477, %v3552
          %v3606 = vmul.f32 %v3478, %v3557
          %v3607 = vmul.f32 %v3479, %v3562
          %v3608 = vmul.f32 %v3480, %v3567
          %v3609 = vmul.f32 %v3481, %v3572
          %v3610 = vmul.f32 %v3482, %v3577
          %v3611 = vmul.f32 %v3483, %v3582
          %v3612 = vmul.f32 %v3484, %v3587
          %v3613 = vmul.f32 %v3485, %v3592
          %v3614 = vmul.f32 %v3486, %v3597
          %v3615 = vrot.slane %v3599, 4
          %vm3616 = vcmask 1047556
          %v3617 = vsel %vm3616, 0.0, %v3615
          %v3619 = vunpack.c.l.s4 1983009808
          %v3620 = vunpack.c.0.s8 %v3619
          %v3621 = vperm.slane %v3599, %v3620
          %v3623 = vunpack.c.l.s4 1983009808
          %v3624 = vunpack.c.0.s8 %v3623
          %v3625 = vperm.slane %v3617, %v3624
          %v3626 = vrot.slane %v3607, 4
          %v3627 = vsel %vm3616, 0.0, %v3626
          %v3629 = vunpack.c.l.s4 1983009808
          %v3630 = vunpack.c.0.s8 %v3629
          %v3631 = vperm.slane %v3607, %v3630
          %v3633 = vunpack.c.l.s4 1983009808
          %v3634 = vunpack.c.0.s8 %v3633
          %v3635 = vperm.slane %v3627, %v3634
          %v3636 = vrot.slane %v3631, 4
          %v3637 = vsel %vm3616, %v3636, %v3621
          %v3638 = vrot.slane %v3621, 4
          %v3639 = vsel %vm3616, %v3631, %v3638
          %v3641 = vunpack.c.l.s4 1934713408
          %v3642 = vunpack.c.0.s8 %v3641
          %v3643 = vperm.slane %v3637, %v3642
          %v3645 = vunpack.c.l.s4 1934713408
          %v3646 = vunpack.c.0.s8 %v3645
          %v3647 = vperm.slane %v3639, %v3646
          %v3648 = vrot.slane %v3635, 4
          %v3649 = vsel %vm3616, %v3648, %v3625
          %v3650 = vrot.slane %v3625, 4
          %v3651 = vsel %vm3616, %v3635, %v3650
          %v3653 = vunpack.c.l.s4 1934713408
          %v3654 = vunpack.c.0.s8 %v3653
          %v3655 = vperm.slane %v3649, %v3654
          %v3657 = vunpack.c.l.s4 1934713408
          %v3658 = vunpack.c.0.s8 %v3657
          %v3659 = vperm.slane %v3651, %v3658
          %v3660 = vrot.slane %v3643, 4
          %v3661 = vsel %vm3616, 0.0, %v3660
          %v3662 = vrot.slane %v3647, 4
          %v3663 = vsel %vm3616, 0.0, %v3662
          %v3664 = vrot.slane %v3655, 4
          %v3665 = vsel %vm3616, 0.0, %v3664
          %v3666 = vrot.slane %v3659, 4
          %v3667 = vsel %vm3616, 0.0, %v3666
          %v3668 = vrot.slane %v3600, 4
          %v3669 = vsel %vm3616, 0.0, %v3668
          %v3671 = vunpack.c.l.s4 1983009808
          %v3672 = vunpack.c.0.s8 %v3671
          %v3673 = vperm.slane %v3600, %v3672
          %v3675 = vunpack.c.l.s4 1983009808
          %v3676 = vunpack.c.0.s8 %v3675
          %v3677 = vperm.slane %v3669, %v3676
          %v3678 = vrot.slane %v3608, 4
          %v3679 = vsel %vm3616, 0.0, %v3678
          %v3681 = vunpack.c.l.s4 1983009808
          %v3682 = vunpack.c.0.s8 %v3681
          %v3683 = vperm.slane %v3608, %v3682
          %v3685 = vunpack.c.l.s4 1983009808
          %v3686 = vunpack.c.0.s8 %v3685
          %v3687 = vperm.slane %v3679, %v3686
          %v3688 = vrot.slane %v3683, 4
          %v3689 = vsel %vm3616, %v3688, %v3673
          %v3690 = vrot.slane %v3673, 4
          %v3691 = vsel %vm3616, %v3683, %v3690
          %v3693 = vunpack.c.l.s4 1934713408
          %v3694 = vunpack.c.0.s8 %v3693
          %v3695 = vperm.slane %v3689, %v3694
          %v3697 = vunpack.c.l.s4 1934713408
          %v3698 = vunpack.c.0.s8 %v3697
          %v3699 = vperm.slane %v3691, %v3698
          %v3700 = vrot.slane %v3687, 4
          %v3701 = vsel %vm3616, %v3700, %v3677
          %v3702 = vrot.slane %v3677, 4
          %v3703 = vsel %vm3616, %v3687, %v3702
          %v3705 = vunpack.c.l.s4 1934713408
          %v3706 = vunpack.c.0.s8 %v3705
          %v3707 = vperm.slane %v3701, %v3706
          %v3709 = vunpack.c.l.s4 1934713408
          %v3710 = vunpack.c.0.s8 %v3709
          %v3711 = vperm.slane %v3703, %v3710
          %v3712 = vrot.slane %v3695, 4
          %v3713 = vsel %vm3616, 0.0, %v3712
          %v3714 = vrot.slane %v3699, 4
          %v3715 = vsel %vm3616, 0.0, %v3714
          %v3716 = vrot.slane %v3707, 4
          %v3717 = vsel %vm3616, 0.0, %v3716
          %v3718 = vrot.slane %v3711, 4
          %v3719 = vsel %vm3616, 0.0, %v3718
          %v3720 = vrot.slane %v3601, 4
          %v3721 = vsel %vm3616, 0.0, %v3720
          %v3723 = vunpack.c.l.s4 1983009808
          %v3724 = vunpack.c.0.s8 %v3723
          %v3725 = vperm.slane %v3601, %v3724
          %v3727 = vunpack.c.l.s4 1983009808
          %v3728 = vunpack.c.0.s8 %v3727
          %v3729 = vperm.slane %v3721, %v3728
          %v3730 = vrot.slane %v3609, 4
          %v3731 = vsel %vm3616, 0.0, %v3730
          %v3733 = vunpack.c.l.s4 1983009808
          %v3734 = vunpack.c.0.s8 %v3733
          %v3735 = vperm.slane %v3609, %v3734
          %v3737 = vunpack.c.l.s4 1983009808
          %v3738 = vunpack.c.0.s8 %v3737
          %v3739 = vperm.slane %v3731, %v3738
          %v3740 = vrot.slane %v3735, 4
          %v3741 = vsel %vm3616, %v3740, %v3725
          %v3742 = vrot.slane %v3725, 4
          %v3743 = vsel %vm3616, %v3735, %v3742
          %v3745 = vunpack.c.l.s4 1934713408
          %v3746 = vunpack.c.0.s8 %v3745
          %v3747 = vperm.slane %v3741, %v3746
          %v3749 = vunpack.c.l.s4 1934713408
          %v3750 = vunpack.c.0.s8 %v3749
          %v3751 = vperm.slane %v3743, %v3750
          %v3752 = vrot.slane %v3739, 4
          %v3753 = vsel %vm3616, %v3752, %v3729
          %v3754 = vrot.slane %v3729, 4
          %v3755 = vsel %vm3616, %v3739, %v3754
          %v3757 = vunpack.c.l.s4 1934713408
          %v3758 = vunpack.c.0.s8 %v3757
          %v3759 = vperm.slane %v3753, %v3758
          %v3761 = vunpack.c.l.s4 1934713408
          %v3762 = vunpack.c.0.s8 %v3761
          %v3763 = vperm.slane %v3755, %v3762
          %v3764 = vrot.slane %v3747, 4
          %v3765 = vsel %vm3616, 0.0, %v3764
          %v3766 = vrot.slane %v3751, 4
          %v3767 = vsel %vm3616, 0.0, %v3766
          %v3768 = vrot.slane %v3759, 4
          %v3769 = vsel %vm3616, 0.0, %v3768
          %v3770 = vrot.slane %v3763, 4
          %v3771 = vsel %vm3616, 0.0, %v3770
          %v3772 = vrot.slane %v3602, 4
          %v3773 = vsel %vm3616, 0.0, %v3772
          %v3775 = vunpack.c.l.s4 1983009808
          %v3776 = vunpack.c.0.s8 %v3775
          %v3777 = vperm.slane %v3602, %v3776
          %v3779 = vunpack.c.l.s4 1983009808
          %v3780 = vunpack.c.0.s8 %v3779
          %v3781 = vperm.slane %v3773, %v3780
          %v3782 = vrot.slane %v3610, 4
          %v3783 = vsel %vm3616, 0.0, %v3782
          %v3785 = vunpack.c.l.s4 1983009808
          %v3786 = vunpack.c.0.s8 %v3785
          %v3787 = vperm.slane %v3610, %v3786
          %v3789 = vunpack.c.l.s4 1983009808
          %v3790 = vunpack.c.0.s8 %v3789
          %v3791 = vperm.slane %v3783, %v3790
          %v3792 = vrot.slane %v3787, 4
          %v3793 = vsel %vm3616, %v3792, %v3777
          %v3794 = vrot.slane %v3777, 4
          %v3795 = vsel %vm3616, %v3787, %v3794
          %v3797 = vunpack.c.l.s4 1934713408
          %v3798 = vunpack.c.0.s8 %v3797
          %v3799 = vperm.slane %v3793, %v3798
          %v3801 = vunpack.c.l.s4 1934713408
          %v3802 = vunpack.c.0.s8 %v3801
          %v3803 = vperm.slane %v3795, %v3802
          %v3804 = vrot.slane %v3791, 4
          %v3805 = vsel %vm3616, %v3804, %v3781
          %v3806 = vrot.slane %v3781, 4
          %v3807 = vsel %vm3616, %v3791, %v3806
          %v3809 = vunpack.c.l.s4 1934713408
          %v3810 = vunpack.c.0.s8 %v3809
          %v3811 = vperm.slane %v3805, %v3810
          %v3813 = vunpack.c.l.s4 1934713408
          %v3814 = vunpack.c.0.s8 %v3813
          %v3815 = vperm.slane %v3807, %v3814
          %v3816 = vrot.slane %v3799, 4
          %v3817 = vsel %vm3616, 0.0, %v3816
          %v3818 = vrot.slane %v3803, 4
          %v3819 = vsel %vm3616, 0.0, %v3818
          %v3820 = vrot.slane %v3811, 4
          %v3821 = vsel %vm3616, 0.0, %v3820
          %v3822 = vrot.slane %v3815, 4
          %v3823 = vsel %vm3616, 0.0, %v3822
          %v3824 = vrot.slane %v3603, 4
          %v3825 = vsel %vm3616, 0.0, %v3824
          %v3827 = vunpack.c.l.s4 1983009808
          %v3828 = vunpack.c.0.s8 %v3827
          %v3829 = vperm.slane %v3603, %v3828
          %v3831 = vunpack.c.l.s4 1983009808
          %v3832 = vunpack.c.0.s8 %v3831
          %v3833 = vperm.slane %v3825, %v3832
          %v3834 = vrot.slane %v3611, 4
          %v3835 = vsel %vm3616, 0.0, %v3834
          %v3837 = vunpack.c.l.s4 1983009808
          %v3838 = vunpack.c.0.s8 %v3837
          %v3839 = vperm.slane %v3611, %v3838
          %v3841 = vunpack.c.l.s4 1983009808
          %v3842 = vunpack.c.0.s8 %v3841
          %v3843 = vperm.slane %v3835, %v3842
          %v3844 = vrot.slane %v3839, 4
          %v3845 = vsel %vm3616, %v3844, %v3829
          %v3846 = vrot.slane %v3829, 4
          %v3847 = vsel %vm3616, %v3839, %v3846
          %v3849 = vunpack.c.l.s4 1934713408
          %v3850 = vunpack.c.0.s8 %v3849
          %v3851 = vperm.slane %v3845, %v3850
          %v3853 = vunpack.c.l.s4 1934713408
          %v3854 = vunpack.c.0.s8 %v3853
          %v3855 = vperm.slane %v3847, %v3854
          %v3856 = vrot.slane %v3843, 4
          %v3857 = vsel %vm3616, %v3856, %v3833
          %v3858 = vrot.slane %v3833, 4
          %v3859 = vsel %vm3616, %v3843, %v3858
          %v3861 = vunpack.c.l.s4 1934713408
          %v3862 = vunpack.c.0.s8 %v3861
          %v3863 = vperm.slane %v3857, %v3862
          %v3865 = vunpack.c.l.s4 1934713408
          %v3866 = vunpack.c.0.s8 %v3865
          %v3867 = vperm.slane %v3859, %v3866
          %v3868 = vrot.slane %v3851, 4
          %v3869 = vsel %vm3616, 0.0, %v3868
          %v3870 = vrot.slane %v3855, 4
          %v3871 = vsel %vm3616, 0.0, %v3870
          %v3872 = vrot.slane %v3863, 4
          %v3873 = vsel %vm3616, 0.0, %v3872
          %v3874 = vrot.slane %v3867, 4
          %v3875 = vsel %vm3616, 0.0, %v3874
          %v3876 = vrot.slane %v3604, 4
          %v3877 = vsel %vm3616, 0.0, %v3876
          %v3879 = vunpack.c.l.s4 1983009808
          %v3880 = vunpack.c.0.s8 %v3879
          %v3881 = vperm.slane %v3604, %v3880
          %v3883 = vunpack.c.l.s4 1983009808
          %v3884 = vunpack.c.0.s8 %v3883
          %v3885 = vperm.slane %v3877, %v3884
          %v3886 = vrot.slane %v3612, 4
          %v3887 = vsel %vm3616, 0.0, %v3886
          %v3889 = vunpack.c.l.s4 1983009808
          %v3890 = vunpack.c.0.s8 %v3889
          %v3891 = vperm.slane %v3612, %v3890
          %v3893 = vunpack.c.l.s4 1983009808
          %v3894 = vunpack.c.0.s8 %v3893
          %v3895 = vperm.slane %v3887, %v3894
          %v3896 = vrot.slane %v3891, 4
          %v3897 = vsel %vm3616, %v3896, %v3881
          %v3898 = vrot.slane %v3881, 4
          %v3899 = vsel %vm3616, %v3891, %v3898
          %v3901 = vunpack.c.l.s4 1934713408
          %v3902 = vunpack.c.0.s8 %v3901
          %v3903 = vperm.slane %v3897, %v3902
          %v3905 = vunpack.c.l.s4 1934713408
          %v3906 = vunpack.c.0.s8 %v3905
          %v3907 = vperm.slane %v3899, %v3906
          %v3908 = vrot.slane %v3895, 4
          %v3909 = vsel %vm3616, %v3908, %v3885
          %v3910 = vrot.slane %v3885, 4
          %v3911 = vsel %vm3616, %v3895, %v3910
          %v3913 = vunpack.c.l.s4 1934713408
          %v3914 = vunpack.c.0.s8 %v3913
          %v3915 = vperm.slane %v3909, %v3914
          %v3917 = vunpack.c.l.s4 1934713408
          %v3918 = vunpack.c.0.s8 %v3917
          %v3919 = vperm.slane %v3911, %v3918
          %v3920 = vrot.slane %v3903, 4
          %v3921 = vsel %vm3616, 0.0, %v3920
          %v3922 = vrot.slane %v3907, 4
          %v3923 = vsel %vm3616, 0.0, %v3922
          %v3924 = vrot.slane %v3915, 4
          %v3925 = vsel %vm3616, 0.0, %v3924
          %v3926 = vrot.slane %v3919, 4
          %v3927 = vsel %vm3616, 0.0, %v3926
          %v3928 = vrot.slane %v3605, 4
          %v3929 = vsel %vm3616, 0.0, %v3928
          %v3931 = vunpack.c.l.s4 1983009808
          %v3932 = vunpack.c.0.s8 %v3931
          %v3933 = vperm.slane %v3605, %v3932
          %v3935 = vunpack.c.l.s4 1983009808
          %v3936 = vunpack.c.0.s8 %v3935
          %v3937 = vperm.slane %v3929, %v3936
          %v3938 = vrot.slane %v3613, 4
          %v3939 = vsel %vm3616, 0.0, %v3938
          %v3941 = vunpack.c.l.s4 1983009808
          %v3942 = vunpack.c.0.s8 %v3941
          %v3943 = vperm.slane %v3613, %v3942
          %v3945 = vunpack.c.l.s4 1983009808
          %v3946 = vunpack.c.0.s8 %v3945
          %v3947 = vperm.slane %v3939, %v3946
          %v3948 = vrot.slane %v3943, 4
          %v3949 = vsel %vm3616, %v3948, %v3933
          %v3950 = vrot.slane %v3933, 4
          %v3951 = vsel %vm3616, %v3943, %v3950
          %v3953 = vunpack.c.l.s4 1934713408
          %v3954 = vunpack.c.0.s8 %v3953
          %v3955 = vperm.slane %v3949, %v3954
          %v3957 = vunpack.c.l.s4 1934713408
          %v3958 = vunpack.c.0.s8 %v3957
          %v3959 = vperm.slane %v3951, %v3958
          %v3960 = vrot.slane %v3947, 4
          %v3961 = vsel %vm3616, %v3960, %v3937
          %v3962 = vrot.slane %v3937, 4
          %v3963 = vsel %vm3616, %v3947, %v3962
          %v3965 = vunpack.c.l.s4 1934713408
          %v3966 = vunpack.c.0.s8 %v3965
          %v3967 = vperm.slane %v3961, %v3966
          %v3969 = vunpack.c.l.s4 1934713408
          %v3970 = vunpack.c.0.s8 %v3969
          %v3971 = vperm.slane %v3963, %v3970
          %v3972 = vrot.slane %v3955, 4
          %v3973 = vsel %vm3616, 0.0, %v3972
          %v3974 = vrot.slane %v3959, 4
          %v3975 = vsel %vm3616, 0.0, %v3974
          %v3976 = vrot.slane %v3967, 4
          %v3977 = vsel %vm3616, 0.0, %v3976
          %v3978 = vrot.slane %v3971, 4
          %v3979 = vsel %vm3616, 0.0, %v3978
          %v3980 = vrot.slane %v3606, 4
          %v3981 = vsel %vm3616, 0.0, %v3980
          %v3983 = vunpack.c.l.s4 1983009808
          %v3984 = vunpack.c.0.s8 %v3983
          %v3985 = vperm.slane %v3606, %v3984
          %v3987 = vunpack.c.l.s4 1983009808
          %v3988 = vunpack.c.0.s8 %v3987
          %v3989 = vperm.slane %v3981, %v3988
          %v3990 = vrot.slane %v3614, 4
          %v3991 = vsel %vm3616, 0.0, %v3990
          %v3993 = vunpack.c.l.s4 1983009808
          %v3994 = vunpack.c.0.s8 %v3993
          %v3995 = vperm.slane %v3614, %v3994
          %v3997 = vunpack.c.l.s4 1983009808
          %v3998 = vunpack.c.0.s8 %v3997
          %v3999 = vperm.slane %v3991, %v3998
          %v4000 = vrot.slane %v3995, 4
          %v4001 = vsel %vm3616, %v4000, %v3985
          %v4002 = vrot.slane %v3985, 4
          %v4003 = vsel %vm3616, %v3995, %v4002
          %v4005 = vunpack.c.l.s4 1934713408
          %v4006 = vunpack.c.0.s8 %v4005
          %v4007 = vperm.slane %v4001, %v4006
          %v4009 = vunpack.c.l.s4 1934713408
          %v4010 = vunpack.c.0.s8 %v4009
          %v4011 = vperm.slane %v4003, %v4010
          %v4012 = vrot.slane %v3999, 4
          %v4013 = vsel %vm3616, %v4012, %v3989
          %v4014 = vrot.slane %v3989, 4
          %v4015 = vsel %vm3616, %v3999, %v4014
          %v4017 = vunpack.c.l.s4 1934713408
          %v4018 = vunpack.c.0.s8 %v4017
          %v4019 = vperm.slane %v4013, %v4018
          %v4021 = vunpack.c.l.s4 1934713408
          %v4022 = vunpack.c.0.s8 %v4021
          %v4023 = vperm.slane %v4015, %v4022
          %v4024 = vrot.slane %v4007, 4
          %v4025 = vsel %vm3616, 0.0, %v4024
          %v4026 = vrot.slane %v4011, 4
          %v4027 = vsel %vm3616, 0.0, %v4026
          %v4028 = vrot.slane %v4019, 4
          %v4029 = vsel %vm3616, 0.0, %v4028
          %v4030 = vrot.slane %v4023, 4
          %v4031 = vsel %vm3616, 0.0, %v4030
          %v4032 = vsel %vm3616, %v3662, %v3643
          %v4034 = vunpack.c.l.s4 1983009808
          %v4035 = vunpack.c.0.s8 %v4034
          %v4036 = vperm.slane %v4032, %v4035
          %v4037 = vrot.slane %v3663, 4
          %v4038 = vsel %vm3616, %v4037, %v3661
          %v4040 = vunpack.c.l.s4 1983009808
          %v4041 = vunpack.c.0.s8 %v4040
          %v4042 = vperm.slane %v4038, %v4041
          %v4043 = vsel %vm3616, %v3666, %v3655
          %v4045 = vunpack.c.l.s4 1983009808
          %v4046 = vunpack.c.0.s8 %v4045
          %v4047 = vperm.slane %v4043, %v4046
          %v4048 = vrot.slane %v3667, 4
          %v4049 = vsel %vm3616, %v4048, %v3665
          %v4051 = vunpack.c.l.s4 1983009808
          %v4052 = vunpack.c.0.s8 %v4051
          %v4053 = vperm.slane %v4049, %v4052
          %v4054 = vrot.slane %v4042, 4
          %v4055 = vsel %vm3616, %v4054, %v4036
          %v4057 = vunpack.c.l.s4 1934713408
          %v4058 = vunpack.c.0.s8 %v4057
          %v4059 = vperm.slane %v4055, %v4058
          %v4060 = vrot.slane %v4053, 4
          %v4061 = vsel %vm3616, %v4060, %v4047
          %v4063 = vunpack.c.l.s4 1934713408
          %v4064 = vunpack.c.0.s8 %v4063
          %v4065 = vperm.slane %v4061, %v4064
          %v4066 = vrot.slane %v4065, 4
          %v4067 = vsel %vm3616, %v4066, %v4059
          %v4068 = vrot.slane %v4059, 4
          %v4069 = vsel %vm3616, %v4065, %v4068
          %v4070 = vsel %vm3616, %v3714, %v3695
          %v4072 = vunpack.c.l.s4 1983009808
          %v4073 = vunpack.c.0.s8 %v4072
          %v4074 = vperm.slane %v4070, %v4073
          %v4075 = vrot.slane %v3715, 4
          %v4076 = vsel %vm3616, %v4075, %v3713
          %v4078 = vunpack.c.l.s4 1983009808
          %v4079 = vunpack.c.0.s8 %v4078
          %v4080 = vperm.slane %v4076, %v4079
          %v4081 = vsel %vm3616, %v3718, %v3707
          %v4083 = vunpack.c.l.s4 1983009808
          %v4084 = vunpack.c.0.s8 %v4083
          %v4085 = vperm.slane %v4081, %v4084
          %v4086 = vrot.slane %v3719, 4
          %v4087 = vsel %vm3616, %v4086, %v3717
          %v4089 = vunpack.c.l.s4 1983009808
          %v4090 = vunpack.c.0.s8 %v4089
          %v4091 = vperm.slane %v4087, %v4090
          %v4092 = vrot.slane %v4080, 4
          %v4093 = vsel %vm3616, %v4092, %v4074
          %v4095 = vunpack.c.l.s4 1934713408
          %v4096 = vunpack.c.0.s8 %v4095
          %v4097 = vperm.slane %v4093, %v4096
          %v4098 = vrot.slane %v4091, 4
          %v4099 = vsel %vm3616, %v4098, %v4085
          %v4101 = vunpack.c.l.s4 1934713408
          %v4102 = vunpack.c.0.s8 %v4101
          %v4103 = vperm.slane %v4099, %v4102
          %v4104 = vrot.slane %v4103, 4
          %v4105 = vsel %vm3616, %v4104, %v4097
          %v4106 = vrot.slane %v4097, 4
          %v4107 = vsel %vm3616, %v4103, %v4106
          %v4108 = vsel %vm3616, %v3766, %v3747
          %v4110 = vunpack.c.l.s4 1983009808
          %v4111 = vunpack.c.0.s8 %v4110
          %v4112 = vperm.slane %v4108, %v4111
          %v4113 = vrot.slane %v3767, 4
          %v4114 = vsel %vm3616, %v4113, %v3765
          %v4116 = vunpack.c.l.s4 1983009808
          %v4117 = vunpack.c.0.s8 %v4116
          %v4118 = vperm.slane %v4114, %v4117
          %v4119 = vsel %vm3616, %v3770, %v3759
          %v4121 = vunpack.c.l.s4 1983009808
          %v4122 = vunpack.c.0.s8 %v4121
          %v4123 = vperm.slane %v4119, %v4122
          %v4124 = vrot.slane %v3771, 4
          %v4125 = vsel %vm3616, %v4124, %v3769
          %v4127 = vunpack.c.l.s4 1983009808
          %v4128 = vunpack.c.0.s8 %v4127
          %v4129 = vperm.slane %v4125, %v4128
          %v4130 = vrot.slane %v4118, 4
          %v4131 = vsel %vm3616, %v4130, %v4112
          %v4133 = vunpack.c.l.s4 1934713408
          %v4134 = vunpack.c.0.s8 %v4133
          %v4135 = vperm.slane %v4131, %v4134
          %v4136 = vrot.slane %v4129, 4
          %v4137 = vsel %vm3616, %v4136, %v4123
          %v4139 = vunpack.c.l.s4 1934713408
          %v4140 = vunpack.c.0.s8 %v4139
          %v4141 = vperm.slane %v4137, %v4140
          %v4142 = vrot.slane %v4141, 4
          %v4143 = vsel %vm3616, %v4142, %v4135
          %v4144 = vrot.slane %v4135, 4
          %v4145 = vsel %vm3616, %v4141, %v4144
          %v4146 = vsel %vm3616, %v3818, %v3799
          %v4148 = vunpack.c.l.s4 1983009808
          %v4149 = vunpack.c.0.s8 %v4148
          %v4150 = vperm.slane %v4146, %v4149
          %v4151 = vrot.slane %v3819, 4
          %v4152 = vsel %vm3616, %v4151, %v3817
          %v4154 = vunpack.c.l.s4 1983009808
          %v4155 = vunpack.c.0.s8 %v4154
          %v4156 = vperm.slane %v4152, %v4155
          %v4157 = vsel %vm3616, %v3822, %v3811
          %v4159 = vunpack.c.l.s4 1983009808
          %v4160 = vunpack.c.0.s8 %v4159
          %v4161 = vperm.slane %v4157, %v4160
          %v4162 = vrot.slane %v3823, 4
          %v4163 = vsel %vm3616, %v4162, %v3821
          %v4165 = vunpack.c.l.s4 1983009808
          %v4166 = vunpack.c.0.s8 %v4165
          %v4167 = vperm.slane %v4163, %v4166
          %v4168 = vrot.slane %v4156, 4
          %v4169 = vsel %vm3616, %v4168, %v4150
          %v4171 = vunpack.c.l.s4 1934713408
          %v4172 = vunpack.c.0.s8 %v4171
          %v4173 = vperm.slane %v4169, %v4172
          %v4174 = vrot.slane %v4167, 4
          %v4175 = vsel %vm3616, %v4174, %v4161
          %v4177 = vunpack.c.l.s4 1934713408
          %v4178 = vunpack.c.0.s8 %v4177
          %v4179 = vperm.slane %v4175, %v4178
          %v4180 = vrot.slane %v4179, 4
          %v4181 = vsel %vm3616, %v4180, %v4173
          %v4182 = vrot.slane %v4173, 4
          %v4183 = vsel %vm3616, %v4179, %v4182
          %v4184 = vsel %vm3616, %v3870, %v3851
          %v4186 = vunpack.c.l.s4 1983009808
          %v4187 = vunpack.c.0.s8 %v4186
          %v4188 = vperm.slane %v4184, %v4187
          %v4189 = vrot.slane %v3871, 4
          %v4190 = vsel %vm3616, %v4189, %v3869
          %v4192 = vunpack.c.l.s4 1983009808
          %v4193 = vunpack.c.0.s8 %v4192
          %v4194 = vperm.slane %v4190, %v4193
          %v4195 = vsel %vm3616, %v3874, %v3863
          %v4197 = vunpack.c.l.s4 1983009808
          %v4198 = vunpack.c.0.s8 %v4197
          %v4199 = vperm.slane %v4195, %v4198
          %v4200 = vrot.slane %v3875, 4
          %v4201 = vsel %vm3616, %v4200, %v3873
          %v4203 = vunpack.c.l.s4 1983009808
          %v4204 = vunpack.c.0.s8 %v4203
          %v4205 = vperm.slane %v4201, %v4204
          %v4206 = vrot.slane %v4194, 4
          %v4207 = vsel %vm3616, %v4206, %v4188
          %v4209 = vunpack.c.l.s4 1934713408
          %v4210 = vunpack.c.0.s8 %v4209
          %v4211 = vperm.slane %v4207, %v4210
          %v4212 = vrot.slane %v4205, 4
          %v4213 = vsel %vm3616, %v4212, %v4199
          %v4215 = vunpack.c.l.s4 1934713408
          %v4216 = vunpack.c.0.s8 %v4215
          %v4217 = vperm.slane %v4213, %v4216
          %v4218 = vrot.slane %v4217, 4
          %v4219 = vsel %vm3616, %v4218, %v4211
          %v4220 = vrot.slane %v4211, 4
          %v4221 = vsel %vm3616, %v4217, %v4220
          %v4222 = vsel %vm3616, %v3922, %v3903
          %v4224 = vunpack.c.l.s4 1983009808
          %v4225 = vunpack.c.0.s8 %v4224
          %v4226 = vperm.slane %v4222, %v4225
          %v4227 = vrot.slane %v3923, 4
          %v4228 = vsel %vm3616, %v4227, %v3921
          %v4230 = vunpack.c.l.s4 1983009808
          %v4231 = vunpack.c.0.s8 %v4230
          %v4232 = vperm.slane %v4228, %v4231
          %v4233 = vsel %vm3616, %v3926, %v3915
          %v4235 = vunpack.c.l.s4 1983009808
          %v4236 = vunpack.c.0.s8 %v4235
          %v4237 = vperm.slane %v4233, %v4236
          %v4238 = vrot.slane %v3927, 4
          %v4239 = vsel %vm3616, %v4238, %v3925
          %v4241 = vunpack.c.l.s4 1983009808
          %v4242 = vunpack.c.0.s8 %v4241
          %v4243 = vperm.slane %v4239, %v4242
          %v4244 = vrot.slane %v4232, 4
          %v4245 = vsel %vm3616, %v4244, %v4226
          %v4247 = vunpack.c.l.s4 1934713408
          %v4248 = vunpack.c.0.s8 %v4247
          %v4249 = vperm.slane %v4245, %v4248
          %v4250 = vrot.slane %v4243, 4
          %v4251 = vsel %vm3616, %v4250, %v4237
          %v4253 = vunpack.c.l.s4 1934713408
          %v4254 = vunpack.c.0.s8 %v4253
          %v4255 = vperm.slane %v4251, %v4254
          %v4256 = vrot.slane %v4255, 4
          %v4257 = vsel %vm3616, %v4256, %v4249
          %v4258 = vrot.slane %v4249, 4
          %v4259 = vsel %vm3616, %v4255, %v4258
          %v4260 = vsel %vm3616, %v3974, %v3955
          %v4262 = vunpack.c.l.s4 1983009808
          %v4263 = vunpack.c.0.s8 %v4262
          %v4264 = vperm.slane %v4260, %v4263
          %v4265 = vrot.slane %v3975, 4
          %v4266 = vsel %vm3616, %v4265, %v3973
          %v4268 = vunpack.c.l.s4 1983009808
          %v4269 = vunpack.c.0.s8 %v4268
          %v4270 = vperm.slane %v4266, %v4269
          %v4271 = vsel %vm3616, %v3978, %v3967
          %v4273 = vunpack.c.l.s4 1983009808
          %v4274 = vunpack.c.0.s8 %v4273
          %v4275 = vperm.slane %v4271, %v4274
          %v4276 = vrot.slane %v3979, 4
          %v4277 = vsel %vm3616, %v4276, %v3977
          %v4279 = vunpack.c.l.s4 1983009808
          %v4280 = vunpack.c.0.s8 %v4279
          %v4281 = vperm.slane %v4277, %v4280
          %v4282 = vrot.slane %v4270, 4
          %v4283 = vsel %vm3616, %v4282, %v4264
          %v4285 = vunpack.c.l.s4 1934713408
          %v4286 = vunpack.c.0.s8 %v4285
          %v4287 = vperm.slane %v4283, %v4286
          %v4288 = vrot.slane %v4281, 4
          %v4289 = vsel %vm3616, %v4288, %v4275
          %v4291 = vunpack.c.l.s4 1934713408
          %v4292 = vunpack.c.0.s8 %v4291
          %v4293 = vperm.slane %v4289, %v4292
          %v4294 = vrot.slane %v4293, 4
          %v4295 = vsel %vm3616, %v4294, %v4287
          %v4296 = vrot.slane %v4287, 4
          %v4297 = vsel %vm3616, %v4293, %v4296
          %v4298 = vsel %vm3616, %v4026, %v4007
          %v4300 = vunpack.c.l.s4 1983009808
          %v4301 = vunpack.c.0.s8 %v4300
          %v4302 = vperm.slane %v4298, %v4301
          %v4303 = vrot.slane %v4027, 4
          %v4304 = vsel %vm3616, %v4303, %v4025
          %v4306 = vunpack.c.l.s4 1983009808
          %v4307 = vunpack.c.0.s8 %v4306
          %v4308 = vperm.slane %v4304, %v4307
          %v4309 = vsel %vm3616, %v4030, %v4019
          %v4311 = vunpack.c.l.s4 1983009808
          %v4312 = vunpack.c.0.s8 %v4311
          %v4313 = vperm.slane %v4309, %v4312
          %v4314 = vrot.slane %v4031, 4
          %v4315 = vsel %vm3616, %v4314, %v4029
          %v4317 = vunpack.c.l.s4 1983009808
          %v4318 = vunpack.c.0.s8 %v4317
          %v4319 = vperm.slane %v4315, %v4318
          %v4320 = vrot.slane %v4308, 4
          %v4321 = vsel %vm3616, %v4320, %v4302
          %v4323 = vunpack.c.l.s4 1934713408
          %v4324 = vunpack.c.0.s8 %v4323
          %v4325 = vperm.slane %v4321, %v4324
          %v4326 = vrot.slane %v4319, 4
          %v4327 = vsel %vm3616, %v4326, %v4313
          %v4329 = vunpack.c.l.s4 1934713408
          %v4330 = vunpack.c.0.s8 %v4329
          %v4331 = vperm.slane %v4327, %v4330
          %v4332 = vrot.slane %v4331, 4
          %v4333 = vsel %vm3616, %v4332, %v4325
          %v4334 = vrot.slane %v4325, 4
          %v4335 = vsel %vm3616, %v4331, %v4334
          %4344 = vrot.lane.b32.xlu0 %v4069, 64
          %v4345 = vpop.permute.xlu0 %4344
          %4346 = vrot.lane.b32.xlu0 %v4107, 64
          %v4347 = vpop.permute.xlu0 %4346
          %4348 = vrot.lane.b32.xlu0 %v4145, 64
          %v4349 = vpop.permute.xlu0 %4348
          %4350 = vrot.lane.b32.xlu0 %v4183, 64
          %v4351 = vpop.permute.xlu0 %4350
          %4352 = vrot.lane.b32.xlu0 %v4221, 64
          %v4353 = vpop.permute.xlu0 %4352
          %4354 = vrot.lane.b32.xlu0 %v4259, 64
          %v4355 = vpop.permute.xlu0 %4354
          %4356 = vrot.lane.b32.xlu0 %v4297, 64
          %v4357 = vpop.permute.xlu0 %4356
          %4358 = vrot.lane.b32.xlu0 %v4335, 64
          %v4359 = vpop.permute.xlu0 %4358
          %v4368 = vsel %vm2669, %v4067, %v4345
          %v4369 = vsel %vm2669, %v4105, %v4347
          %v4370 = vsel %vm2669, %v4143, %v4349
          %v4371 = vsel %vm2669, %v4181, %v4351
          %v4372 = vsel %vm2669, %v4219, %v4353
          %v4373 = vsel %vm2669, %v4257, %v4355
          %v4374 = vsel %vm2669, %v4295, %v4357
          %v4375 = vsel %vm2669, %v4333, %v4359
          %v4376 = vpack.c.bf16 %v4368, %v4368
          %v4377 = vpack.c.bf16 %v4369, %v4369
          %v4378 = vpack.c.bf16 %v4370, %v4370
          %v4379 = vpack.c.bf16 %v4371, %v4371
          %v4380 = vpack.c.bf16 %v4372, %v4372
          %v4381 = vpack.c.bf16 %v4373, %v4373
          %v4382 = vpack.c.bf16 %v4374, %v4374
          %v4383 = vpack.c.bf16 %v4375, %v4375
          %4384 = vst [vmem:[%s475] sm:$0xf] %v4376
          %4385 = vst [vmem:[%s475 + $0x4] sm:$0xf] %v4377
          %4386 = vst [vmem:[%s475 + $0x8] sm:$0xf] %v4378
          %4387 = vst [vmem:[%s475 + $0xc] sm:$0xf] %v4379
          %4388 = vst [vmem:[%s475 + $0x10] sm:$0xf] %v4380
          %4389 = vst [vmem:[%s475 + $0x14] sm:$0xf] %v4381
          %4390 = vst [vmem:[%s475 + $0x18] sm:$0xf] %v4382
          %4391 = vst [vmem:[%s475 + $0x1c] sm:$0xf] %v4383
        $region163: #{attention_forward.4} parent=142 // pred_fallthru
          _
        %s4392 = smul.u32 8, %s20
        %p4393 = scmp.lt.s32.totalorder %s19, 1
        %s4394 = scalar_select %p4393, %s19, 1
        %p4395 = scmp.lt.s32.totalorder %s4392, 15
        %s4396 = scalar_select %p4395, %s4392, 15
        %s4397 = smul.addr %s4394, 16
        %s4398 = sadd.s32 %s4396, %s4397
        %s4399 = smul.addr %s4398, 4
        %s4400 = scalar_lea.vmem %s3, %s4399
        // Predicated region
        $region164: #{attention_forward.4} parent=142 // pred_check
          %p4401 = pneg %p137
        $region165: #{attention_forward.4} parent=142 // pred_check_branch
          %4403 = sbr.rel (%p4401) target = $region167
        $region166: #{attention_forward.4} parent=142 // pred_region
          %s4404 = smul.u32 8, %s20
        $region167: #{attention_forward.4} parent=142 // pred_fallthru
          _
      $region143: #{attention_forward.4} parent=5 // pred_fallthru
        _
      %p4405 = scmp.le.s32.totalorder 2, %s9
      // Predicated region
      $region168: #{attention_forward.4} parent=5 // pred_check
        %p4406 = pneg %p4405
      $region169: #{attention_forward.4} parent=5 // pred_check_branch
        %4408 = sbr.rel (%p4406) target = $region171
      $region170: #{attention_forward.4} parent=5 // pred_region
        %s4409 = ssub.s32 %s9, 2
        // Predicated region
        $region172: #{attention_forward.4} parent=170 // pred_check
          %p4410 = pneg %p143
        $region173: #{attention_forward.4} parent=170 // pred_check_branch
          %4412 = sbr.rel (%p4410) target = $region175
        $region174: #{attention_forward.4} parent=170 // pred_region
          %s4413 = smul.u32 8, %s23
          %p4414 = scmp.lt.s32.totalorder %s22, 1
          %s4415 = scalar_select %p4414, %s22, 1
          %p4416 = scmp.lt.s32.totalorder %s4413, 15
          %s4417 = scalar_select %p4416, %s4413, 15
          %s4418 = smul.addr %s4415, 16
          %s4419 = sadd.s32 %s4417, %s4418
          %s4420 = smul.addr %s4419, 4
          %s4421 = scalar_lea.vmem %s3, %s4420
        $region175: #{attention_forward.4} parent=170 // pred_fallthru
          _
      $region171: #{attention_forward.4} parent=5 // pred_fallthru
        _
    $region6: #{attention_forward.4} parent=1 // loop_footer
      %s13 = sadd.s32 1, %s9
    $region7: #{attention_forward.4} parent=1 // loop_footer_branch
      %8 = sbr.rel target = $region3
    $region8: #{attention_forward.4} parent=1 // loop_exit
      _

</llo_original>
